<compile_context>
chip_gen: v7x
topology: tpu7x:2x2x1
jax: 0.10.0
libtpu: 0.0.40
codegen_flags: <defaults>
</compile_context>

<pallas_src>
import functools

import jax
import jax.numpy as jnp
from jax import lax
from jax.experimental import pallas as pl
from jax.experimental.pallas import tpu as pltpu

_SECT = 128  # lane-aligned section width of the augmented weight / output slab


# ----------------------------- Pallas kernel --------------------------------

def _gat_conv_body(x, adj_mask, w_aug, bias, *, heads, fout, apply_relu):
    """One GATConv layer (all heads), operating on VMEM-resident values.

    x        : [Np, K]           K is 128-padded
    adj_mask : [Np, Np] bool     adj_mask[i, j] = True iff edge j -> i (self-loops incl.)
    w_aug    : [K, 3*128]        [W | W@A_src | W@A_dst], each section 128-lane aligned
    bias     : [1, 128]          zero-padded past heads*fout
    returns  : [Np, 128]         columns >= heads*fout are exactly 0 (+0 bias)
    """
    n = x.shape[0]
    # Single MXU matmul gives the projection AND both attention logits.
    haug = jnp.dot(x, w_aug, preferred_element_type=jnp.float32)      # [Np, 3*128]
    h = haug[:, :_SECT]                                               # [Np, 128] tile-aligned
    alpha_src = haug[:, _SECT:_SECT + heads]                          # [Np, H]
    alpha_dst = haug[:, 2 * _SECT:2 * _SECT + heads]                  # [Np, H]
    alpha_src_t = alpha_src.T                                         # [H, Np] (one XLU transpose/layer)
    # Analytic softmax shift: max_j e[i,j] <= leaky(alpha_dst[i] + max_j alpha_src[j]).
    src_max = jnp.max(alpha_src_t, axis=-1, keepdims=True)            # [H, 1] (cheap reduce)

    neg = jnp.float32(-1e30)
    col = lax.broadcasted_iota(jnp.int32, (1, _SECT), 1)              # [1, 128]
    out_acc = jnp.zeros((n, _SECT), jnp.float32)

    for hd in range(heads):          # heads is small & static -> unrolled
        a_d = alpha_dst[:, hd:hd + 1]                                 # [Np, 1]
        # e[i, j] = LeakyReLU(alpha_dst[i] + alpha_src[j], 0.2)
        e = a_d + alpha_src_t[hd:hd + 1, :]                           # [Np, Np]
        e = jnp.where(e > 0, e, 0.2 * e)
        bound = a_d + src_max[hd:hd + 1, :]                           # [Np, 1]
        bound = jnp.where(bound > 0, bound, 0.2 * bound)              # leaky(bound) >= row max of e
        # Mask + shift fused in one select; exp underflows to exactly 0 on non-edges.
        e = jnp.where(adj_mask, e - bound, neg)
        p = jnp.exp(e)                                                # <= 1 everywhere
        denom = jnp.maximum(jnp.sum(p, axis=-1, keepdims=True), 1e-30)
        inv = pl.reciprocal(denom, approx=False)                      # [Np, 1]
        # Full-width dot with other heads' columns zeroed: same MXU cost as a
        # fout-wide dot (one column tile), no lane-packing concatenate needed.
        if heads == 1:
            h_hd = h
        else:
            h_hd = jnp.where((col >= hd * fout) & (col < (hd + 1) * fout), h, 0.0)
        out_acc = out_acc + jnp.dot(p, h_hd, preferred_element_type=jnp.float32) * inv

    out = out_acc + bias                                              # one full-width bias add
    if apply_relu:
        out = jnp.maximum(out, 0.0)
    return out


def _gat2_kernel(x_ref, adj_ref, w1_ref, b1_ref, w2_ref, b2_ref, out_ref, *,
                 heads1, fout1, heads2, fout2):
    """Fused 2-layer GAT forward; everything stays resident in VMEM."""
    adj_mask = adj_ref[...] > 0                 # hoisted once (both layers, all heads)
    h = _gat_conv_body(x_ref[...], adj_mask, w1_ref[...], b1_ref[...],
                       heads=heads1, fout=fout1, apply_relu=True)
    # dropout: identity (eval mode).
    out = _gat_conv_body(h, adj_mask, w2_ref[...], b2_ref[...],
                         heads=heads2, fout=fout2, apply_relu=False)
    out_ref[...] = out                          # single full-lane (128-wide) store


# ----------------------------- JAX glue --------------------------------------

def _round_up(x, m):
    return (x + m - 1) // m * m


def glorot(key, shape):
    fan_in, fan_out = shape[0], shape[1]
    limit = (6.0 / (fan_in + fan_out)) ** 0.5
    return jax.random.uniform(key, shape, jnp.float32, -limit, limit)


def init_gat_params(key, nfeat, nhid, nclass):
    """Deterministic parameter init mirroring GATConv shapes."""
    k = jax.random.split(key, 6)
    h1, f1 = 4, nhid // 4          # gc1: heads=4, out=nhid//4
    h2, f2 = 1, nclass             # gc2: heads=1, out=nclass
    return {
        "gc1": {
            "w": glorot(k[0], (nfeat, h1 * f1)),
            "att_src": glorot(k[1], (h1, f1)),
            "att_dst": glorot(k[2], (h1, f1)),
            "bias": jnp.zeros((1, h1 * f1), jnp.float32),
            "heads": h1, "fout": f1,
        },
        "gc2": {
            "w": glorot(k[3], (nhid, h2 * f2)),
            "att_src": glorot(k[4], (h2, f2)),
            "att_dst": glorot(k[5], (h2, f2)),
            "bias": jnp.zeros((1, h2 * f2), jnp.float32),
            "heads": h2, "fout": f2,
        },
    }


def _block_diag_att(att):
    """[H, F] attention vector -> block-diagonal [H*F, H] projection matrix."""
    h, f = att.shape
    m = jnp.zeros((h * f, h), jnp.float32)
    for hd in range(h):
        m = m.at[hd * f:(hd + 1) * f, hd].set(att[hd])
    return m


def _augment_weight(w, att_src, att_dst, fin_pad):
    """W_aug with 128-lane-aligned sections: [ W | W@A_src | W@A_dst ], K padded."""
    fin, hf = w.shape
    h, f = att_src.shape
    assert hf == h * f and hf <= _SECT and h <= _SECT and fin <= fin_pad
    a_src = _block_diag_att(att_src)
    a_dst = _block_diag_att(att_dst)
    w_aug = jnp.zeros((fin_pad, 3 * _SECT), jnp.float32)
    w_aug = w_aug.at[:fin, :hf].set(w)
    w_aug = w_aug.at[:fin, _SECT:_SECT + h].set(w @ a_src)
    w_aug = w_aug.at[:fin, 2 * _SECT:2 * _SECT + h].set(w @ a_dst)
    return w_aug


def _pad_bias(b):
    return jnp.zeros((1, _SECT), jnp.float32).at[:, :b.shape[1]].set(b)


def edge_index_to_adj(edge_index, num_nodes, num_pad):
    """bf16 adjacency: adj[i, j] = 1 iff edge j -> i; self-loops on ALL num_pad
    rows so padded rows keep a finite softmax (their outputs are discarded)."""
    src, dst = edge_index[0], edge_index[1]
    adj = jnp.zeros((num_pad, num_pad), jnp.bfloat16)
    adj = adj.at[dst, src].set(1.0)
    diag = jnp.arange(num_pad)
    adj = adj.at[diag, diag].set(1.0)
    return adj


def gat_forward(params, x, edge_index):
    n, nfeat = x.shape
    n_pad = _round_up(n, 128)           # lane-dense [N, N] attention work
    fin_pad = _round_up(max(nfeat, 1), 128)
    adj = edge_index_to_adj(edge_index, n, n_pad)
    x_pad = jnp.zeros((n_pad, fin_pad), jnp.float32).at[:n, :nfeat].set(x)

    p1, p2 = params["gc1"], params["gc2"]
    assert p1["heads"] * p1["fout"] <= _SECT and p2["heads"] * p2["fout"] <= _SECT
    w1_aug = _augment_weight(p1["w"], p1["att_src"], p1["att_dst"], fin_pad)
    # Layer-1 output slab is _SECT wide (zero beyond heads1*fout1) -> pad w2's K.
    w2_aug = _augment_weight(p2["w"], p2["att_src"], p2["att_dst"], _SECT)
    b1 = _pad_bias(p1["bias"])
    b2 = _pad_bias(p2["bias"])
    nclass = p2["heads"] * p2["fout"]

    kernel = functools.partial(
        _gat2_kernel,
        heads1=p1["heads"], fout1=p1["fout"],
        heads2=p2["heads"], fout2=p2["fout"])

    h_tot = p1["heads"] + p2["heads"]
    cost = pl.CostEstimate(
        flops=int(2 * n_pad * fin_pad * 3 * _SECT            # projection 1
                  + 2 * n_pad * _SECT * 3 * _SECT            # projection 2
                  + h_tot * 2 * n_pad * n_pad * _SECT        # p @ h per head
                  + h_tot * 8 * n_pad * n_pad),              # softmax elementwise
        transcendentals=int(h_tot * n_pad * n_pad),
        bytes_accessed=int(4 * n_pad * fin_pad               # x
                           + 2 * n_pad * n_pad               # adj (bf16)
                           + 4 * (fin_pad + _SECT) * 3 * _SECT  # weights
                           + 2 * 4 * _SECT                   # biases
                           + 4 * n_pad * _SECT))             # output

    vmem = pl.BlockSpec(memory_space=pltpu.MemorySpace.VMEM)
    out = pl.pallas_call(
        kernel,
        out_shape=jax.ShapeDtypeStruct((n_pad, _SECT), jnp.float32),
        in_specs=[vmem] * 6,
        out_specs=vmem,
        compiler_params=pltpu.CompilerParams(vmem_limit_bytes=32 * 1024 * 1024),
        cost_estimate=cost,
    )(x_pad, adj, w1_aug, b1, w2_aug, b2)
    return out[:n, :nclass]


# ------------------------- pure-JAX reference --------------------------------

def _ref_adj(edge_index, num_nodes):
    src, dst = edge_index[0], edge_index[1]
    adj = jnp.zeros((num_nodes, num_nodes), jnp.float32)
    adj = adj.at[dst, src].set(1.0)
    diag = jnp.arange(num_nodes)
    adj = adj.at[diag, diag].set(1.0)
    return adj


def _ref_gat_conv(x, w, att_src, att_dst, bias, adj, heads, fout, apply_relu):
    hp = jax.lax.Precision.HIGHEST
    h = jnp.dot(x, w, precision=hp)
    outs = []
    for hd in range(heads):
        hh = h[:, hd * fout:(hd + 1) * fout]
        a_s = jnp.sum(hh * att_src[hd][None, :], axis=-1, keepdims=True)
        a_d = jnp.sum(hh * att_dst[hd][None, :], axis=-1, keepdims=True)
        e = a_d + a_s.T
        e = jnp.where(e > 0, e, 0.2 * e)
        e = jnp.where(adj > 0, e, -1e30)
        e = e - jnp.max(e, axis=-1, keepdims=True)
        p = jnp.exp(e) * adj
        attn = p / jnp.sum(p, axis=-1, keepdims=True)
        o = jnp.dot(attn, hh, precision=hp) + bias[0, hd * fout:(hd + 1) * fout][None, :]
        outs.append(o)
    out = jnp.concatenate(outs, axis=-1)
    return jnp.maximum(out, 0.0) if apply_relu else out


def ref_forward(params, x, edge_index):
    adj = _ref_adj(edge_index, x.shape[0])
    p1, p2 = params["gc1"], params["gc2"]
    h = _ref_gat_conv(x, p1["w"], p1["att_src"], p1["att_dst"], p1["bias"],
                      adj, p1["heads"], p1["fout"], True)
    return _ref_gat_conv(h, p2["w"], p2["att_src"], p2["att_dst"], p2["bias"],
                         adj, p2["heads"], p2["fout"], False)


# ------------------------------- main -----------------------------------------

if __name__ == "__main__":
    N, NFEAT, NHID, NCLASS, E = 32, 16, 16, 8, 64

    key = jax.random.PRNGKey(0)
    k_x, k_src, k_dst, k_par = jax.random.split(key, 4)

    x = jax.random.normal(k_x, (N, NFEAT), jnp.float32)
    src = jax.random.randint(k_src, (E,), 0, N, jnp.int32)
    dst = jax.random.randint(k_dst, (E,), 0, N, jnp.int32)
    edge_index = jnp.stack([src, dst], axis=0)           # [2, E]

    params = init_gat_params(k_par, NFEAT, NHID, NCLASS)

    out = gat_forward(params, x, edge_index)
    out = jax.block_until_ready(out)

    ref = ref_forward(params, x, edge_index)
    assert out.shape == (N, NCLASS), out.shape
    err = float(jnp.max(jnp.abs(out - ref)))
    assert jnp.allclose(out, ref, atol=5e-3, rtol=5e-3), f"max abs err={err}"

    print("KERNEL_OK")
</pallas_src>

<mosaic_0001>
module attributes {stable_mosaic.version = 11 : i64} {
  func.func @_gat2_kernel(%arg0: memref<128x128xf32, #tpu.memory_space<vmem>>, %arg1: memref<128x128xbf16, #tpu.memory_space<vmem>>, %arg2: memref<128x384xf32, #tpu.memory_space<vmem>>, %arg3: memref<1x128xf32, #tpu.memory_space<vmem>>, %arg4: memref<128x384xf32, #tpu.memory_space<vmem>>, %arg5: memref<1x128xf32, #tpu.memory_space<vmem>>, %arg6: memref<128x128xf32, #tpu.memory_space<vmem>>) attributes {dimension_semantics = [], scalar_prefetch = 0 : i64, scratch_operands = 0 : i64, tpu.core_type = #tpu.core_type<tc>} {
    %c0 = arith.constant 0 : index
    %c0_0 = arith.constant 0 : index
    %0 = vector.load %arg1[%c0, %c0_0] : memref<128x128xbf16, #tpu.memory_space<vmem>>, vector<128x128xbf16>
    %cst = arith.constant 0.000000e+00 : bf16
    %1 = vector.broadcast %cst : bf16 to vector<128x128xbf16>
    %2 = arith.cmpf ogt, %0, %1 : vector<128x128xbf16>
    %c0_1 = arith.constant 0 : index
    %c0_2 = arith.constant 0 : index
    %3 = vector.load %arg0[%c0_1, %c0_2] : memref<128x128xf32, #tpu.memory_space<vmem>>, vector<128x128xf32>
    %c0_3 = arith.constant 0 : index
    %c0_4 = arith.constant 0 : index
    %4 = vector.load %arg2[%c0_3, %c0_4] : memref<128x384xf32, #tpu.memory_space<vmem>>, vector<128x384xf32>
    %c0_5 = arith.constant 0 : index
    %c0_6 = arith.constant 0 : index
    %5 = vector.load %arg3[%c0_5, %c0_6] : memref<1x128xf32, #tpu.memory_space<vmem>>, vector<1x128xf32>
    %cst_7 = arith.constant dense<0.000000e+00> : vector<128x384xf32>
    %6 = tpu.matmul %3, %4, %cst_7 {dimension_numbers = #tpu.dot_dimension_numbers<[1], [0], [0], [1], [0, 0, 1, 1], [], []>} : vector<128x128xf32>, vector<128x384xf32>, vector<128x384xf32> -> vector<128x384xf32>
    %7 = vector.extract_strided_slice %6 {offsets = [0, 0], sizes = [128, 128], strides = [1, 1]} : vector<128x384xf32> to vector<128x128xf32>
    %8 = vector.extract_strided_slice %6 {offsets = [0, 128], sizes = [128, 4], strides = [1, 1]} : vector<128x384xf32> to vector<128x4xf32>
    %9 = vector.extract_strided_slice %6 {offsets = [0, 256], sizes = [128, 4], strides = [1, 1]} : vector<128x384xf32> to vector<128x4xf32>
    %10 = tpu.transpose %8, [1, 0] : vector<128x4xf32> -> vector<4x128xf32>
    %cst_8 = arith.constant dense<0xFF800000> : vector<4xf32>
    %11 = vector.multi_reduction <maximumf>, %10, %cst_8 [1] : vector<4x128xf32> to vector<4xf32>
    %12 = vector.shape_cast %11 : vector<4xf32> to vector<4x1xf32>
    %13 = tpu.iota {dimensions = array<i32: 1>} : vector<1x128xi32>
    %cst_9 = arith.constant 0.000000e+00 : f32
    %14 = vector.broadcast %cst_9 : f32 to vector<128x128xf32>
    %15 = vector.extract_strided_slice %9 {offsets = [0, 0], sizes = [128, 1], strides = [1, 1]} : vector<128x4xf32> to vector<128x1xf32>
    %16 = vector.extract_strided_slice %10 {offsets = [0, 0], sizes = [1, 128], strides = [1, 1]} : vector<4x128xf32> to vector<1x128xf32>
    %17 = vector.broadcast %15 : vector<128x1xf32> to vector<128x128xf32>
    %18 = vector.broadcast %16 : vector<1x128xf32> to vector<128x128xf32>
    %19 = arith.addf %17, %18 : vector<128x128xf32>
    %cst_10 = arith.constant 0.000000e+00 : f32
    %20 = vector.broadcast %cst_10 : f32 to vector<128x128xf32>
    %21 = arith.cmpf ogt, %19, %20 : vector<128x128xf32>
    %cst_11 = arith.constant 2.000000e-01 : f32
    %22 = vector.broadcast %cst_11 : f32 to vector<128x128xf32>
    %23 = arith.mulf %22, %19 : vector<128x128xf32>
    %24 = arith.select %21, %19, %23 : vector<128x128xi1>, vector<128x128xf32>
    %25 = vector.extract_strided_slice %12 {offsets = [0, 0], sizes = [1, 1], strides = [1, 1]} : vector<4x1xf32> to vector<1x1xf32>
    %26 = vector.broadcast %25 : vector<1x1xf32> to vector<128x1xf32>
    %27 = arith.addf %15, %26 : vector<128x1xf32>
    %cst_12 = arith.constant 0.000000e+00 : f32
    %28 = vector.broadcast %cst_12 : f32 to vector<128x1xf32>
    %29 = arith.cmpf ogt, %27, %28 : vector<128x1xf32>
    %cst_13 = arith.constant 2.000000e-01 : f32
    %30 = vector.broadcast %cst_13 : f32 to vector<128x1xf32>
    %31 = arith.mulf %30, %27 : vector<128x1xf32>
    %32 = arith.select %29, %27, %31 : vector<128x1xi1>, vector<128x1xf32>
    %33 = vector.broadcast %32 : vector<128x1xf32> to vector<128x128xf32>
    %34 = arith.subf %24, %33 : vector<128x128xf32>
    %cst_14 = arith.constant -1.000000e+30 : f32
    %35 = vector.broadcast %cst_14 : f32 to vector<128x128xf32>
    %36 = arith.select %2, %34, %35 : vector<128x128xi1>, vector<128x128xf32>
    %37 = math.exp %36 : vector<128x128xf32>
    %cst_15 = arith.constant dense<0.000000e+00> : vector<128xf32>
    %38 = vector.multi_reduction <add>, %37, %cst_15 [1] : vector<128x128xf32> to vector<128xf32>
    %39 = vector.shape_cast %38 : vector<128xf32> to vector<128x1xf32>
    %cst_16 = arith.constant 1.000000e-30 : f32
    %40 = vector.broadcast %cst_16 : f32 to vector<128x1xf32>
    %41 = arith.maximumf %39, %40 : vector<128x1xf32>
    %42 = tpu.reciprocal %41 : vector<128x1xf32> -> vector<128x1xf32>
    %c0_i32 = arith.constant 0 : i32
    %43 = vector.broadcast %c0_i32 : i32 to vector<1x128xi32>
    %44 = arith.cmpi sge, %13, %43 : vector<1x128xi32>
    %c4_i32 = arith.constant 4 : i32
    %45 = vector.broadcast %c4_i32 : i32 to vector<1x128xi32>
    %46 = arith.cmpi slt, %13, %45 : vector<1x128xi32>
    %47 = arith.andi %44, %46 : vector<1x128xi1>
    %cst_17 = arith.constant 0.000000e+00 : f32
    %48 = vector.shape_cast %47 : vector<1x128xi1> to vector<1x128xi1>
    %49 = vector.broadcast %48 : vector<1x128xi1> to vector<128x128xi1>
    %50 = vector.broadcast %cst_17 : f32 to vector<128x128xf32>
    %51 = arith.select %49, %7, %50 : vector<128x128xi1>, vector<128x128xf32>
    %cst_18 = arith.constant dense<0.000000e+00> : vector<128x128xf32>
    %52 = tpu.matmul %37, %51, %cst_18 {dimension_numbers = #tpu.dot_dimension_numbers<[1], [0], [0], [1], [0, 0, 1, 1], [], []>} : vector<128x128xf32>, vector<128x128xf32>, vector<128x128xf32> -> vector<128x128xf32>
    %53 = vector.broadcast %42 : vector<128x1xf32> to vector<128x128xf32>
    %54 = arith.mulf %52, %53 : vector<128x128xf32>
    %55 = arith.addf %14, %54 : vector<128x128xf32>
    %56 = vector.extract_strided_slice %9 {offsets = [0, 1], sizes = [128, 1], strides = [1, 1]} : vector<128x4xf32> to vector<128x1xf32>
    %57 = vector.extract_strided_slice %10 {offsets = [1, 0], sizes = [1, 128], strides = [1, 1]} : vector<4x128xf32> to vector<1x128xf32>
    %58 = vector.broadcast %56 : vector<128x1xf32> to vector<128x128xf32>
    %59 = vector.broadcast %57 : vector<1x128xf32> to vector<128x128xf32>
    %60 = arith.addf %58, %59 : vector<128x128xf32>
    %cst_19 = arith.constant 0.000000e+00 : f32
    %61 = vector.broadcast %cst_19 : f32 to vector<128x128xf32>
    %62 = arith.cmpf ogt, %60, %61 : vector<128x128xf32>
    %cst_20 = arith.constant 2.000000e-01 : f32
    %63 = vector.broadcast %cst_20 : f32 to vector<128x128xf32>
    %64 = arith.mulf %63, %60 : vector<128x128xf32>
    %65 = arith.select %62, %60, %64 : vector<128x128xi1>, vector<128x128xf32>
    %66 = vector.extract_strided_slice %12 {offsets = [1, 0], sizes = [1, 1], strides = [1, 1]} : vector<4x1xf32> to vector<1x1xf32>
    %67 = vector.broadcast %66 : vector<1x1xf32> to vector<128x1xf32>
    %68 = arith.addf %56, %67 : vector<128x1xf32>
    %cst_21 = arith.constant 0.000000e+00 : f32
    %69 = vector.broadcast %cst_21 : f32 to vector<128x1xf32>
    %70 = arith.cmpf ogt, %68, %69 : vector<128x1xf32>
    %cst_22 = arith.constant 2.000000e-01 : f32
    %71 = vector.broadcast %cst_22 : f32 to vector<128x1xf32>
    %72 = arith.mulf %71, %68 : vector<128x1xf32>
    %73 = arith.select %70, %68, %72 : vector<128x1xi1>, vector<128x1xf32>
    %74 = vector.broadcast %73 : vector<128x1xf32> to vector<128x128xf32>
    %75 = arith.subf %65, %74 : vector<128x128xf32>
    %cst_23 = arith.constant -1.000000e+30 : f32
    %76 = vector.broadcast %cst_23 : f32 to vector<128x128xf32>
    %77 = arith.select %2, %75, %76 : vector<128x128xi1>, vector<128x128xf32>
    %78 = math.exp %77 : vector<128x128xf32>
    %cst_24 = arith.constant dense<0.000000e+00> : vector<128xf32>
    %79 = vector.multi_reduction <add>, %78, %cst_24 [1] : vector<128x128xf32> to vector<128xf32>
    %80 = vector.shape_cast %79 : vector<128xf32> to vector<128x1xf32>
    %cst_25 = arith.constant 1.000000e-30 : f32
    %81 = vector.broadcast %cst_25 : f32 to vector<128x1xf32>
    %82 = arith.maximumf %80, %81 : vector<128x1xf32>
    %83 = tpu.reciprocal %82 : vector<128x1xf32> -> vector<128x1xf32>
    %c4_i32_26 = arith.constant 4 : i32
    %84 = vector.broadcast %c4_i32_26 : i32 to vector<1x128xi32>
    %85 = arith.cmpi sge, %13, %84 : vector<1x128xi32>
    %c8_i32 = arith.constant 8 : i32
    %86 = vector.broadcast %c8_i32 : i32 to vector<1x128xi32>
    %87 = arith.cmpi slt, %13, %86 : vector<1x128xi32>
    %88 = arith.andi %85, %87 : vector<1x128xi1>
    %cst_27 = arith.constant 0.000000e+00 : f32
    %89 = vector.shape_cast %88 : vector<1x128xi1> to vector<1x128xi1>
    %90 = vector.broadcast %89 : vector<1x128xi1> to vector<128x128xi1>
    %91 = vector.broadcast %cst_27 : f32 to vector<128x128xf32>
    %92 = arith.select %90, %7, %91 : vector<128x128xi1>, vector<128x128xf32>
    %cst_28 = arith.constant dense<0.000000e+00> : vector<128x128xf32>
    %93 = tpu.matmul %78, %92, %cst_28 {dimension_numbers = #tpu.dot_dimension_numbers<[1], [0], [0], [1], [0, 0, 1, 1], [], []>} : vector<128x128xf32>, vector<128x128xf32>, vector<128x128xf32> -> vector<128x128xf32>
    %94 = vector.broadcast %83 : vector<128x1xf32> to vector<128x128xf32>
    %95 = arith.mulf %93, %94 : vector<128x128xf32>
    %96 = arith.addf %55, %95 : vector<128x128xf32>
    %97 = vector.extract_strided_slice %9 {offsets = [0, 2], sizes = [128, 1], strides = [1, 1]} : vector<128x4xf32> to vector<128x1xf32>
    %98 = vector.extract_strided_slice %10 {offsets = [2, 0], sizes = [1, 128], strides = [1, 1]} : vector<4x128xf32> to vector<1x128xf32>
    %99 = vector.broadcast %97 : vector<128x1xf32> to vector<128x128xf32>
    %100 = vector.broadcast %98 : vector<1x128xf32> to vector<128x128xf32>
    %101 = arith.addf %99, %100 : vector<128x128xf32>
    %cst_29 = arith.constant 0.000000e+00 : f32
    %102 = vector.broadcast %cst_29 : f32 to vector<128x128xf32>
    %103 = arith.cmpf ogt, %101, %102 : vector<128x128xf32>
    %cst_30 = arith.constant 2.000000e-01 : f32
    %104 = vector.broadcast %cst_30 : f32 to vector<128x128xf32>
    %105 = arith.mulf %104, %101 : vector<128x128xf32>
    %106 = arith.select %103, %101, %105 : vector<128x128xi1>, vector<128x128xf32>
    %107 = vector.extract_strided_slice %12 {offsets = [2, 0], sizes = [1, 1], strides = [1, 1]} : vector<4x1xf32> to vector<1x1xf32>
    %108 = vector.broadcast %107 : vector<1x1xf32> to vector<128x1xf32>
    %109 = arith.addf %97, %108 : vector<128x1xf32>
    %cst_31 = arith.constant 0.000000e+00 : f32
    %110 = vector.broadcast %cst_31 : f32 to vector<128x1xf32>
    %111 = arith.cmpf ogt, %109, %110 : vector<128x1xf32>
    %cst_32 = arith.constant 2.000000e-01 : f32
    %112 = vector.broadcast %cst_32 : f32 to vector<128x1xf32>
    %113 = arith.mulf %112, %109 : vector<128x1xf32>
    %114 = arith.select %111, %109, %113 : vector<128x1xi1>, vector<128x1xf32>
    %115 = vector.broadcast %114 : vector<128x1xf32> to vector<128x128xf32>
    %116 = arith.subf %106, %115 : vector<128x128xf32>
    %cst_33 = arith.constant -1.000000e+30 : f32
    %117 = vector.broadcast %cst_33 : f32 to vector<128x128xf32>
    %118 = arith.select %2, %116, %117 : vector<128x128xi1>, vector<128x128xf32>
    %119 = math.exp %118 : vector<128x128xf32>
    %cst_34 = arith.constant dense<0.000000e+00> : vector<128xf32>
    %120 = vector.multi_reduction <add>, %119, %cst_34 [1] : vector<128x128xf32> to vector<128xf32>
    %121 = vector.shape_cast %120 : vector<128xf32> to vector<128x1xf32>
    %cst_35 = arith.constant 1.000000e-30 : f32
    %122 = vector.broadcast %cst_35 : f32 to vector<128x1xf32>
    %123 = arith.maximumf %121, %122 : vector<128x1xf32>
    %124 = tpu.reciprocal %123 : vector<128x1xf32> -> vector<128x1xf32>
    %c8_i32_36 = arith.constant 8 : i32
    %125 = vector.broadcast %c8_i32_36 : i32 to vector<1x128xi32>
    %126 = arith.cmpi sge, %13, %125 : vector<1x128xi32>
    %c12_i32 = arith.constant 12 : i32
    %127 = vector.broadcast %c12_i32 : i32 to vector<1x128xi32>
    %128 = arith.cmpi slt, %13, %127 : vector<1x128xi32>
    %129 = arith.andi %126, %128 : vector<1x128xi1>
    %cst_37 = arith.constant 0.000000e+00 : f32
    %130 = vector.shape_cast %129 : vector<1x128xi1> to vector<1x128xi1>
    %131 = vector.broadcast %130 : vector<1x128xi1> to vector<128x128xi1>
    %132 = vector.broadcast %cst_37 : f32 to vector<128x128xf32>
    %133 = arith.select %131, %7, %132 : vector<128x128xi1>, vector<128x128xf32>
    %cst_38 = arith.constant dense<0.000000e+00> : vector<128x128xf32>
    %134 = tpu.matmul %119, %133, %cst_38 {dimension_numbers = #tpu.dot_dimension_numbers<[1], [0], [0], [1], [0, 0, 1, 1], [], []>} : vector<128x128xf32>, vector<128x128xf32>, vector<128x128xf32> -> vector<128x128xf32>
    %135 = vector.broadcast %124 : vector<128x1xf32> to vector<128x128xf32>
    %136 = arith.mulf %134, %135 : vector<128x128xf32>
    %137 = arith.addf %96, %136 : vector<128x128xf32>
    %138 = vector.extract_strided_slice %9 {offsets = [0, 3], sizes = [128, 1], strides = [1, 1]} : vector<128x4xf32> to vector<128x1xf32>
    %139 = vector.extract_strided_slice %10 {offsets = [3, 0], sizes = [1, 128], strides = [1, 1]} : vector<4x128xf32> to vector<1x128xf32>
    %140 = vector.broadcast %138 : vector<128x1xf32> to vector<128x128xf32>
    %141 = vector.broadcast %139 : vector<1x128xf32> to vector<128x128xf32>
    %142 = arith.addf %140, %141 : vector<128x128xf32>
    %cst_39 = arith.constant 0.000000e+00 : f32
    %143 = vector.broadcast %cst_39 : f32 to vector<128x128xf32>
    %144 = arith.cmpf ogt, %142, %143 : vector<128x128xf32>
    %cst_40 = arith.constant 2.000000e-01 : f32
    %145 = vector.broadcast %cst_40 : f32 to vector<128x128xf32>
    %146 = arith.mulf %145, %142 : vector<128x128xf32>
    %147 = arith.select %144, %142, %146 : vector<128x128xi1>, vector<128x128xf32>
    %148 = vector.extract_strided_slice %12 {offsets = [3, 0], sizes = [1, 1], strides = [1, 1]} : vector<4x1xf32> to vector<1x1xf32>
    %149 = vector.broadcast %148 : vector<1x1xf32> to vector<128x1xf32>
    %150 = arith.addf %138, %149 : vector<128x1xf32>
    %cst_41 = arith.constant 0.000000e+00 : f32
    %151 = vector.broadcast %cst_41 : f32 to vector<128x1xf32>
    %152 = arith.cmpf ogt, %150, %151 : vector<128x1xf32>
    %cst_42 = arith.constant 2.000000e-01 : f32
    %153 = vector.broadcast %cst_42 : f32 to vector<128x1xf32>
    %154 = arith.mulf %153, %150 : vector<128x1xf32>
    %155 = arith.select %152, %150, %154 : vector<128x1xi1>, vector<128x1xf32>
    %156 = vector.broadcast %155 : vector<128x1xf32> to vector<128x128xf32>
    %157 = arith.subf %147, %156 : vector<128x128xf32>
    %cst_43 = arith.constant -1.000000e+30 : f32
    %158 = vector.broadcast %cst_43 : f32 to vector<128x128xf32>
    %159 = arith.select %2, %157, %158 : vector<128x128xi1>, vector<128x128xf32>
    %160 = math.exp %159 : vector<128x128xf32>
    %cst_44 = arith.constant dense<0.000000e+00> : vector<128xf32>
    %161 = vector.multi_reduction <add>, %160, %cst_44 [1] : vector<128x128xf32> to vector<128xf32>
    %162 = vector.shape_cast %161 : vector<128xf32> to vector<128x1xf32>
    %cst_45 = arith.constant 1.000000e-30 : f32
    %163 = vector.broadcast %cst_45 : f32 to vector<128x1xf32>
    %164 = arith.maximumf %162, %163 : vector<128x1xf32>
    %165 = tpu.reciprocal %164 : vector<128x1xf32> -> vector<128x1xf32>
    %c12_i32_46 = arith.constant 12 : i32
    %166 = vector.broadcast %c12_i32_46 : i32 to vector<1x128xi32>
    %167 = arith.cmpi sge, %13, %166 : vector<1x128xi32>
    %c16_i32 = arith.constant 16 : i32
    %168 = vector.broadcast %c16_i32 : i32 to vector<1x128xi32>
    %169 = arith.cmpi slt, %13, %168 : vector<1x128xi32>
    %170 = arith.andi %167, %169 : vector<1x128xi1>
    %cst_47 = arith.constant 0.000000e+00 : f32
    %171 = vector.shape_cast %170 : vector<1x128xi1> to vector<1x128xi1>
    %172 = vector.broadcast %171 : vector<1x128xi1> to vector<128x128xi1>
    %173 = vector.broadcast %cst_47 : f32 to vector<128x128xf32>
    %174 = arith.select %172, %7, %173 : vector<128x128xi1>, vector<128x128xf32>
    %cst_48 = arith.constant dense<0.000000e+00> : vector<128x128xf32>
    %175 = tpu.matmul %160, %174, %cst_48 {dimension_numbers = #tpu.dot_dimension_numbers<[1], [0], [0], [1], [0, 0, 1, 1], [], []>} : vector<128x128xf32>, vector<128x128xf32>, vector<128x128xf32> -> vector<128x128xf32>
    %176 = vector.broadcast %165 : vector<128x1xf32> to vector<128x128xf32>
    %177 = arith.mulf %175, %176 : vector<128x128xf32>
    %178 = arith.addf %137, %177 : vector<128x128xf32>
    %179 = vector.broadcast %5 : vector<1x128xf32> to vector<128x128xf32>
    %180 = arith.addf %178, %179 : vector<128x128xf32>
    %cst_49 = arith.constant 0.000000e+00 : f32
    %181 = vector.broadcast %cst_49 : f32 to vector<128x128xf32>
    %182 = arith.maximumf %180, %181 : vector<128x128xf32>
    %c0_50 = arith.constant 0 : index
    %c0_51 = arith.constant 0 : index
    %183 = vector.load %arg4[%c0_50, %c0_51] : memref<128x384xf32, #tpu.memory_space<vmem>>, vector<128x384xf32>
    %c0_52 = arith.constant 0 : index
    %c0_53 = arith.constant 0 : index
    %184 = vector.load %arg5[%c0_52, %c0_53] : memref<1x128xf32, #tpu.memory_space<vmem>>, vector<1x128xf32>
    %cst_54 = arith.constant dense<0.000000e+00> : vector<128x384xf32>
    %185 = tpu.matmul %182, %183, %cst_54 {dimension_numbers = #tpu.dot_dimension_numbers<[1], [0], [0], [1], [0, 0, 1, 1], [], []>} : vector<128x128xf32>, vector<128x384xf32>, vector<128x384xf32> -> vector<128x384xf32>
    %186 = vector.extract_strided_slice %185 {offsets = [0, 0], sizes = [128, 128], strides = [1, 1]} : vector<128x384xf32> to vector<128x128xf32>
    %187 = vector.extract_strided_slice %185 {offsets = [0, 128], sizes = [128, 1], strides = [1, 1]} : vector<128x384xf32> to vector<128x1xf32>
    %188 = vector.extract_strided_slice %185 {offsets = [0, 256], sizes = [128, 1], strides = [1, 1]} : vector<128x384xf32> to vector<128x1xf32>
    %189 = tpu.transpose %187, [1, 0] : vector<128x1xf32> -> vector<1x128xf32>
    %cst_55 = arith.constant dense<0xFF800000> : vector<1xf32>
    %190 = vector.multi_reduction <maximumf>, %189, %cst_55 [1] : vector<1x128xf32> to vector<1xf32>
    %191 = vector.shape_cast %190 : vector<1xf32> to vector<1x1xf32>
    %cst_56 = arith.constant 0.000000e+00 : f32
    %192 = vector.broadcast %cst_56 : f32 to vector<128x128xf32>
    %193 = vector.broadcast %188 : vector<128x1xf32> to vector<128x128xf32>
    %194 = vector.broadcast %189 : vector<1x128xf32> to vector<128x128xf32>
    %195 = arith.addf %193, %194 : vector<128x128xf32>
    %cst_57 = arith.constant 0.000000e+00 : f32
    %196 = vector.broadcast %cst_57 : f32 to vector<128x128xf32>
    %197 = arith.cmpf ogt, %195, %196 : vector<128x128xf32>
    %cst_58 = arith.constant 2.000000e-01 : f32
    %198 = vector.broadcast %cst_58 : f32 to vector<128x128xf32>
    %199 = arith.mulf %198, %195 : vector<128x128xf32>
    %200 = arith.select %197, %195, %199 : vector<128x128xi1>, vector<128x128xf32>
    %201 = vector.broadcast %191 : vector<1x1xf32> to vector<128x1xf32>
    %202 = arith.addf %188, %201 : vector<128x1xf32>
    %cst_59 = arith.constant 0.000000e+00 : f32
    %203 = vector.broadcast %cst_59 : f32 to vector<128x1xf32>
    %204 = arith.cmpf ogt, %202, %203 : vector<128x1xf32>
    %cst_60 = arith.constant 2.000000e-01 : f32
    %205 = vector.broadcast %cst_60 : f32 to vector<128x1xf32>
    %206 = arith.mulf %205, %202 : vector<128x1xf32>
    %207 = arith.select %204, %202, %206 : vector<128x1xi1>, vector<128x1xf32>
    %208 = vector.broadcast %207 : vector<128x1xf32> to vector<128x128xf32>
    %209 = arith.subf %200, %208 : vector<128x128xf32>
    %cst_61 = arith.constant -1.000000e+30 : f32
    %210 = vector.broadcast %cst_61 : f32 to vector<128x128xf32>
    %211 = arith.select %2, %209, %210 : vector<128x128xi1>, vector<128x128xf32>
    %212 = math.exp %211 : vector<128x128xf32>
    %cst_62 = arith.constant dense<0.000000e+00> : vector<128xf32>
    %213 = vector.multi_reduction <add>, %212, %cst_62 [1] : vector<128x128xf32> to vector<128xf32>
    %214 = vector.shape_cast %213 : vector<128xf32> to vector<128x1xf32>
    %cst_63 = arith.constant 1.000000e-30 : f32
    %215 = vector.broadcast %cst_63 : f32 to vector<128x1xf32>
    %216 = arith.maximumf %214, %215 : vector<128x1xf32>
    %217 = tpu.reciprocal %216 : vector<128x1xf32> -> vector<128x1xf32>
    %cst_64 = arith.constant dense<0.000000e+00> : vector<128x128xf32>
    %218 = tpu.matmul %212, %186, %cst_64 {dimension_numbers = #tpu.dot_dimension_numbers<[1], [0], [0], [1], [0, 0, 1, 1], [], []>} : vector<128x128xf32>, vector<128x128xf32>, vector<128x128xf32> -> vector<128x128xf32>
    %219 = vector.broadcast %217 : vector<128x1xf32> to vector<128x128xf32>
    %220 = arith.mulf %218, %219 : vector<128x128xf32>
    %221 = arith.addf %192, %220 : vector<128x128xf32>
    %222 = vector.broadcast %184 : vector<1x128xf32> to vector<128x128xf32>
    %223 = arith.addf %221, %222 : vector<128x128xf32>
    %c0_65 = arith.constant 0 : index
    %c0_66 = arith.constant 0 : index
    %224 = vector.load %arg6[%c0_65, %c0_66] : memref<128x128xf32, #tpu.memory_space<vmem>>, vector<128x128xf32>
    tpu.vector_store %arg6[%c0_65, %c0_66], %223 {strides = array<i32>} : memref<128x128xf32, #tpu.memory_space<vmem>>, vector<128x128xf32>,
    return
  }
}

</mosaic_0001>

<llo_original>
// kernel: tpu_custom_call.1
$region0: #{tpu_custom_call.1}
  #allocation0 [shape = 'u32[]', space=smem, size = 0x4, offset = 0x4, fixed_abs, tag = 'smem constant byte address 0x4 - core index']
  #allocation1 [shape = 'u32[144,128]{1,0:T(1,128)}', space=vmem, size = 0x12000, scoped, tag = 'internal scratch']
  %s0 = inlined_call_operand.hbm [shape: f32[128,128], index: 0, kind: input, shape index: {}]
  %s1 = inlined_call_operand.hbm [shape: bf16[128,128], index: 1, kind: input, shape index: {}]
  %s2 = inlined_call_operand.hbm [shape: f32[128,384], index: 2, kind: input, shape index: {}]
  %s3 = inlined_call_operand.vmem [shape: f32[1,128], index: 3, kind: input, shape index: {}]
  %s4 = inlined_call_operand.hbm [shape: f32[128,384], index: 4, kind: input, shape index: {}]
  %s5 = inlined_call_operand.vmem [shape: f32[1,128], index: 5, kind: input, shape index: {}]
  %s6 = inlined_call_operand.hbm [shape: f32[128,128], index: 6, kind: output, shape index: {}]
  %s7 = sld [smem:[#allocation0]]
  $region50: #{tpu_custom_call.1} parent=0
    _
  %s9 = ssub.s32 1, %s7
  %s10 = scalar_select 0, %s9, %s7
  $region1: #{tpu_custom_call.1} parent=0
    #allocation2 [shape = 'u8[65536]{0}', space=vmem, size = 0x10000, scoped, tag = 'input window, operand 0, single buffered']
    #allocation3 [shape = 's32[1]{0}', space=sflag, size = 0x4, scoped, tag = 'scoped memory for tpu_custom_call.1']
    #allocation4 [shape = 's32[1]{0}', space=sflag, size = 0x4, scoped, tag = 'scoped memory for tpu_custom_call.1']
    #allocation5 [shape = 'u8[32768]{0}', space=vmem, size = 0x8000, scoped, tag = 'input window, operand 1, single buffered']
    #allocation6 [shape = 's32[1]{0}', space=sflag, size = 0x4, scoped, tag = 'scoped memory for tpu_custom_call.1']
    #allocation7 [shape = 'u8[196608]{0}', space=vmem, size = 0x30000, scoped, tag = 'input window, operand 2, single buffered']
    #allocation8 [shape = 'u8[196608]{0}', space=vmem, size = 0x30000, scoped, tag = 'input window, operand 4, single buffered']
    #allocation9 [shape = 's32[1]{0}', space=sflag, size = 0x4, scoped, tag = 'scoped memory for tpu_custom_call.1']
    #allocation10 [shape = 'u8[65536]{0}', space=vmem, size = 0x10000, scoped, tag = 'output window, operand 0, single buffered']
    %11 = vsyncpa [#allocation3], 0
    %12 = vsyncpa [#allocation6], 0
    %13 = vsyncpa [#allocation9], 0
    %14 = vsyncpa [#allocation4], 0
    // Predicated region
    $region2: #{tpu_custom_call.1} parent=1 // pred_check
      _
    $region3: #{tpu_custom_call.1} parent=1 // pred_check_branch
      %16 = sbr.rel (0) target = $region5
    $region4: #{tpu_custom_call.1} parent=1 // pred_region
      %s18 = ssub.s32 2048, 2048
      %19 = vsyncadd [#allocation3], %s18
      %s20 = sshll.u32 [#allocation2], 4
      %s21 = int_to_ptr.vmem [resolvable:$true] %s20
      %26 = dma.hbm_to_vmem [thread:$0]  %s0, 2048, %s21, [#allocation3], 128, 128, 8
    $region5: #{tpu_custom_call.1} parent=1 // pred_fallthru
      _
    // Predicated region
    $region6: #{tpu_custom_call.1} parent=1 // pred_check
      _
    $region7: #{tpu_custom_call.1} parent=1 // pred_check_branch
      %28 = sbr.rel (0) target = $region9
    $region8: #{tpu_custom_call.1} parent=1 // pred_region
      %s30 = ssub.s32 1024, 1024
      %31 = vsyncadd [#allocation6], %s30
      %s32 = sshll.u32 [#allocation5], 4
      %s33 = int_to_ptr.vmem [resolvable:$true] %s32
      %38 = dma.hbm_to_vmem [thread:$0]  %s1, 1024, %s33, [#allocation6], 64, 64, 4
    $region9: #{tpu_custom_call.1} parent=1 // pred_fallthru
      _
    // Predicated region
    $region10: #{tpu_custom_call.1} parent=1 // pred_check
      _
    $region11: #{tpu_custom_call.1} parent=1 // pred_check_branch
      %40 = sbr.rel (0) target = $region13
    $region12: #{tpu_custom_call.1} parent=1 // pred_region
      %s42 = ssub.s32 6144, 6144
      %43 = vsyncadd [#allocation6], %s42
      %s44 = sshll.u32 [#allocation7], 4
      %s45 = int_to_ptr.vmem [resolvable:$true] %s44
      %50 = dma.hbm_to_vmem [thread:$0]  %s2, 6144, %s45, [#allocation6], 384, 384, 24
    $region13: #{tpu_custom_call.1} parent=1 // pred_fallthru
      _
    // Predicated region
    $region14: #{tpu_custom_call.1} parent=1 // pred_check
      _
    $region15: #{tpu_custom_call.1} parent=1 // pred_check_branch
      %52 = sbr.rel (0) target = $region17
    $region16: #{tpu_custom_call.1} parent=1 // pred_region
      _
    $region17: #{tpu_custom_call.1} parent=1 // pred_fallthru
      _
    // Predicated region
    $region18: #{tpu_custom_call.1} parent=1 // pred_check
      _
    $region19: #{tpu_custom_call.1} parent=1 // pred_check_branch
      %54 = sbr.rel (0) target = $region21
    $region20: #{tpu_custom_call.1} parent=1 // pred_region
      %s56 = ssub.s32 6144, 6144
      %57 = vsyncadd [#allocation9], %s56
      %s58 = sshll.u32 [#allocation8], 4
      %s59 = int_to_ptr.vmem [resolvable:$true] %s58
      %64 = dma.hbm_to_vmem [thread:$0]  %s4, 6144, %s59, [#allocation9], 384, 384, 24
    $region21: #{tpu_custom_call.1} parent=1 // pred_fallthru
      _
    // Predicated region
    $region22: #{tpu_custom_call.1} parent=1 // pred_check
      _
    $region23: #{tpu_custom_call.1} parent=1 // pred_check_branch
      %66 = sbr.rel (0) target = $region25
    $region24: #{tpu_custom_call.1} parent=1 // pred_region
      _
    $region25: #{tpu_custom_call.1} parent=1 // pred_fallthru
      _
    // Predicated region
    $region26: #{tpu_custom_call.1} parent=1 // pred_check
      _
    $region27: #{tpu_custom_call.1} parent=1 // pred_check_branch
      %68 = sbr.rel (0) target = $region29
    $region28: #{tpu_custom_call.1} parent=1 // pred_region
      %69 = dma.done [#allocation3], 2048
    $region29: #{tpu_custom_call.1} parent=1 // pred_fallthru
      _
    // Predicated region
    $region30: #{tpu_custom_call.1} parent=1 // pred_check
      _
    $region31: #{tpu_custom_call.1} parent=1 // pred_check_branch
      %71 = sbr.rel (0) target = $region33
    $region32: #{tpu_custom_call.1} parent=1 // pred_region
      %72 = dma.done [#allocation6], 1024
    $region33: #{tpu_custom_call.1} parent=1 // pred_fallthru
      _
    // Predicated region
    $region34: #{tpu_custom_call.1} parent=1 // pred_check
      _
    $region35: #{tpu_custom_call.1} parent=1 // pred_check_branch
      %74 = sbr.rel (0) target = $region37
    $region36: #{tpu_custom_call.1} parent=1 // pred_region
      %75 = dma.done [#allocation6], 6144
    $region37: #{tpu_custom_call.1} parent=1 // pred_fallthru
      _
    // Predicated region
    $region38: #{tpu_custom_call.1} parent=1 // pred_check
      _
    $region39: #{tpu_custom_call.1} parent=1 // pred_check_branch
      %77 = sbr.rel (0) target = $region41
    $region40: #{tpu_custom_call.1} parent=1 // pred_region
      %78 = dma.done [#allocation9], 6144
    $region41: #{tpu_custom_call.1} parent=1 // pred_fallthru
      _
    %v82 = vld [vmem:[#allocation5] sm:$0xf]
    %v83 = vld [vmem:[#allocation5 + $0x4] sm:$0xf]
    %v84 = vld [vmem:[#allocation5 + $0x8] sm:$0xf]
    %v85 = vld [vmem:[#allocation5 + $0xc] sm:$0xf]
    %v86 = vld [vmem:[#allocation5 + $0x10] sm:$0xf]
    %v87 = vld [vmem:[#allocation5 + $0x14] sm:$0xf]
    %v88 = vld [vmem:[#allocation5 + $0x18] sm:$0xf]
    %v89 = vld [vmem:[#allocation5 + $0x1c] sm:$0xf]
    %v90 = vld [vmem:[#allocation5 + $0x20] sm:$0xf]
    %v91 = vld [vmem:[#allocation5 + $0x24] sm:$0xf]
    %v92 = vld [vmem:[#allocation5 + $0x28] sm:$0xf]
    %v93 = vld [vmem:[#allocation5 + $0x2c] sm:$0xf]
    %v94 = vld [vmem:[#allocation5 + $0x30] sm:$0xf]
    %v95 = vld [vmem:[#allocation5 + $0x34] sm:$0xf]
    %v96 = vld [vmem:[#allocation5 + $0x38] sm:$0xf]
    %v97 = vld [vmem:[#allocation5 + $0x3c] sm:$0xf]
    %vm98 = vcmp.gt.bf16.partialorder %v82, 0
    %vm99 = vcmp.gt.bf16.partialorder %v83, 0
    %vm100 = vcmp.gt.bf16.partialorder %v84, 0
    %vm101 = vcmp.gt.bf16.partialorder %v85, 0
    %vm102 = vcmp.gt.bf16.partialorder %v86, 0
    %vm103 = vcmp.gt.bf16.partialorder %v87, 0
    %vm104 = vcmp.gt.bf16.partialorder %v88, 0
    %vm105 = vcmp.gt.bf16.partialorder %v89, 0
    %vm106 = vcmp.gt.bf16.partialorder %v90, 0
    %vm107 = vcmp.gt.bf16.partialorder %v91, 0
    %vm108 = vcmp.gt.bf16.partialorder %v92, 0
    %vm109 = vcmp.gt.bf16.partialorder %v93, 0
    %vm110 = vcmp.gt.bf16.partialorder %v94, 0
    %vm111 = vcmp.gt.bf16.partialorder %v95, 0
    %vm112 = vcmp.gt.bf16.partialorder %v96, 0
    %vm113 = vcmp.gt.bf16.partialorder %v97, 0
    %v114 = vld [vmem:[#allocation2] sm:$0xff]
    %v115 = vld [vmem:[#allocation2 + $0x8] sm:$0xff]
    %v116 = vld [vmem:[#allocation2 + $0x10] sm:$0xff]
    %v117 = vld [vmem:[#allocation2 + $0x18] sm:$0xff]
    %v118 = vld [vmem:[#allocation2 + $0x20] sm:$0xff]
    %v119 = vld [vmem:[#allocation2 + $0x28] sm:$0xff]
    %v120 = vld [vmem:[#allocation2 + $0x30] sm:$0xff]
    %v121 = vld [vmem:[#allocation2 + $0x38] sm:$0xff]
    %v122 = vld [vmem:[#allocation2 + $0x40] sm:$0xff]
    %v123 = vld [vmem:[#allocation2 + $0x48] sm:$0xff]
    %v124 = vld [vmem:[#allocation2 + $0x50] sm:$0xff]
    %v125 = vld [vmem:[#allocation2 + $0x58] sm:$0xff]
    %v126 = vld [vmem:[#allocation2 + $0x60] sm:$0xff]
    %v127 = vld [vmem:[#allocation2 + $0x68] sm:$0xff]
    %v128 = vld [vmem:[#allocation2 + $0x70] sm:$0xff]
    %v129 = vld [vmem:[#allocation2 + $0x78] sm:$0xff]
    %v130 = vld [vmem:[#allocation7] sm:$0xff]
    %v131 = vld [vmem:[#allocation7 + $0x8] sm:$0xff]
    %v132 = vld [vmem:[#allocation7 + $0x10] sm:$0xff]
    %v133 = vld [vmem:[#allocation7 + $0x18] sm:$0xff]
    %v134 = vld [vmem:[#allocation7 + $0x20] sm:$0xff]
    %v135 = vld [vmem:[#allocation7 + $0x28] sm:$0xff]
    %v136 = vld [vmem:[#allocation7 + $0x30] sm:$0xff]
    %v137 = vld [vmem:[#allocation7 + $0x38] sm:$0xff]
    %v138 = vld [vmem:[#allocation7 + $0x40] sm:$0xff]
    %v139 = vld [vmem:[#allocation7 + $0x48] sm:$0xff]
    %v140 = vld [vmem:[#allocation7 + $0x50] sm:$0xff]
    %v141 = vld [vmem:[#allocation7 + $0x58] sm:$0xff]
    %v142 = vld [vmem:[#allocation7 + $0x60] sm:$0xff]
    %v143 = vld [vmem:[#allocation7 + $0x68] sm:$0xff]
    %v144 = vld [vmem:[#allocation7 + $0x70] sm:$0xff]
    %v145 = vld [vmem:[#allocation7 + $0x78] sm:$0xff]
    %v146 = vld [vmem:[#allocation7 + $0x80] sm:$0xff]
    %v147 = vld [vmem:[#allocation7 + $0x88] sm:$0xff]
    %v148 = vld [vmem:[#allocation7 + $0x90] sm:$0xff]
    %v149 = vld [vmem:[#allocation7 + $0x98] sm:$0xff]
    %v150 = vld [vmem:[#allocation7 + $0xa0] sm:$0xff]
    %v151 = vld [vmem:[#allocation7 + $0xa8] sm:$0xff]
    %v152 = vld [vmem:[#allocation7 + $0xb0] sm:$0xff]
    %v153 = vld [vmem:[#allocation7 + $0xb8] sm:$0xff]
    %v154 = vld [vmem:[#allocation7 + $0xc0] sm:$0xff]
    %v155 = vld [vmem:[#allocation7 + $0xc8] sm:$0xff]
    %v156 = vld [vmem:[#allocation7 + $0xd0] sm:$0xff]
    %v157 = vld [vmem:[#allocation7 + $0xd8] sm:$0xff]
    %v158 = vld [vmem:[#allocation7 + $0xe0] sm:$0xff]
    %v159 = vld [vmem:[#allocation7 + $0xe8] sm:$0xff]
    %v160 = vld [vmem:[#allocation7 + $0xf0] sm:$0xff]
    %v161 = vld [vmem:[#allocation7 + $0xf8] sm:$0xff]
    %v162 = vld [vmem:[#allocation7 + $0x100] sm:$0xff]
    %v163 = vld [vmem:[#allocation7 + $0x108] sm:$0xff]
    %v164 = vld [vmem:[#allocation7 + $0x110] sm:$0xff]
    %v165 = vld [vmem:[#allocation7 + $0x118] sm:$0xff]
    %v166 = vld [vmem:[#allocation7 + $0x120] sm:$0xff]
    %v167 = vld [vmem:[#allocation7 + $0x128] sm:$0xff]
    %v168 = vld [vmem:[#allocation7 + $0x130] sm:$0xff]
    %v169 = vld [vmem:[#allocation7 + $0x138] sm:$0xff]
    %v170 = vld [vmem:[#allocation7 + $0x140] sm:$0xff]
    %v171 = vld [vmem:[#allocation7 + $0x148] sm:$0xff]
    %v172 = vld [vmem:[#allocation7 + $0x150] sm:$0xff]
    %v173 = vld [vmem:[#allocation7 + $0x158] sm:$0xff]
    %v174 = vld [vmem:[#allocation7 + $0x160] sm:$0xff]
    %v175 = vld [vmem:[#allocation7 + $0x168] sm:$0xff]
    %v176 = vld [vmem:[#allocation7 + $0x170] sm:$0xff]
    %v177 = vld [vmem:[#allocation7 + $0x178] sm:$0xff]
    %v178 = vld [vmem:[%s3] sm:$0x1]
    %179 = vmatprep.subr.mxu0 %v131
    %180 = vmatpush1.msra.mxu0 %v130
    %181 = vmatprep.subr.mxu0 %v134
    %182 = vmatpush1.msra.mxu0 %v133
    %183 = vmatprep.subr.mxu0 %v137
    %184 = vmatpush1.msra.mxu0 %v136
    %185 = vmatprep.subr.mxu0 %v140
    %186 = vmatpush1.msra.mxu0 %v139
    %187 = vmatprep.subr.mxu0 %v143
    %188 = vmatpush1.msra.mxu0 %v142
    %189 = vmatprep.subr.mxu0 %v146
    %190 = vmatpush1.msra.mxu0 %v145
    %191 = vmatprep.subr.mxu0 %v149
    %192 = vmatpush1.msra.mxu0 %v148
    %193 = vmatprep.subr.mxu0 %v152
    %194 = vmatpush1.msra.mxu0 %v151
    %195 = vmatprep.subr.mxu0 %v155
    %196 = vmatpush1.msra.mxu0 %v154
    %197 = vmatprep.subr.mxu0 %v158
    %198 = vmatpush1.msra.mxu0 %v157
    %199 = vmatprep.subr.mxu0 %v161
    %200 = vmatpush1.msra.mxu0 %v160
    %201 = vmatprep.subr.mxu0 %v164
    %202 = vmatpush1.msra.mxu0 %v163
    %203 = vmatprep.subr.mxu0 %v167
    %204 = vmatpush1.msra.mxu0 %v166
    %205 = vmatprep.subr.mxu0 %v170
    %206 = vmatpush1.msra.mxu0 %v169
    %207 = vmatprep.subr.mxu0 %v173
    %208 = vmatpush1.msra.mxu0 %v172
    %209 = vmatprep.subr.mxu0 %v176
    %210 = vmatpush1.msra.mxu0 %v175
    %211 = vmatprep.subr.mxu0 0.0
    %212 = vmatpush1.msra.mxu0 0.0
    %213 = vmatprep.subr.mxu0 0.0
    %214 = vmatpush1.msra.mxu0 0.0
    %215 = vmatprep.subr.mxu0 0.0
    %216 = vmatpush1.msra.mxu0 0.0
    %217 = vmatprep.subr.mxu0 0.0
    %218 = vmatpush1.msra.mxu0 0.0
    %219 = vmatprep.subr.mxu0 0.0
    %220 = vmatpush1.msra.mxu0 0.0
    %221 = vmatprep.subr.mxu0 0.0
    %222 = vmatpush1.msra.mxu0 0.0
    %223 = vmatprep.subr.mxu0 0.0
    %224 = vmatpush1.msra.mxu0 0.0
    %225 = vmatprep.subr.mxu0 0.0
    %226 = vmatpush1.msra.mxu0 0.0
    %227 = vmatprep.subr.mxu0 0.0
    %228 = vmatpush1.msra.mxu0 0.0
    %229 = vmatprep.subr.mxu0 0.0
    %230 = vmatpush1.msra.mxu0 0.0
    %231 = vmatprep.subr.mxu0 0.0
    %232 = vmatpush1.msra.mxu0 0.0
    %233 = vmatprep.subr.mxu0 0.0
    %234 = vmatpush1.msra.mxu0 0.0
    %235 = vmatprep.subr.mxu0 0.0
    %236 = vmatpush1.msra.mxu0 0.0
    %237 = vmatprep.subr.mxu0 0.0
    %238 = vmatpush1.msra.mxu0 0.0
    %239 = vmatprep.subr.mxu0 0.0
    %240 = vmatpush1.msra.mxu0 0.0
    %241 = vmatprep.subr.mxu0 0.0
    %242 = vmatpush1.msra.mxu0 0.0
    %243 = vmatprep.mubr.f32.mxu0 0.0
    %244 = vmatmul.mubr.f32.gmra.mrb[0].mxu0 %v114
    %v245 = vpop.f32.mrb[0].mxu0
    %v246 = vadd.f32 0.0, %v245
    %v247 = vpop.f32.mrb[0].mxu0
    %v248 = vadd.f32 0.0, %v247
    %249 = vmatprep.mubr.f32.mxu0 0.0
    %250 = vmatmul.mubr.f32.gmra.mrb[0].mxu0 %v115
    %v251 = vpop.f32.mrb[0].mxu0
    %v252 = vadd.f32 0.0, %v251
    %v253 = vpop.f32.mrb[0].mxu0
    %v254 = vadd.f32 0.0, %v253
    %255 = vmatprep.mubr.f32.mxu0 0.0
    %256 = vmatmul.mubr.f32.gmra.mrb[0].mxu0 %v116
    %v257 = vpop.f32.mrb[0].mxu0
    %v258 = vadd.f32 0.0, %v257
    %v259 = vpop.f32.mrb[0].mxu0
    %v260 = vadd.f32 0.0, %v259
    %261 = vmatprep.mubr.f32.mxu0 0.0
    %262 = vmatmul.mubr.f32.gmra.mrb[0].mxu0 %v117
    %v263 = vpop.f32.mrb[0].mxu0
    %v264 = vadd.f32 0.0, %v263
    %v265 = vpop.f32.mrb[0].mxu0
    %v266 = vadd.f32 0.0, %v265
    %267 = vmatprep.mubr.f32.mxu0 0.0
    %268 = vmatmul.mubr.f32.gmra.mrb[0].mxu0 %v118
    %v269 = vpop.f32.mrb[0].mxu0
    %v270 = vadd.f32 0.0, %v269
    %v271 = vpop.f32.mrb[0].mxu0
    %v272 = vadd.f32 0.0, %v271
    %273 = vmatprep.mubr.f32.mxu0 0.0
    %274 = vmatmul.mubr.f32.gmra.mrb[0].mxu0 %v119
    %v275 = vpop.f32.mrb[0].mxu0
    %v276 = vadd.f32 0.0, %v275
    %v277 = vpop.f32.mrb[0].mxu0
    %v278 = vadd.f32 0.0, %v277
    %279 = vmatprep.mubr.f32.mxu0 0.0
    %280 = vmatmul.mubr.f32.gmra.mrb[0].mxu0 %v120
    %v281 = vpop.f32.mrb[0].mxu0
    %v282 = vadd.f32 0.0, %v281
    %v283 = vpop.f32.mrb[0].mxu0
    %v284 = vadd.f32 0.0, %v283
    %285 = vmatprep.mubr.f32.mxu0 0.0
    %286 = vmatmul.mubr.f32.gmra.mrb[0].mxu0 %v121
    %v287 = vpop.f32.mrb[0].mxu0
    %v288 = vadd.f32 0.0, %v287
    %v289 = vpop.f32.mrb[0].mxu0
    %v290 = vadd.f32 0.0, %v289
    %291 = vmatprep.mubr.f32.mxu0 0.0
    %292 = vmatmul.mubr.f32.gmra.mrb[0].mxu0 %v122
    %v293 = vpop.f32.mrb[0].mxu0
    %v294 = vadd.f32 0.0, %v293
    %v295 = vpop.f32.mrb[0].mxu0
    %v296 = vadd.f32 0.0, %v295
    %297 = vmatprep.mubr.f32.mxu0 0.0
    %298 = vmatmul.mubr.f32.gmra.mrb[0].mxu0 %v123
    %v299 = vpop.f32.mrb[0].mxu0
    %v300 = vadd.f32 0.0, %v299
    %v301 = vpop.f32.mrb[0].mxu0
    %v302 = vadd.f32 0.0, %v301
    %303 = vmatprep.mubr.f32.mxu0 0.0
    %304 = vmatmul.mubr.f32.gmra.mrb[0].mxu0 %v124
    %v305 = vpop.f32.mrb[0].mxu0
    %v306 = vadd.f32 0.0, %v305
    %v307 = vpop.f32.mrb[0].mxu0
    %v308 = vadd.f32 0.0, %v307
    %309 = vmatprep.mubr.f32.mxu0 0.0
    %310 = vmatmul.mubr.f32.gmra.mrb[0].mxu0 %v125
    %v311 = vpop.f32.mrb[0].mxu0
    %v312 = vadd.f32 0.0, %v311
    %v313 = vpop.f32.mrb[0].mxu0
    %v314 = vadd.f32 0.0, %v313
    %315 = vmatprep.mubr.f32.mxu0 0.0
    %316 = vmatmul.mubr.f32.gmra.mrb[0].mxu0 %v126
    %v317 = vpop.f32.mrb[0].mxu0
    %v318 = vadd.f32 0.0, %v317
    %v319 = vpop.f32.mrb[0].mxu0
    %v320 = vadd.f32 0.0, %v319
    %321 = vmatprep.mubr.f32.mxu0 0.0
    %322 = vmatmul.mubr.f32.gmra.mrb[0].mxu0 %v127
    %v323 = vpop.f32.mrb[0].mxu0
    %v324 = vadd.f32 0.0, %v323
    %v325 = vpop.f32.mrb[0].mxu0
    %v326 = vadd.f32 0.0, %v325
    %327 = vmatprep.mubr.f32.mxu0 0.0
    %328 = vmatmul.mubr.f32.gmra.mrb[0].mxu0 %v128
    %v329 = vpop.f32.mrb[0].mxu0
    %v330 = vadd.f32 0.0, %v329
    %v331 = vpop.f32.mrb[0].mxu0
    %v332 = vadd.f32 0.0, %v331
    %333 = vmatprep.mubr.f32.mxu0 0.0
    %334 = vmatmul.mubr.f32.gmra.mrb[0].mxu0 %v129
    %v335 = vpop.f32.mrb[0].mxu0
    %v336 = vadd.f32 0.0, %v335
    %v337 = vpop.f32.mrb[0].mxu0
    %v338 = vadd.f32 0.0, %v337
    %339 = vdwg.mxu0
    %340 = vmatprep.subr.mxu0 0.0
    %341 = vmatpush1.msra.mxu0 %v132
    %342 = vmatprep.subr.mxu0 0.0
    %343 = vmatpush1.msra.mxu0 %v135
    %344 = vmatprep.subr.mxu0 0.0
    %345 = vmatpush1.msra.mxu0 %v138
    %346 = vmatprep.subr.mxu0 0.0
    %347 = vmatpush1.msra.mxu0 %v141
    %348 = vmatprep.subr.mxu0 0.0
    %349 = vmatpush1.msra.mxu0 %v144
    %350 = vmatprep.subr.mxu0 0.0
    %351 = vmatpush1.msra.mxu0 %v147
    %352 = vmatprep.subr.mxu0 0.0
    %353 = vmatpush1.msra.mxu0 %v150
    %354 = vmatprep.subr.mxu0 0.0
    %355 = vmatpush1.msra.mxu0 %v153
    %356 = vmatprep.subr.mxu0 0.0
    %357 = vmatpush1.msra.mxu0 %v156
    %358 = vmatprep.subr.mxu0 0.0
    %359 = vmatpush1.msra.mxu0 %v159
    %360 = vmatprep.subr.mxu0 0.0
    %361 = vmatpush1.msra.mxu0 %v162
    %362 = vmatprep.subr.mxu0 0.0
    %363 = vmatpush1.msra.mxu0 %v165
    %364 = vmatprep.subr.mxu0 0.0
    %365 = vmatpush1.msra.mxu0 %v168
    %366 = vmatprep.subr.mxu0 0.0
    %367 = vmatpush1.msra.mxu0 %v171
    %368 = vmatprep.subr.mxu0 0.0
    %369 = vmatpush1.msra.mxu0 %v174
    %370 = vmatprep.subr.mxu0 0.0
    %371 = vmatpush1.msra.mxu0 %v177
    %372 = vmatprep.subr.mxu0 0.0
    %373 = vmatpush1.msra.mxu0 0.0
    %374 = vmatprep.subr.mxu0 0.0
    %375 = vmatpush1.msra.mxu0 0.0
    %376 = vmatprep.subr.mxu0 0.0
    %377 = vmatpush1.msra.mxu0 0.0
    %378 = vmatprep.subr.mxu0 0.0
    %379 = vmatpush1.msra.mxu0 0.0
    %380 = vmatprep.subr.mxu0 0.0
    %381 = vmatpush1.msra.mxu0 0.0
    %382 = vmatprep.subr.mxu0 0.0
    %383 = vmatpush1.msra.mxu0 0.0
    %384 = vmatprep.subr.mxu0 0.0
    %385 = vmatpush1.msra.mxu0 0.0
    %386 = vmatprep.subr.mxu0 0.0
    %387 = vmatpush1.msra.mxu0 0.0
    %388 = vmatprep.subr.mxu0 0.0
    %389 = vmatpush1.msra.mxu0 0.0
    %390 = vmatprep.subr.mxu0 0.0
    %391 = vmatpush1.msra.mxu0 0.0
    %392 = vmatprep.subr.mxu0 0.0
    %393 = vmatpush1.msra.mxu0 0.0
    %394 = vmatprep.subr.mxu0 0.0
    %395 = vmatpush1.msra.mxu0 0.0
    %396 = vmatprep.subr.mxu0 0.0
    %397 = vmatpush1.msra.mxu0 0.0
    %398 = vmatprep.subr.mxu0 0.0
    %399 = vmatpush1.msra.mxu0 0.0
    %400 = vmatprep.subr.mxu0 0.0
    %401 = vmatpush1.msra.mxu0 0.0
    %402 = vmatprep.subr.mxu0 0.0
    %403 = vmatpush1.msra.mxu0 0.0
    %404 = vmatprep.mubr.f32.mxu0 0.0
    %405 = vmatmul.mubr.f32.gmra.mrb[0].mxu0 %v114
    %v406 = vpop.f32.mrb[0].mxu0
    %v407 = vadd.f32 0.0, %v406
    %v408 = vpop.f32.mrb[0].mxu0
    %409 = vmatprep.mubr.f32.mxu0 0.0
    %410 = vmatmul.mubr.f32.gmra.mrb[0].mxu0 %v115
    %v411 = vpop.f32.mrb[0].mxu0
    %v412 = vadd.f32 0.0, %v411
    %v413 = vpop.f32.mrb[0].mxu0
    %414 = vmatprep.mubr.f32.mxu0 0.0
    %415 = vmatmul.mubr.f32.gmra.mrb[0].mxu0 %v116
    %v416 = vpop.f32.mrb[0].mxu0
    %v417 = vadd.f32 0.0, %v416
    %v418 = vpop.f32.mrb[0].mxu0
    %419 = vmatprep.mubr.f32.mxu0 0.0
    %420 = vmatmul.mubr.f32.gmra.mrb[0].mxu0 %v117
    %v421 = vpop.f32.mrb[0].mxu0
    %v422 = vadd.f32 0.0, %v421
    %v423 = vpop.f32.mrb[0].mxu0
    %424 = vmatprep.mubr.f32.mxu0 0.0
    %425 = vmatmul.mubr.f32.gmra.mrb[0].mxu0 %v118
    %v426 = vpop.f32.mrb[0].mxu0
    %v427 = vadd.f32 0.0, %v426
    %v428 = vpop.f32.mrb[0].mxu0
    %429 = vmatprep.mubr.f32.mxu0 0.0
    %430 = vmatmul.mubr.f32.gmra.mrb[0].mxu0 %v119
    %v431 = vpop.f32.mrb[0].mxu0
    %v432 = vadd.f32 0.0, %v431
    %v433 = vpop.f32.mrb[0].mxu0
    %434 = vmatprep.mubr.f32.mxu0 0.0
    %435 = vmatmul.mubr.f32.gmra.mrb[0].mxu0 %v120
    %v436 = vpop.f32.mrb[0].mxu0
    %v437 = vadd.f32 0.0, %v436
    %v438 = vpop.f32.mrb[0].mxu0
    %439 = vmatprep.mubr.f32.mxu0 0.0
    %440 = vmatmul.mubr.f32.gmra.mrb[0].mxu0 %v121
    %v441 = vpop.f32.mrb[0].mxu0
    %v442 = vadd.f32 0.0, %v441
    %v443 = vpop.f32.mrb[0].mxu0
    %444 = vmatprep.mubr.f32.mxu0 0.0
    %445 = vmatmul.mubr.f32.gmra.mrb[0].mxu0 %v122
    %v446 = vpop.f32.mrb[0].mxu0
    %v447 = vadd.f32 0.0, %v446
    %v448 = vpop.f32.mrb[0].mxu0
    %449 = vmatprep.mubr.f32.mxu0 0.0
    %450 = vmatmul.mubr.f32.gmra.mrb[0].mxu0 %v123
    %v451 = vpop.f32.mrb[0].mxu0
    %v452 = vadd.f32 0.0, %v451
    %v453 = vpop.f32.mrb[0].mxu0
    %454 = vmatprep.mubr.f32.mxu0 0.0
    %455 = vmatmul.mubr.f32.gmra.mrb[0].mxu0 %v124
    %v456 = vpop.f32.mrb[0].mxu0
    %v457 = vadd.f32 0.0, %v456
    %v458 = vpop.f32.mrb[0].mxu0
    %459 = vmatprep.mubr.f32.mxu0 0.0
    %460 = vmatmul.mubr.f32.gmra.mrb[0].mxu0 %v125
    %v461 = vpop.f32.mrb[0].mxu0
    %v462 = vadd.f32 0.0, %v461
    %v463 = vpop.f32.mrb[0].mxu0
    %464 = vmatprep.mubr.f32.mxu0 0.0
    %465 = vmatmul.mubr.f32.gmra.mrb[0].mxu0 %v126
    %v466 = vpop.f32.mrb[0].mxu0
    %v467 = vadd.f32 0.0, %v466
    %v468 = vpop.f32.mrb[0].mxu0
    %469 = vmatprep.mubr.f32.mxu0 0.0
    %470 = vmatmul.mubr.f32.gmra.mrb[0].mxu0 %v127
    %v471 = vpop.f32.mrb[0].mxu0
    %v472 = vadd.f32 0.0, %v471
    %v473 = vpop.f32.mrb[0].mxu0
    %474 = vmatprep.mubr.f32.mxu0 0.0
    %475 = vmatmul.mubr.f32.gmra.mrb[0].mxu0 %v128
    %v476 = vpop.f32.mrb[0].mxu0
    %v477 = vadd.f32 0.0, %v476
    %v478 = vpop.f32.mrb[0].mxu0
    %479 = vmatprep.mubr.f32.mxu0 0.0
    %480 = vmatmul.mubr.f32.gmra.mrb[0].mxu0 %v129
    %v481 = vpop.f32.mrb[0].mxu0
    %v482 = vadd.f32 0.0, %v481
    %v483 = vpop.f32.mrb[0].mxu0
    %484 = vdwg.mxu0
    %485 = vxpose.xlu0.b32.start [1/16] %v248, 128
    %486 = vxpose.xlu0.b32.cont [2/16] %v254, 128
    %487 = vxpose.xlu0.b32.cont [3/16] %v260, 128
    %488 = vxpose.xlu0.b32.cont [4/16] %v266, 128
    %489 = vxpose.xlu0.b32.cont [5/16] %v272, 128
    %490 = vxpose.xlu0.b32.cont [6/16] %v278, 128
    %491 = vxpose.xlu0.b32.cont [7/16] %v284, 128
    %492 = vxpose.xlu0.b32.cont [8/16] %v290, 128
    %493 = vxpose.xlu0.b32.cont [9/16] %v296, 128
    %494 = vxpose.xlu0.b32.cont [10/16] %v302, 128
    %495 = vxpose.xlu0.b32.cont [11/16] %v308, 128
    %496 = vxpose.xlu0.b32.cont [12/16] %v314, 128
    %497 = vxpose.xlu0.b32.cont [13/16] %v320, 128
    %498 = vxpose.xlu0.b32.cont [14/16] %v326, 128
    %499 = vxpose.xlu0.b32.cont [15/16] %v332, 128
    %500 = vxpose.xlu0.b32.end [16/16] %v338, 128
    %v501 = vpop.trf.xlu0
    %v502 = vpop.trf.xlu0
    %v503 = vpop.trf.xlu0
    %v504 = vpop.trf.xlu0
    %v505 = vpop.trf.xlu0
    %v506 = vpop.trf.xlu0
    %v507 = vpop.trf.xlu0
    %v508 = vpop.trf.xlu0
    %v509 = vpop.trf.xlu0
    %v510 = vpop.trf.xlu0
    %v511 = vpop.trf.xlu0
    %v512 = vpop.trf.xlu0
    %v513 = vpop.trf.xlu0
    %v514 = vpop.trf.xlu0
    %v515 = vpop.trf.xlu0
    %v516 = vpop.trf.xlu0
    %vm517 = vcmask 1043456
    %v518 = vsel %vm517, %v501, -inf
    %519 = vmax.xlane.f32.xlu0 %v518
    %v520 = vpop.xlane.xlu0 %519
    %v521 = vlaneseq
    %v522 = vand.u32 %v521, 127
    %524 = vset.pattern.permute.xlu0 0
    %525 = vperm.xlu0 %524, %v407
    %v526 = vpop.permute.xlu0 %525
    %529 = vset.pattern.permute.xlu0 0
    %530 = vperm.xlu0 %529, %v412
    %v531 = vpop.permute.xlu0 %530
    %534 = vset.pattern.permute.xlu0 0
    %535 = vperm.xlu0 %534, %v417
    %v536 = vpop.permute.xlu0 %535
    %539 = vset.pattern.permute.xlu0 0
    %540 = vperm.xlu0 %539, %v422
    %v541 = vpop.permute.xlu0 %540
    %544 = vset.pattern.permute.xlu0 0
    %545 = vperm.xlu0 %544, %v427
    %v546 = vpop.permute.xlu0 %545
    %549 = vset.pattern.permute.xlu0 0
    %550 = vperm.xlu0 %549, %v432
    %v551 = vpop.permute.xlu0 %550
    %554 = vset.pattern.permute.xlu0 0
    %555 = vperm.xlu0 %554, %v437
    %v556 = vpop.permute.xlu0 %555
    %559 = vset.pattern.permute.xlu0 0
    %560 = vperm.xlu0 %559, %v442
    %v561 = vpop.permute.xlu0 %560
    %564 = vset.pattern.permute.xlu0 0
    %565 = vperm.xlu0 %564, %v447
    %v566 = vpop.permute.xlu0 %565
    %569 = vset.pattern.permute.xlu0 0
    %570 = vperm.xlu0 %569, %v452
    %v571 = vpop.permute.xlu0 %570
    %574 = vset.pattern.permute.xlu0 0
    %575 = vperm.xlu0 %574, %v457
    %v576 = vpop.permute.xlu0 %575
    %579 = vset.pattern.permute.xlu0 0
    %580 = vperm.xlu0 %579, %v462
    %v581 = vpop.permute.xlu0 %580
    %584 = vset.pattern.permute.xlu0 0
    %585 = vperm.xlu0 %584, %v467
    %v586 = vpop.permute.xlu0 %585
    %589 = vset.pattern.permute.xlu0 0
    %590 = vperm.xlu0 %589, %v472
    %v591 = vpop.permute.xlu0 %590
    %594 = vset.pattern.permute.xlu0 0
    %595 = vperm.xlu0 %594, %v477
    %v596 = vpop.permute.xlu0 %595
    %599 = vset.pattern.permute.xlu0 0
    %600 = vperm.xlu0 %599, %v482
    %v601 = vpop.permute.xlu0 %600
    %v603 = vlaneseq
    %v604 = vshrl.u32 %v603, 7
    %v605 = vsub.s32 0, %v604
    %v606 = vrot.slane %v501, %v605
    %v607 = vadd.f32 %v526, %v606
    %v608 = vadd.f32 %v531, %v606
    %v609 = vadd.f32 %v536, %v606
    %v610 = vadd.f32 %v541, %v606
    %v611 = vadd.f32 %v546, %v606
    %v612 = vadd.f32 %v551, %v606
    %v613 = vadd.f32 %v556, %v606
    %v614 = vadd.f32 %v561, %v606
    %v615 = vadd.f32 %v566, %v606
    %v616 = vadd.f32 %v571, %v606
    %v617 = vadd.f32 %v576, %v606
    %v618 = vadd.f32 %v581, %v606
    %v619 = vadd.f32 %v586, %v606
    %v620 = vadd.f32 %v591, %v606
    %v621 = vadd.f32 %v596, %v606
    %v622 = vadd.f32 %v601, %v606
    %vm623 = vcmp.gt.f32.partialorder %v607, 0.0
    %vm624 = vcmp.gt.f32.partialorder %v608, 0.0
    %vm625 = vcmp.gt.f32.partialorder %v609, 0.0
    %vm626 = vcmp.gt.f32.partialorder %v610, 0.0
    %vm627 = vcmp.gt.f32.partialorder %v611, 0.0
    %vm628 = vcmp.gt.f32.partialorder %v612, 0.0
    %vm629 = vcmp.gt.f32.partialorder %v613, 0.0
    %vm630 = vcmp.gt.f32.partialorder %v614, 0.0
    %vm631 = vcmp.gt.f32.partialorder %v615, 0.0
    %vm632 = vcmp.gt.f32.partialorder %v616, 0.0
    %vm633 = vcmp.gt.f32.partialorder %v617, 0.0
    %vm634 = vcmp.gt.f32.partialorder %v618, 0.0
    %vm635 = vcmp.gt.f32.partialorder %v619, 0.0
    %vm636 = vcmp.gt.f32.partialorder %v620, 0.0
    %vm637 = vcmp.gt.f32.partialorder %v621, 0.0
    %vm638 = vcmp.gt.f32.partialorder %v622, 0.0
    %v639 = vmul.f32 %v607, 0.2
    %v640 = vmul.f32 %v608, 0.2
    %v641 = vmul.f32 %v609, 0.2
    %v642 = vmul.f32 %v610, 0.2
    %v643 = vmul.f32 %v611, 0.2
    %v644 = vmul.f32 %v612, 0.2
    %v645 = vmul.f32 %v613, 0.2
    %v646 = vmul.f32 %v614, 0.2
    %v647 = vmul.f32 %v615, 0.2
    %v648 = vmul.f32 %v616, 0.2
    %v649 = vmul.f32 %v617, 0.2
    %v650 = vmul.f32 %v618, 0.2
    %v651 = vmul.f32 %v619, 0.2
    %v652 = vmul.f32 %v620, 0.2
    %v653 = vmul.f32 %v621, 0.2
    %v654 = vmul.f32 %v622, 0.2
    %v655 = vsel %vm623, %v607, %v639
    %v656 = vsel %vm624, %v608, %v640
    %v657 = vsel %vm625, %v609, %v641
    %v658 = vsel %vm626, %v610, %v642
    %v659 = vsel %vm627, %v611, %v643
    %v660 = vsel %vm628, %v612, %v644
    %v661 = vsel %vm629, %v613, %v645
    %v662 = vsel %vm630, %v614, %v646
    %v663 = vsel %vm631, %v615, %v647
    %v664 = vsel %vm632, %v616, %v648
    %v665 = vsel %vm633, %v617, %v649
    %v666 = vsel %vm634, %v618, %v650
    %v667 = vsel %vm635, %v619, %v651
    %v668 = vsel %vm636, %v620, %v652
    %v669 = vsel %vm637, %v621, %v653
    %v670 = vsel %vm638, %v622, %v654
    %v671 = vlaneseq
    %v672 = vshrl.u32 %v671, 7
    %v673 = vsub.s32 0, %v672
    %v674 = vrot.slane %v520, %v673
    %v675 = vadd.f32 %v407, %v674
    %v676 = vadd.f32 %v412, %v674
    %v677 = vadd.f32 %v417, %v674
    %v678 = vadd.f32 %v422, %v674
    %v679 = vadd.f32 %v427, %v674
    %v680 = vadd.f32 %v432, %v674
    %v681 = vadd.f32 %v437, %v674
    %v682 = vadd.f32 %v442, %v674
    %v683 = vadd.f32 %v447, %v674
    %v684 = vadd.f32 %v452, %v674
    %v685 = vadd.f32 %v457, %v674
    %v686 = vadd.f32 %v462, %v674
    %v687 = vadd.f32 %v467, %v674
    %v688 = vadd.f32 %v472, %v674
    %v689 = vadd.f32 %v477, %v674
    %v690 = vadd.f32 %v482, %v674
    %vm691 = vcmp.gt.f32.partialorder %v675, 0.0
    %vm692 = vcmp.gt.f32.partialorder %v676, 0.0
    %vm693 = vcmp.gt.f32.partialorder %v677, 0.0
    %vm694 = vcmp.gt.f32.partialorder %v678, 0.0
    %vm695 = vcmp.gt.f32.partialorder %v679, 0.0
    %vm696 = vcmp.gt.f32.partialorder %v680, 0.0
    %vm697 = vcmp.gt.f32.partialorder %v681, 0.0
    %vm698 = vcmp.gt.f32.partialorder %v682, 0.0
    %vm699 = vcmp.gt.f32.partialorder %v683, 0.0
    %vm700 = vcmp.gt.f32.partialorder %v684, 0.0
    %vm701 = vcmp.gt.f32.partialorder %v685, 0.0
    %vm702 = vcmp.gt.f32.partialorder %v686, 0.0
    %vm703 = vcmp.gt.f32.partialorder %v687, 0.0
    %vm704 = vcmp.gt.f32.partialorder %v688, 0.0
    %vm705 = vcmp.gt.f32.partialorder %v689, 0.0
    %vm706 = vcmp.gt.f32.partialorder %v690, 0.0
    %v707 = vmul.f32 %v675, 0.2
    %v708 = vmul.f32 %v676, 0.2
    %v709 = vmul.f32 %v677, 0.2
    %v710 = vmul.f32 %v678, 0.2
    %v711 = vmul.f32 %v679, 0.2
    %v712 = vmul.f32 %v680, 0.2
    %v713 = vmul.f32 %v681, 0.2
    %v714 = vmul.f32 %v682, 0.2
    %v715 = vmul.f32 %v683, 0.2
    %v716 = vmul.f32 %v684, 0.2
    %v717 = vmul.f32 %v685, 0.2
    %v718 = vmul.f32 %v686, 0.2
    %v719 = vmul.f32 %v687, 0.2
    %v720 = vmul.f32 %v688, 0.2
    %v721 = vmul.f32 %v689, 0.2
    %v722 = vmul.f32 %v690, 0.2
    %v723 = vsel %vm691, %v675, %v707
    %v724 = vsel %vm692, %v676, %v708
    %v725 = vsel %vm693, %v677, %v709
    %v726 = vsel %vm694, %v678, %v710
    %v727 = vsel %vm695, %v679, %v711
    %v728 = vsel %vm696, %v680, %v712
    %v729 = vsel %vm697, %v681, %v713
    %v730 = vsel %vm698, %v682, %v714
    %v731 = vsel %vm699, %v683, %v715
    %v732 = vsel %vm700, %v684, %v716
    %v733 = vsel %vm701, %v685, %v717
    %v734 = vsel %vm702, %v686, %v718
    %v735 = vsel %vm703, %v687, %v719
    %v736 = vsel %vm704, %v688, %v720
    %v737 = vsel %vm705, %v689, %v721
    %v738 = vsel %vm706, %v690, %v722
    %740 = vset.pattern.permute.xlu0 0
    %741 = vperm.xlu0 %740, %v723
    %v742 = vpop.permute.xlu0 %741
    %745 = vset.pattern.permute.xlu0 0
    %746 = vperm.xlu0 %745, %v724
    %v747 = vpop.permute.xlu0 %746
    %750 = vset.pattern.permute.xlu0 0
    %751 = vperm.xlu0 %750, %v725
    %v752 = vpop.permute.xlu0 %751
    %755 = vset.pattern.permute.xlu0 0
    %756 = vperm.xlu0 %755, %v726
    %v757 = vpop.permute.xlu0 %756
    %760 = vset.pattern.permute.xlu0 0
    %761 = vperm.xlu0 %760, %v727
    %v762 = vpop.permute.xlu0 %761
    %765 = vset.pattern.permute.xlu0 0
    %766 = vperm.xlu0 %765, %v728
    %v767 = vpop.permute.xlu0 %766
    %770 = vset.pattern.permute.xlu0 0
    %771 = vperm.xlu0 %770, %v729
    %v772 = vpop.permute.xlu0 %771
    %775 = vset.pattern.permute.xlu0 0
    %776 = vperm.xlu0 %775, %v730
    %v777 = vpop.permute.xlu0 %776
    %780 = vset.pattern.permute.xlu0 0
    %781 = vperm.xlu0 %780, %v731
    %v782 = vpop.permute.xlu0 %781
    %785 = vset.pattern.permute.xlu0 0
    %786 = vperm.xlu0 %785, %v732
    %v787 = vpop.permute.xlu0 %786
    %790 = vset.pattern.permute.xlu0 0
    %791 = vperm.xlu0 %790, %v733
    %v792 = vpop.permute.xlu0 %791
    %795 = vset.pattern.permute.xlu0 0
    %796 = vperm.xlu0 %795, %v734
    %v797 = vpop.permute.xlu0 %796
    %800 = vset.pattern.permute.xlu0 0
    %801 = vperm.xlu0 %800, %v735
    %v802 = vpop.permute.xlu0 %801
    %805 = vset.pattern.permute.xlu0 0
    %806 = vperm.xlu0 %805, %v736
    %v807 = vpop.permute.xlu0 %806
    %810 = vset.pattern.permute.xlu0 0
    %811 = vperm.xlu0 %810, %v737
    %v812 = vpop.permute.xlu0 %811
    %815 = vset.pattern.permute.xlu0 0
    %816 = vperm.xlu0 %815, %v738
    %v817 = vpop.permute.xlu0 %816
    %v819 = vsub.f32 %v655, %v742
    %v820 = vsub.f32 %v656, %v747
    %v821 = vsub.f32 %v657, %v752
    %v822 = vsub.f32 %v658, %v757
    %v823 = vsub.f32 %v659, %v762
    %v824 = vsub.f32 %v660, %v767
    %v825 = vsub.f32 %v661, %v772
    %v826 = vsub.f32 %v662, %v777
    %v827 = vsub.f32 %v663, %v782
    %v828 = vsub.f32 %v664, %v787
    %v829 = vsub.f32 %v665, %v792
    %v830 = vsub.f32 %v666, %v797
    %v831 = vsub.f32 %v667, %v802
    %v832 = vsub.f32 %v668, %v807
    %v833 = vsub.f32 %v669, %v812
    %v834 = vsub.f32 %v670, %v817
    %v835 = vsel %vm98, 65537, 0
    %v836 = vsel %vm99, 65537, 0
    %v837 = vsel %vm100, 65537, 0
    %v838 = vsel %vm101, 65537, 0
    %v839 = vsel %vm102, 65537, 0
    %v840 = vsel %vm103, 65537, 0
    %v841 = vsel %vm104, 65537, 0
    %v842 = vsel %vm105, 65537, 0
    %v843 = vsel %vm106, 65537, 0
    %v844 = vsel %vm107, 65537, 0
    %v845 = vsel %vm108, 65537, 0
    %v846 = vsel %vm109, 65537, 0
    %v847 = vsel %vm110, 65537, 0
    %v848 = vsel %vm111, 65537, 0
    %v849 = vsel %vm112, 65537, 0
    %v850 = vsel %vm113, 65537, 0
    %v851 = vunpack.c.l.b16 %v835
    %v852 = vunpack.c.l.b16 %v836
    %v853 = vunpack.c.l.b16 %v837
    %v854 = vunpack.c.l.b16 %v838
    %v855 = vunpack.c.l.b16 %v839
    %v856 = vunpack.c.l.b16 %v840
    %v857 = vunpack.c.l.b16 %v841
    %v858 = vunpack.c.l.b16 %v842
    %v859 = vunpack.c.l.b16 %v843
    %v860 = vunpack.c.l.b16 %v844
    %v861 = vunpack.c.l.b16 %v845
    %v862 = vunpack.c.l.b16 %v846
    %v863 = vunpack.c.l.b16 %v847
    %v864 = vunpack.c.l.b16 %v848
    %v865 = vunpack.c.l.b16 %v849
    %v866 = vunpack.c.l.b16 %v850
    %vm867 = vcmp.ne.s32.totalorder %v851, 0
    %vm868 = vcmp.ne.s32.totalorder %v852, 0
    %vm869 = vcmp.ne.s32.totalorder %v853, 0
    %vm870 = vcmp.ne.s32.totalorder %v854, 0
    %vm871 = vcmp.ne.s32.totalorder %v855, 0
    %vm872 = vcmp.ne.s32.totalorder %v856, 0
    %vm873 = vcmp.ne.s32.totalorder %v857, 0
    %vm874 = vcmp.ne.s32.totalorder %v858, 0
    %vm875 = vcmp.ne.s32.totalorder %v859, 0
    %vm876 = vcmp.ne.s32.totalorder %v860, 0
    %vm877 = vcmp.ne.s32.totalorder %v861, 0
    %vm878 = vcmp.ne.s32.totalorder %v862, 0
    %vm879 = vcmp.ne.s32.totalorder %v863, 0
    %vm880 = vcmp.ne.s32.totalorder %v864, 0
    %vm881 = vcmp.ne.s32.totalorder %v865, 0
    %vm882 = vcmp.ne.s32.totalorder %v866, 0
    %v883 = vsel %vm867, %v819, -1e+30
    %v884 = vsel %vm868, %v820, -1e+30
    %v885 = vsel %vm869, %v821, -1e+30
    %v886 = vsel %vm870, %v822, -1e+30
    %v887 = vsel %vm871, %v823, -1e+30
    %v888 = vsel %vm872, %v824, -1e+30
    %v889 = vsel %vm873, %v825, -1e+30
    %v890 = vsel %vm874, %v826, -1e+30
    %v891 = vsel %vm875, %v827, -1e+30
    %v892 = vsel %vm876, %v828, -1e+30
    %v893 = vsel %vm877, %v829, -1e+30
    %v894 = vsel %vm878, %v830, -1e+30
    %v895 = vsel %vm879, %v831, -1e+30
    %v896 = vsel %vm880, %v832, -1e+30
    %v897 = vsel %vm881, %v833, -1e+30
    %v898 = vsel %vm882, %v834, -1e+30
    %v899 = vmul.f32 %v883, 1.442695
    %v900 = vpow.pop %v899
    %v901 = vmul.f32 %v884, 1.442695
    %v902 = vpow.pop %v901
    %v903 = vmul.f32 %v885, 1.442695
    %v904 = vpow.pop %v903
    %v905 = vmul.f32 %v886, 1.442695
    %v906 = vpow.pop %v905
    %v907 = vmul.f32 %v887, 1.442695
    %v908 = vpow.pop %v907
    %v909 = vmul.f32 %v888, 1.442695
    %v910 = vpow.pop %v909
    %v911 = vmul.f32 %v889, 1.442695
    %v912 = vpow.pop %v911
    %v913 = vmul.f32 %v890, 1.442695
    %v914 = vpow.pop %v913
    %v915 = vmul.f32 %v891, 1.442695
    %v916 = vpow.pop %v915
    %v917 = vmul.f32 %v892, 1.442695
    %v918 = vpow.pop %v917
    %v919 = vmul.f32 %v893, 1.442695
    %v920 = vpow.pop %v919
    %v921 = vmul.f32 %v894, 1.442695
    %v922 = vpow.pop %v921
    %v923 = vmul.f32 %v895, 1.442695
    %v924 = vpow.pop %v923
    %v925 = vmul.f32 %v896, 1.442695
    %v926 = vpow.pop %v925
    %v927 = vmul.f32 %v897, 1.442695
    %v928 = vpow.pop %v927
    %v929 = vmul.f32 %v898, 1.442695
    %v930 = vpow.pop %v929
    %931 = vadd.xlane.f32.xlu0 %v900
    %v932 = vpop.xlane.xlu0 %931
    %933 = vadd.xlane.f32.xlu0 %v902
    %v934 = vpop.xlane.xlu0 %933
    %935 = vadd.xlane.f32.xlu0 %v904
    %v936 = vpop.xlane.xlu0 %935
    %937 = vadd.xlane.f32.xlu0 %v906
    %v938 = vpop.xlane.xlu0 %937
    %939 = vadd.xlane.f32.xlu0 %v908
    %v940 = vpop.xlane.xlu0 %939
    %941 = vadd.xlane.f32.xlu0 %v910
    %v942 = vpop.xlane.xlu0 %941
    %943 = vadd.xlane.f32.xlu0 %v912
    %v944 = vpop.xlane.xlu0 %943
    %945 = vadd.xlane.f32.xlu0 %v914
    %v946 = vpop.xlane.xlu0 %945
    %947 = vadd.xlane.f32.xlu0 %v916
    %v948 = vpop.xlane.xlu0 %947
    %949 = vadd.xlane.f32.xlu0 %v918
    %v950 = vpop.xlane.xlu0 %949
    %951 = vadd.xlane.f32.xlu0 %v920
    %v952 = vpop.xlane.xlu0 %951
    %953 = vadd.xlane.f32.xlu0 %v922
    %v954 = vpop.xlane.xlu0 %953
    %955 = vadd.xlane.f32.xlu0 %v924
    %v956 = vpop.xlane.xlu0 %955
    %957 = vadd.xlane.f32.xlu0 %v926
    %v958 = vpop.xlane.xlu0 %957
    %959 = vadd.xlane.f32.xlu0 %v928
    %v960 = vpop.xlane.xlu0 %959
    %961 = vadd.xlane.f32.xlu0 %v930
    %v962 = vpop.xlane.xlu0 %961
    %v963 = vmax.f32 %v932, 1e-30
    %v964 = vmax.f32 %v934, 1e-30
    %v965 = vmax.f32 %v936, 1e-30
    %v966 = vmax.f32 %v938, 1e-30
    %v967 = vmax.f32 %v940, 1e-30
    %v968 = vmax.f32 %v942, 1e-30
    %v969 = vmax.f32 %v944, 1e-30
    %v970 = vmax.f32 %v946, 1e-30
    %v971 = vmax.f32 %v948, 1e-30
    %v972 = vmax.f32 %v950, 1e-30
    %v973 = vmax.f32 %v952, 1e-30
    %v974 = vmax.f32 %v954, 1e-30
    %v975 = vmax.f32 %v956, 1e-30
    %v976 = vmax.f32 %v958, 1e-30
    %v977 = vmax.f32 %v960, 1e-30
    %v978 = vmax.f32 %v962, 1e-30
    %v979 = vrcp.pop %v963
    %v980 = vrcp.pop %v964
    %v981 = vrcp.pop %v965
    %v982 = vrcp.pop %v966
    %v983 = vrcp.pop %v967
    %v984 = vrcp.pop %v968
    %v985 = vrcp.pop %v969
    %v986 = vrcp.pop %v970
    %v987 = vrcp.pop %v971
    %v988 = vrcp.pop %v972
    %v989 = vrcp.pop %v973
    %v990 = vrcp.pop %v974
    %v991 = vrcp.pop %v975
    %v992 = vrcp.pop %v976
    %v993 = vrcp.pop %v977
    %v994 = vrcp.pop %v978
    %vm995 = vcmp.ge.s32.totalorder %v522, 0
    %vm996 = vcmp.lt.s32.totalorder %v522, 4
    %vm997 = vmand %vm995, %vm996
    %v998 = vsel %vm997, 1, 0
    %vm999 = vcmp.eq.s32.totalorder %v998, 1
    %v1000 = vsel %vm999, %v246, 0.0
    %v1001 = vsel %vm999, %v252, 0.0
    %v1002 = vsel %vm999, %v258, 0.0
    %v1003 = vsel %vm999, %v264, 0.0
    %v1004 = vsel %vm999, %v270, 0.0
    %v1005 = vsel %vm999, %v276, 0.0
    %v1006 = vsel %vm999, %v282, 0.0
    %v1007 = vsel %vm999, %v288, 0.0
    %v1008 = vsel %vm999, %v294, 0.0
    %v1009 = vsel %vm999, %v300, 0.0
    %v1010 = vsel %vm999, %v306, 0.0
    %v1011 = vsel %vm999, %v312, 0.0
    %v1012 = vsel %vm999, %v318, 0.0
    %v1013 = vsel %vm999, %v324, 0.0
    %v1014 = vsel %vm999, %v330, 0.0
    %v1015 = vsel %vm999, %v336, 0.0
    %1016 = vmatprep.subr.mxu0 0.0
    %1017 = vmatpush1.msra.mxu0 %v1000
    %1018 = vmatprep.subr.mxu0 0.0
    %1019 = vmatpush1.msra.mxu0 %v1001
    %1020 = vmatprep.subr.mxu0 0.0
    %1021 = vmatpush1.msra.mxu0 %v1002
    %1022 = vmatprep.subr.mxu0 0.0
    %1023 = vmatpush1.msra.mxu0 %v1003
    %1024 = vmatprep.subr.mxu0 0.0
    %1025 = vmatpush1.msra.mxu0 %v1004
    %1026 = vmatprep.subr.mxu0 0.0
    %1027 = vmatpush1.msra.mxu0 %v1005
    %1028 = vmatprep.subr.mxu0 0.0
    %1029 = vmatpush1.msra.mxu0 %v1006
    %1030 = vmatprep.subr.mxu0 0.0
    %1031 = vmatpush1.msra.mxu0 %v1007
    %1032 = vmatprep.subr.mxu0 0.0
    %1033 = vmatpush1.msra.mxu0 %v1008
    %1034 = vmatprep.subr.mxu0 0.0
    %1035 = vmatpush1.msra.mxu0 %v1009
    %1036 = vmatprep.subr.mxu0 0.0
    %1037 = vmatpush1.msra.mxu0 %v1010
    %1038 = vmatprep.subr.mxu0 0.0
    %1039 = vmatpush1.msra.mxu0 %v1011
    %1040 = vmatprep.subr.mxu0 0.0
    %1041 = vmatpush1.msra.mxu0 %v1012
    %1042 = vmatprep.subr.mxu0 0.0
    %1043 = vmatpush1.msra.mxu0 %v1013
    %1044 = vmatprep.subr.mxu0 0.0
    %1045 = vmatpush1.msra.mxu0 %v1014
    %1046 = vmatprep.subr.mxu0 0.0
    %1047 = vmatpush1.msra.mxu0 %v1015
    %1048 = vmatprep.subr.mxu0 0.0
    %1049 = vmatpush1.msra.mxu0 0.0
    %1050 = vmatprep.subr.mxu0 0.0
    %1051 = vmatpush1.msra.mxu0 0.0
    %1052 = vmatprep.subr.mxu0 0.0
    %1053 = vmatpush1.msra.mxu0 0.0
    %1054 = vmatprep.subr.mxu0 0.0
    %1055 = vmatpush1.msra.mxu0 0.0
    %1056 = vmatprep.subr.mxu0 0.0
    %1057 = vmatpush1.msra.mxu0 0.0
    %1058 = vmatprep.subr.mxu0 0.0
    %1059 = vmatpush1.msra.mxu0 0.0
    %1060 = vmatprep.subr.mxu0 0.0
    %1061 = vmatpush1.msra.mxu0 0.0
    %1062 = vmatprep.subr.mxu0 0.0
    %1063 = vmatpush1.msra.mxu0 0.0
    %1064 = vmatprep.subr.mxu0 0.0
    %1065 = vmatpush1.msra.mxu0 0.0
    %1066 = vmatprep.subr.mxu0 0.0
    %1067 = vmatpush1.msra.mxu0 0.0
    %1068 = vmatprep.subr.mxu0 0.0
    %1069 = vmatpush1.msra.mxu0 0.0
    %1070 = vmatprep.subr.mxu0 0.0
    %1071 = vmatpush1.msra.mxu0 0.0
    %1072 = vmatprep.subr.mxu0 0.0
    %1073 = vmatpush1.msra.mxu0 0.0
    %1074 = vmatprep.subr.mxu0 0.0
    %1075 = vmatpush1.msra.mxu0 0.0
    %1076 = vmatprep.subr.mxu0 0.0
    %1077 = vmatpush1.msra.mxu0 0.0
    %1078 = vmatprep.subr.mxu0 0.0
    %1079 = vmatpush1.msra.mxu0 0.0
    %1080 = vmatprep.mubr.f32.mxu0 0.0
    %1081 = vmatmul.mubr.f32.gmra.mrb[0].mxu0 %v900
    %v1082 = vpop.f32.mrb[0].mxu0
    %v1083 = vadd.f32 0.0, %v1082
    %v1084 = vpop.f32.mrb[0].mxu0
    %1085 = vmatprep.mubr.f32.mxu0 0.0
    %1086 = vmatmul.mubr.f32.gmra.mrb[0].mxu0 %v902
    %v1087 = vpop.f32.mrb[0].mxu0
    %v1088 = vadd.f32 0.0, %v1087
    %v1089 = vpop.f32.mrb[0].mxu0
    %1090 = vmatprep.mubr.f32.mxu0 0.0
    %1091 = vmatmul.mubr.f32.gmra.mrb[0].mxu0 %v904
    %v1092 = vpop.f32.mrb[0].mxu0
    %v1093 = vadd.f32 0.0, %v1092
    %v1094 = vpop.f32.mrb[0].mxu0
    %1095 = vmatprep.mubr.f32.mxu0 0.0
    %1096 = vmatmul.mubr.f32.gmra.mrb[0].mxu0 %v906
    %v1097 = vpop.f32.mrb[0].mxu0
    %v1098 = vadd.f32 0.0, %v1097
    %v1099 = vpop.f32.mrb[0].mxu0
    %1100 = vmatprep.mubr.f32.mxu0 0.0
    %1101 = vmatmul.mubr.f32.gmra.mrb[0].mxu0 %v908
    %v1102 = vpop.f32.mrb[0].mxu0
    %v1103 = vadd.f32 0.0, %v1102
    %v1104 = vpop.f32.mrb[0].mxu0
    %1105 = vmatprep.mubr.f32.mxu0 0.0
    %1106 = vmatmul.mubr.f32.gmra.mrb[0].mxu0 %v910
    %v1107 = vpop.f32.mrb[0].mxu0
    %v1108 = vadd.f32 0.0, %v1107
    %v1109 = vpop.f32.mrb[0].mxu0
    %1110 = vmatprep.mubr.f32.mxu0 0.0
    %1111 = vmatmul.mubr.f32.gmra.mrb[0].mxu0 %v912
    %v1112 = vpop.f32.mrb[0].mxu0
    %v1113 = vadd.f32 0.0, %v1112
    %v1114 = vpop.f32.mrb[0].mxu0
    %1115 = vmatprep.mubr.f32.mxu0 0.0
    %1116 = vmatmul.mubr.f32.gmra.mrb[0].mxu0 %v914
    %v1117 = vpop.f32.mrb[0].mxu0
    %v1118 = vadd.f32 0.0, %v1117
    %v1119 = vpop.f32.mrb[0].mxu0
    %1120 = vmatprep.mubr.f32.mxu0 0.0
    %1121 = vmatmul.mubr.f32.gmra.mrb[0].mxu0 %v916
    %v1122 = vpop.f32.mrb[0].mxu0
    %v1123 = vadd.f32 0.0, %v1122
    %v1124 = vpop.f32.mrb[0].mxu0
    %1125 = vmatprep.mubr.f32.mxu0 0.0
    %1126 = vmatmul.mubr.f32.gmra.mrb[0].mxu0 %v918
    %v1127 = vpop.f32.mrb[0].mxu0
    %v1128 = vadd.f32 0.0, %v1127
    %v1129 = vpop.f32.mrb[0].mxu0
    %1130 = vmatprep.mubr.f32.mxu0 0.0
    %1131 = vmatmul.mubr.f32.gmra.mrb[0].mxu0 %v920
    %v1132 = vpop.f32.mrb[0].mxu0
    %v1133 = vadd.f32 0.0, %v1132
    %v1134 = vpop.f32.mrb[0].mxu0
    %1135 = vmatprep.mubr.f32.mxu0 0.0
    %1136 = vmatmul.mubr.f32.gmra.mrb[0].mxu0 %v922
    %v1137 = vpop.f32.mrb[0].mxu0
    %v1138 = vadd.f32 0.0, %v1137
    %v1139 = vpop.f32.mrb[0].mxu0
    %1140 = vmatprep.mubr.f32.mxu0 0.0
    %1141 = vmatmul.mubr.f32.gmra.mrb[0].mxu0 %v924
    %v1142 = vpop.f32.mrb[0].mxu0
    %v1143 = vadd.f32 0.0, %v1142
    %v1144 = vpop.f32.mrb[0].mxu0
    %1145 = vmatprep.mubr.f32.mxu0 0.0
    %1146 = vmatmul.mubr.f32.gmra.mrb[0].mxu0 %v926
    %v1147 = vpop.f32.mrb[0].mxu0
    %v1148 = vadd.f32 0.0, %v1147
    %v1149 = vpop.f32.mrb[0].mxu0
    %1150 = vmatprep.mubr.f32.mxu0 0.0
    %1151 = vmatmul.mubr.f32.gmra.mrb[0].mxu0 %v928
    %v1152 = vpop.f32.mrb[0].mxu0
    %v1153 = vadd.f32 0.0, %v1152
    %v1154 = vpop.f32.mrb[0].mxu0
    %1155 = vmatprep.mubr.f32.mxu0 0.0
    %1156 = vmatmul.mubr.f32.gmra.mrb[0].mxu0 %v930
    %v1157 = vpop.f32.mrb[0].mxu0
    %v1158 = vadd.f32 0.0, %v1157
    %v1159 = vpop.f32.mrb[0].mxu0
    %1160 = vdwg.mxu0
    %v1161 = vmul.f32 %v1083, %v979
    %v1162 = vmul.f32 %v1088, %v980
    %v1163 = vmul.f32 %v1093, %v981
    %v1164 = vmul.f32 %v1098, %v982
    %v1165 = vmul.f32 %v1103, %v983
    %v1166 = vmul.f32 %v1108, %v984
    %v1167 = vmul.f32 %v1113, %v985
    %v1168 = vmul.f32 %v1118, %v986
    %v1169 = vmul.f32 %v1123, %v987
    %v1170 = vmul.f32 %v1128, %v988
    %v1171 = vmul.f32 %v1133, %v989
    %v1172 = vmul.f32 %v1138, %v990
    %v1173 = vmul.f32 %v1143, %v991
    %v1174 = vmul.f32 %v1148, %v992
    %v1175 = vmul.f32 %v1153, %v993
    %v1176 = vmul.f32 %v1158, %v994
    %v1177 = vadd.f32 %v1161, 0.0
    %v1178 = vadd.f32 %v1162, 0.0
    %v1179 = vadd.f32 %v1163, 0.0
    %v1180 = vadd.f32 %v1164, 0.0
    %v1181 = vadd.f32 %v1165, 0.0
    %v1182 = vadd.f32 %v1166, 0.0
    %v1183 = vadd.f32 %v1167, 0.0
    %v1184 = vadd.f32 %v1168, 0.0
    %v1185 = vadd.f32 %v1169, 0.0
    %v1186 = vadd.f32 %v1170, 0.0
    %v1187 = vadd.f32 %v1171, 0.0
    %v1188 = vadd.f32 %v1172, 0.0
    %v1189 = vadd.f32 %v1173, 0.0
    %v1190 = vadd.f32 %v1174, 0.0
    %v1191 = vadd.f32 %v1175, 0.0
    %v1192 = vadd.f32 %v1176, 0.0
    %1193 = vset.pattern.permute.xlu0 1
    %1194 = vperm.xlu0 %1193, %v407
    %v1195 = vpop.permute.xlu0 %1194
    %1197 = vset.pattern.permute.xlu0 1
    %1198 = vperm.xlu0 %1197, %v412
    %v1199 = vpop.permute.xlu0 %1198
    %1201 = vset.pattern.permute.xlu0 1
    %1202 = vperm.xlu0 %1201, %v417
    %v1203 = vpop.permute.xlu0 %1202
    %1205 = vset.pattern.permute.xlu0 1
    %1206 = vperm.xlu0 %1205, %v422
    %v1207 = vpop.permute.xlu0 %1206
    %1209 = vset.pattern.permute.xlu0 1
    %1210 = vperm.xlu0 %1209, %v427
    %v1211 = vpop.permute.xlu0 %1210
    %1213 = vset.pattern.permute.xlu0 1
    %1214 = vperm.xlu0 %1213, %v432
    %v1215 = vpop.permute.xlu0 %1214
    %1217 = vset.pattern.permute.xlu0 1
    %1218 = vperm.xlu0 %1217, %v437
    %v1219 = vpop.permute.xlu0 %1218
    %1221 = vset.pattern.permute.xlu0 1
    %1222 = vperm.xlu0 %1221, %v442
    %v1223 = vpop.permute.xlu0 %1222
    %1225 = vset.pattern.permute.xlu0 1
    %1226 = vperm.xlu0 %1225, %v447
    %v1227 = vpop.permute.xlu0 %1226
    %1229 = vset.pattern.permute.xlu0 1
    %1230 = vperm.xlu0 %1229, %v452
    %v1231 = vpop.permute.xlu0 %1230
    %1233 = vset.pattern.permute.xlu0 1
    %1234 = vperm.xlu0 %1233, %v457
    %v1235 = vpop.permute.xlu0 %1234
    %1237 = vset.pattern.permute.xlu0 1
    %1238 = vperm.xlu0 %1237, %v462
    %v1239 = vpop.permute.xlu0 %1238
    %1241 = vset.pattern.permute.xlu0 1
    %1242 = vperm.xlu0 %1241, %v467
    %v1243 = vpop.permute.xlu0 %1242
    %1245 = vset.pattern.permute.xlu0 1
    %1246 = vperm.xlu0 %1245, %v472
    %v1247 = vpop.permute.xlu0 %1246
    %1249 = vset.pattern.permute.xlu0 1
    %1250 = vperm.xlu0 %1249, %v477
    %v1251 = vpop.permute.xlu0 %1250
    %1253 = vset.pattern.permute.xlu0 1
    %1254 = vperm.xlu0 %1253, %v482
    %v1255 = vpop.permute.xlu0 %1254
    %v1257 = vlaneseq
    %v1258 = vshrl.u32 %v1257, 7
    %v1259 = vsub.s32 1, %v1258
    %v1260 = vrot.slane %v501, %v1259
    %v1261 = vadd.f32 %v1195, %v1260
    %v1262 = vadd.f32 %v1199, %v1260
    %v1263 = vadd.f32 %v1203, %v1260
    %v1264 = vadd.f32 %v1207, %v1260
    %v1265 = vadd.f32 %v1211, %v1260
    %v1266 = vadd.f32 %v1215, %v1260
    %v1267 = vadd.f32 %v1219, %v1260
    %v1268 = vadd.f32 %v1223, %v1260
    %v1269 = vadd.f32 %v1227, %v1260
    %v1270 = vadd.f32 %v1231, %v1260
    %v1271 = vadd.f32 %v1235, %v1260
    %v1272 = vadd.f32 %v1239, %v1260
    %v1273 = vadd.f32 %v1243, %v1260
    %v1274 = vadd.f32 %v1247, %v1260
    %v1275 = vadd.f32 %v1251, %v1260
    %v1276 = vadd.f32 %v1255, %v1260
    %vm1277 = vcmp.gt.f32.partialorder %v1261, 0.0
    %vm1278 = vcmp.gt.f32.partialorder %v1262, 0.0
    %vm1279 = vcmp.gt.f32.partialorder %v1263, 0.0
    %vm1280 = vcmp.gt.f32.partialorder %v1264, 0.0
    %vm1281 = vcmp.gt.f32.partialorder %v1265, 0.0
    %vm1282 = vcmp.gt.f32.partialorder %v1266, 0.0
    %vm1283 = vcmp.gt.f32.partialorder %v1267, 0.0
    %vm1284 = vcmp.gt.f32.partialorder %v1268, 0.0
    %vm1285 = vcmp.gt.f32.partialorder %v1269, 0.0
    %vm1286 = vcmp.gt.f32.partialorder %v1270, 0.0
    %vm1287 = vcmp.gt.f32.partialorder %v1271, 0.0
    %vm1288 = vcmp.gt.f32.partialorder %v1272, 0.0
    %vm1289 = vcmp.gt.f32.partialorder %v1273, 0.0
    %vm1290 = vcmp.gt.f32.partialorder %v1274, 0.0
    %vm1291 = vcmp.gt.f32.partialorder %v1275, 0.0
    %vm1292 = vcmp.gt.f32.partialorder %v1276, 0.0
    %v1293 = vmul.f32 %v1261, 0.2
    %v1294 = vmul.f32 %v1262, 0.2
    %v1295 = vmul.f32 %v1263, 0.2
    %v1296 = vmul.f32 %v1264, 0.2
    %v1297 = vmul.f32 %v1265, 0.2
    %v1298 = vmul.f32 %v1266, 0.2
    %v1299 = vmul.f32 %v1267, 0.2
    %v1300 = vmul.f32 %v1268, 0.2
    %v1301 = vmul.f32 %v1269, 0.2
    %v1302 = vmul.f32 %v1270, 0.2
    %v1303 = vmul.f32 %v1271, 0.2
    %v1304 = vmul.f32 %v1272, 0.2
    %v1305 = vmul.f32 %v1273, 0.2
    %v1306 = vmul.f32 %v1274, 0.2
    %v1307 = vmul.f32 %v1275, 0.2
    %v1308 = vmul.f32 %v1276, 0.2
    %v1309 = vsel %vm1277, %v1261, %v1293
    %v1310 = vsel %vm1278, %v1262, %v1294
    %v1311 = vsel %vm1279, %v1263, %v1295
    %v1312 = vsel %vm1280, %v1264, %v1296
    %v1313 = vsel %vm1281, %v1265, %v1297
    %v1314 = vsel %vm1282, %v1266, %v1298
    %v1315 = vsel %vm1283, %v1267, %v1299
    %v1316 = vsel %vm1284, %v1268, %v1300
    %v1317 = vsel %vm1285, %v1269, %v1301
    %v1318 = vsel %vm1286, %v1270, %v1302
    %v1319 = vsel %vm1287, %v1271, %v1303
    %v1320 = vsel %vm1288, %v1272, %v1304
    %v1321 = vsel %vm1289, %v1273, %v1305
    %v1322 = vsel %vm1290, %v1274, %v1306
    %v1323 = vsel %vm1291, %v1275, %v1307
    %v1324 = vsel %vm1292, %v1276, %v1308
    %v1325 = vlaneseq
    %v1326 = vshrl.u32 %v1325, 7
    %v1327 = vsub.s32 1, %v1326
    %v1328 = vrot.slane %v520, %v1327
    %v1329 = vadd.f32 %v407, %v1328
    %v1330 = vadd.f32 %v412, %v1328
    %v1331 = vadd.f32 %v417, %v1328
    %v1332 = vadd.f32 %v422, %v1328
    %v1333 = vadd.f32 %v427, %v1328
    %v1334 = vadd.f32 %v432, %v1328
    %v1335 = vadd.f32 %v437, %v1328
    %v1336 = vadd.f32 %v442, %v1328
    %v1337 = vadd.f32 %v447, %v1328
    %v1338 = vadd.f32 %v452, %v1328
    %v1339 = vadd.f32 %v457, %v1328
    %v1340 = vadd.f32 %v462, %v1328
    %v1341 = vadd.f32 %v467, %v1328
    %v1342 = vadd.f32 %v472, %v1328
    %v1343 = vadd.f32 %v477, %v1328
    %v1344 = vadd.f32 %v482, %v1328
    %vm1345 = vcmp.gt.f32.partialorder %v1329, 0.0
    %vm1346 = vcmp.gt.f32.partialorder %v1330, 0.0
    %vm1347 = vcmp.gt.f32.partialorder %v1331, 0.0
    %vm1348 = vcmp.gt.f32.partialorder %v1332, 0.0
    %vm1349 = vcmp.gt.f32.partialorder %v1333, 0.0
    %vm1350 = vcmp.gt.f32.partialorder %v1334, 0.0
    %vm1351 = vcmp.gt.f32.partialorder %v1335, 0.0
    %vm1352 = vcmp.gt.f32.partialorder %v1336, 0.0
    %vm1353 = vcmp.gt.f32.partialorder %v1337, 0.0
    %vm1354 = vcmp.gt.f32.partialorder %v1338, 0.0
    %vm1355 = vcmp.gt.f32.partialorder %v1339, 0.0
    %vm1356 = vcmp.gt.f32.partialorder %v1340, 0.0
    %vm1357 = vcmp.gt.f32.partialorder %v1341, 0.0
    %vm1358 = vcmp.gt.f32.partialorder %v1342, 0.0
    %vm1359 = vcmp.gt.f32.partialorder %v1343, 0.0
    %vm1360 = vcmp.gt.f32.partialorder %v1344, 0.0
    %v1361 = vmul.f32 %v1329, 0.2
    %v1362 = vmul.f32 %v1330, 0.2
    %v1363 = vmul.f32 %v1331, 0.2
    %v1364 = vmul.f32 %v1332, 0.2
    %v1365 = vmul.f32 %v1333, 0.2
    %v1366 = vmul.f32 %v1334, 0.2
    %v1367 = vmul.f32 %v1335, 0.2
    %v1368 = vmul.f32 %v1336, 0.2
    %v1369 = vmul.f32 %v1337, 0.2
    %v1370 = vmul.f32 %v1338, 0.2
    %v1371 = vmul.f32 %v1339, 0.2
    %v1372 = vmul.f32 %v1340, 0.2
    %v1373 = vmul.f32 %v1341, 0.2
    %v1374 = vmul.f32 %v1342, 0.2
    %v1375 = vmul.f32 %v1343, 0.2
    %v1376 = vmul.f32 %v1344, 0.2
    %v1377 = vsel %vm1345, %v1329, %v1361
    %v1378 = vsel %vm1346, %v1330, %v1362
    %v1379 = vsel %vm1347, %v1331, %v1363
    %v1380 = vsel %vm1348, %v1332, %v1364
    %v1381 = vsel %vm1349, %v1333, %v1365
    %v1382 = vsel %vm1350, %v1334, %v1366
    %v1383 = vsel %vm1351, %v1335, %v1367
    %v1384 = vsel %vm1352, %v1336, %v1368
    %v1385 = vsel %vm1353, %v1337, %v1369
    %v1386 = vsel %vm1354, %v1338, %v1370
    %v1387 = vsel %vm1355, %v1339, %v1371
    %v1388 = vsel %vm1356, %v1340, %v1372
    %v1389 = vsel %vm1357, %v1341, %v1373
    %v1390 = vsel %vm1358, %v1342, %v1374
    %v1391 = vsel %vm1359, %v1343, %v1375
    %v1392 = vsel %vm1360, %v1344, %v1376
    %1394 = vset.pattern.permute.xlu0 1
    %1395 = vperm.xlu0 %1394, %v1377
    %v1396 = vpop.permute.xlu0 %1395
    %1399 = vset.pattern.permute.xlu0 1
    %1400 = vperm.xlu0 %1399, %v1378
    %v1401 = vpop.permute.xlu0 %1400
    %1404 = vset.pattern.permute.xlu0 1
    %1405 = vperm.xlu0 %1404, %v1379
    %v1406 = vpop.permute.xlu0 %1405
    %1409 = vset.pattern.permute.xlu0 1
    %1410 = vperm.xlu0 %1409, %v1380
    %v1411 = vpop.permute.xlu0 %1410
    %1414 = vset.pattern.permute.xlu0 1
    %1415 = vperm.xlu0 %1414, %v1381
    %v1416 = vpop.permute.xlu0 %1415
    %1419 = vset.pattern.permute.xlu0 1
    %1420 = vperm.xlu0 %1419, %v1382
    %v1421 = vpop.permute.xlu0 %1420
    %1424 = vset.pattern.permute.xlu0 1
    %1425 = vperm.xlu0 %1424, %v1383
    %v1426 = vpop.permute.xlu0 %1425
    %1429 = vset.pattern.permute.xlu0 1
    %1430 = vperm.xlu0 %1429, %v1384
    %v1431 = vpop.permute.xlu0 %1430
    %1434 = vset.pattern.permute.xlu0 1
    %1435 = vperm.xlu0 %1434, %v1385
    %v1436 = vpop.permute.xlu0 %1435
    %1439 = vset.pattern.permute.xlu0 1
    %1440 = vperm.xlu0 %1439, %v1386
    %v1441 = vpop.permute.xlu0 %1440
    %1444 = vset.pattern.permute.xlu0 1
    %1445 = vperm.xlu0 %1444, %v1387
    %v1446 = vpop.permute.xlu0 %1445
    %1449 = vset.pattern.permute.xlu0 1
    %1450 = vperm.xlu0 %1449, %v1388
    %v1451 = vpop.permute.xlu0 %1450
    %1454 = vset.pattern.permute.xlu0 1
    %1455 = vperm.xlu0 %1454, %v1389
    %v1456 = vpop.permute.xlu0 %1455
    %1459 = vset.pattern.permute.xlu0 1
    %1460 = vperm.xlu0 %1459, %v1390
    %v1461 = vpop.permute.xlu0 %1460
    %1464 = vset.pattern.permute.xlu0 1
    %1465 = vperm.xlu0 %1464, %v1391
    %v1466 = vpop.permute.xlu0 %1465
    %1469 = vset.pattern.permute.xlu0 1
    %1470 = vperm.xlu0 %1469, %v1392
    %v1471 = vpop.permute.xlu0 %1470
    %v1473 = vsub.f32 %v1309, %v1396
    %v1474 = vsub.f32 %v1310, %v1401
    %v1475 = vsub.f32 %v1311, %v1406
    %v1476 = vsub.f32 %v1312, %v1411
    %v1477 = vsub.f32 %v1313, %v1416
    %v1478 = vsub.f32 %v1314, %v1421
    %v1479 = vsub.f32 %v1315, %v1426
    %v1480 = vsub.f32 %v1316, %v1431
    %v1481 = vsub.f32 %v1317, %v1436
    %v1482 = vsub.f32 %v1318, %v1441
    %v1483 = vsub.f32 %v1319, %v1446
    %v1484 = vsub.f32 %v1320, %v1451
    %v1485 = vsub.f32 %v1321, %v1456
    %v1486 = vsub.f32 %v1322, %v1461
    %v1487 = vsub.f32 %v1323, %v1466
    %v1488 = vsub.f32 %v1324, %v1471
    %v1489 = vsel %vm867, %v1473, -1e+30
    %v1490 = vsel %vm868, %v1474, -1e+30
    %v1491 = vsel %vm869, %v1475, -1e+30
    %v1492 = vsel %vm870, %v1476, -1e+30
    %v1493 = vsel %vm871, %v1477, -1e+30
    %v1494 = vsel %vm872, %v1478, -1e+30
    %v1495 = vsel %vm873, %v1479, -1e+30
    %v1496 = vsel %vm874, %v1480, -1e+30
    %v1497 = vsel %vm875, %v1481, -1e+30
    %v1498 = vsel %vm876, %v1482, -1e+30
    %v1499 = vsel %vm877, %v1483, -1e+30
    %v1500 = vsel %vm878, %v1484, -1e+30
    %v1501 = vsel %vm879, %v1485, -1e+30
    %v1502 = vsel %vm880, %v1486, -1e+30
    %v1503 = vsel %vm881, %v1487, -1e+30
    %v1504 = vsel %vm882, %v1488, -1e+30
    %v1505 = vmul.f32 %v1489, 1.442695
    %v1506 = vpow.pop %v1505
    %v1507 = vmul.f32 %v1490, 1.442695
    %v1508 = vpow.pop %v1507
    %v1509 = vmul.f32 %v1491, 1.442695
    %v1510 = vpow.pop %v1509
    %v1511 = vmul.f32 %v1492, 1.442695
    %v1512 = vpow.pop %v1511
    %v1513 = vmul.f32 %v1493, 1.442695
    %v1514 = vpow.pop %v1513
    %v1515 = vmul.f32 %v1494, 1.442695
    %v1516 = vpow.pop %v1515
    %v1517 = vmul.f32 %v1495, 1.442695
    %v1518 = vpow.pop %v1517
    %v1519 = vmul.f32 %v1496, 1.442695
    %v1520 = vpow.pop %v1519
    %v1521 = vmul.f32 %v1497, 1.442695
    %v1522 = vpow.pop %v1521
    %v1523 = vmul.f32 %v1498, 1.442695
    %v1524 = vpow.pop %v1523
    %v1525 = vmul.f32 %v1499, 1.442695
    %v1526 = vpow.pop %v1525
    %v1527 = vmul.f32 %v1500, 1.442695
    %v1528 = vpow.pop %v1527
    %v1529 = vmul.f32 %v1501, 1.442695
    %v1530 = vpow.pop %v1529
    %v1531 = vmul.f32 %v1502, 1.442695
    %v1532 = vpow.pop %v1531
    %v1533 = vmul.f32 %v1503, 1.442695
    %v1534 = vpow.pop %v1533
    %v1535 = vmul.f32 %v1504, 1.442695
    %v1536 = vpow.pop %v1535
    %1537 = vadd.xlane.f32.xlu0 %v1506
    %v1538 = vpop.xlane.xlu0 %1537
    %1539 = vadd.xlane.f32.xlu0 %v1508
    %v1540 = vpop.xlane.xlu0 %1539
    %1541 = vadd.xlane.f32.xlu0 %v1510
    %v1542 = vpop.xlane.xlu0 %1541
    %1543 = vadd.xlane.f32.xlu0 %v1512
    %v1544 = vpop.xlane.xlu0 %1543
    %1545 = vadd.xlane.f32.xlu0 %v1514
    %v1546 = vpop.xlane.xlu0 %1545
    %1547 = vadd.xlane.f32.xlu0 %v1516
    %v1548 = vpop.xlane.xlu0 %1547
    %1549 = vadd.xlane.f32.xlu0 %v1518
    %v1550 = vpop.xlane.xlu0 %1549
    %1551 = vadd.xlane.f32.xlu0 %v1520
    %v1552 = vpop.xlane.xlu0 %1551
    %1553 = vadd.xlane.f32.xlu0 %v1522
    %v1554 = vpop.xlane.xlu0 %1553
    %1555 = vadd.xlane.f32.xlu0 %v1524
    %v1556 = vpop.xlane.xlu0 %1555
    %1557 = vadd.xlane.f32.xlu0 %v1526
    %v1558 = vpop.xlane.xlu0 %1557
    %1559 = vadd.xlane.f32.xlu0 %v1528
    %v1560 = vpop.xlane.xlu0 %1559
    %1561 = vadd.xlane.f32.xlu0 %v1530
    %v1562 = vpop.xlane.xlu0 %1561
    %1563 = vadd.xlane.f32.xlu0 %v1532
    %v1564 = vpop.xlane.xlu0 %1563
    %1565 = vadd.xlane.f32.xlu0 %v1534
    %v1566 = vpop.xlane.xlu0 %1565
    %1567 = vadd.xlane.f32.xlu0 %v1536
    %v1568 = vpop.xlane.xlu0 %1567
    %v1569 = vmax.f32 %v1538, 1e-30
    %v1570 = vmax.f32 %v1540, 1e-30
    %v1571 = vmax.f32 %v1542, 1e-30
    %v1572 = vmax.f32 %v1544, 1e-30
    %v1573 = vmax.f32 %v1546, 1e-30
    %v1574 = vmax.f32 %v1548, 1e-30
    %v1575 = vmax.f32 %v1550, 1e-30
    %v1576 = vmax.f32 %v1552, 1e-30
    %v1577 = vmax.f32 %v1554, 1e-30
    %v1578 = vmax.f32 %v1556, 1e-30
    %v1579 = vmax.f32 %v1558, 1e-30
    %v1580 = vmax.f32 %v1560, 1e-30
    %v1581 = vmax.f32 %v1562, 1e-30
    %v1582 = vmax.f32 %v1564, 1e-30
    %v1583 = vmax.f32 %v1566, 1e-30
    %v1584 = vmax.f32 %v1568, 1e-30
    %v1585 = vrcp.pop %v1569
    %v1586 = vrcp.pop %v1570
    %v1587 = vrcp.pop %v1571
    %v1588 = vrcp.pop %v1572
    %v1589 = vrcp.pop %v1573
    %v1590 = vrcp.pop %v1574
    %v1591 = vrcp.pop %v1575
    %v1592 = vrcp.pop %v1576
    %v1593 = vrcp.pop %v1577
    %v1594 = vrcp.pop %v1578
    %v1595 = vrcp.pop %v1579
    %v1596 = vrcp.pop %v1580
    %v1597 = vrcp.pop %v1581
    %v1598 = vrcp.pop %v1582
    %v1599 = vrcp.pop %v1583
    %v1600 = vrcp.pop %v1584
    %vm1601 = vcmp.ge.s32.totalorder %v522, 4
    %vm1602 = vcmp.lt.s32.totalorder %v522, 8
    %vm1603 = vmand %vm1601, %vm1602
    %v1604 = vsel %vm1603, 1, 0
    %vm1605 = vcmp.eq.s32.totalorder %v1604, 1
    %v1606 = vsel %vm1605, %v246, 0.0
    %v1607 = vsel %vm1605, %v252, 0.0
    %v1608 = vsel %vm1605, %v258, 0.0
    %v1609 = vsel %vm1605, %v264, 0.0
    %v1610 = vsel %vm1605, %v270, 0.0
    %v1611 = vsel %vm1605, %v276, 0.0
    %v1612 = vsel %vm1605, %v282, 0.0
    %v1613 = vsel %vm1605, %v288, 0.0
    %v1614 = vsel %vm1605, %v294, 0.0
    %v1615 = vsel %vm1605, %v300, 0.0
    %v1616 = vsel %vm1605, %v306, 0.0
    %v1617 = vsel %vm1605, %v312, 0.0
    %v1618 = vsel %vm1605, %v318, 0.0
    %v1619 = vsel %vm1605, %v324, 0.0
    %v1620 = vsel %vm1605, %v330, 0.0
    %v1621 = vsel %vm1605, %v336, 0.0
    %1622 = vmatprep.subr.mxu0 0.0
    %1623 = vmatpush1.msra.mxu0 %v1606
    %1624 = vmatprep.subr.mxu0 0.0
    %1625 = vmatpush1.msra.mxu0 %v1607
    %1626 = vmatprep.subr.mxu0 0.0
    %1627 = vmatpush1.msra.mxu0 %v1608
    %1628 = vmatprep.subr.mxu0 0.0
    %1629 = vmatpush1.msra.mxu0 %v1609
    %1630 = vmatprep.subr.mxu0 0.0
    %1631 = vmatpush1.msra.mxu0 %v1610
    %1632 = vmatprep.subr.mxu0 0.0
    %1633 = vmatpush1.msra.mxu0 %v1611
    %1634 = vmatprep.subr.mxu0 0.0
    %1635 = vmatpush1.msra.mxu0 %v1612
    %1636 = vmatprep.subr.mxu0 0.0
    %1637 = vmatpush1.msra.mxu0 %v1613
    %1638 = vmatprep.subr.mxu0 0.0
    %1639 = vmatpush1.msra.mxu0 %v1614
    %1640 = vmatprep.subr.mxu0 0.0
    %1641 = vmatpush1.msra.mxu0 %v1615
    %1642 = vmatprep.subr.mxu0 0.0
    %1643 = vmatpush1.msra.mxu0 %v1616
    %1644 = vmatprep.subr.mxu0 0.0
    %1645 = vmatpush1.msra.mxu0 %v1617
    %1646 = vmatprep.subr.mxu0 0.0
    %1647 = vmatpush1.msra.mxu0 %v1618
    %1648 = vmatprep.subr.mxu0 0.0
    %1649 = vmatpush1.msra.mxu0 %v1619
    %1650 = vmatprep.subr.mxu0 0.0
    %1651 = vmatpush1.msra.mxu0 %v1620
    %1652 = vmatprep.subr.mxu0 0.0
    %1653 = vmatpush1.msra.mxu0 %v1621
    %1654 = vmatprep.subr.mxu0 0.0
    %1655 = vmatpush1.msra.mxu0 0.0
    %1656 = vmatprep.subr.mxu0 0.0
    %1657 = vmatpush1.msra.mxu0 0.0
    %1658 = vmatprep.subr.mxu0 0.0
    %1659 = vmatpush1.msra.mxu0 0.0
    %1660 = vmatprep.subr.mxu0 0.0
    %1661 = vmatpush1.msra.mxu0 0.0
    %1662 = vmatprep.subr.mxu0 0.0
    %1663 = vmatpush1.msra.mxu0 0.0
    %1664 = vmatprep.subr.mxu0 0.0
    %1665 = vmatpush1.msra.mxu0 0.0
    %1666 = vmatprep.subr.mxu0 0.0
    %1667 = vmatpush1.msra.mxu0 0.0
    %1668 = vmatprep.subr.mxu0 0.0
    %1669 = vmatpush1.msra.mxu0 0.0
    %1670 = vmatprep.subr.mxu0 0.0
    %1671 = vmatpush1.msra.mxu0 0.0
    %1672 = vmatprep.subr.mxu0 0.0
    %1673 = vmatpush1.msra.mxu0 0.0
    %1674 = vmatprep.subr.mxu0 0.0
    %1675 = vmatpush1.msra.mxu0 0.0
    %1676 = vmatprep.subr.mxu0 0.0
    %1677 = vmatpush1.msra.mxu0 0.0
    %1678 = vmatprep.subr.mxu0 0.0
    %1679 = vmatpush1.msra.mxu0 0.0
    %1680 = vmatprep.subr.mxu0 0.0
    %1681 = vmatpush1.msra.mxu0 0.0
    %1682 = vmatprep.subr.mxu0 0.0
    %1683 = vmatpush1.msra.mxu0 0.0
    %1684 = vmatprep.subr.mxu0 0.0
    %1685 = vmatpush1.msra.mxu0 0.0
    %1686 = vmatprep.mubr.f32.mxu0 0.0
    %1687 = vmatmul.mubr.f32.gmra.mrb[0].mxu0 %v1506
    %v1688 = vpop.f32.mrb[0].mxu0
    %v1689 = vadd.f32 0.0, %v1688
    %v1690 = vpop.f32.mrb[0].mxu0
    %1691 = vmatprep.mubr.f32.mxu0 0.0
    %1692 = vmatmul.mubr.f32.gmra.mrb[0].mxu0 %v1508
    %v1693 = vpop.f32.mrb[0].mxu0
    %v1694 = vadd.f32 0.0, %v1693
    %v1695 = vpop.f32.mrb[0].mxu0
    %1696 = vmatprep.mubr.f32.mxu0 0.0
    %1697 = vmatmul.mubr.f32.gmra.mrb[0].mxu0 %v1510
    %v1698 = vpop.f32.mrb[0].mxu0
    %v1699 = vadd.f32 0.0, %v1698
    %v1700 = vpop.f32.mrb[0].mxu0
    %1701 = vmatprep.mubr.f32.mxu0 0.0
    %1702 = vmatmul.mubr.f32.gmra.mrb[0].mxu0 %v1512
    %v1703 = vpop.f32.mrb[0].mxu0
    %v1704 = vadd.f32 0.0, %v1703
    %v1705 = vpop.f32.mrb[0].mxu0
    %1706 = vmatprep.mubr.f32.mxu0 0.0
    %1707 = vmatmul.mubr.f32.gmra.mrb[0].mxu0 %v1514
    %v1708 = vpop.f32.mrb[0].mxu0
    %v1709 = vadd.f32 0.0, %v1708
    %v1710 = vpop.f32.mrb[0].mxu0
    %1711 = vmatprep.mubr.f32.mxu0 0.0
    %1712 = vmatmul.mubr.f32.gmra.mrb[0].mxu0 %v1516
    %v1713 = vpop.f32.mrb[0].mxu0
    %v1714 = vadd.f32 0.0, %v1713
    %v1715 = vpop.f32.mrb[0].mxu0
    %1716 = vmatprep.mubr.f32.mxu0 0.0
    %1717 = vmatmul.mubr.f32.gmra.mrb[0].mxu0 %v1518
    %v1718 = vpop.f32.mrb[0].mxu0
    %v1719 = vadd.f32 0.0, %v1718
    %v1720 = vpop.f32.mrb[0].mxu0
    %1721 = vmatprep.mubr.f32.mxu0 0.0
    %1722 = vmatmul.mubr.f32.gmra.mrb[0].mxu0 %v1520
    %v1723 = vpop.f32.mrb[0].mxu0
    %v1724 = vadd.f32 0.0, %v1723
    %v1725 = vpop.f32.mrb[0].mxu0
    %1726 = vmatprep.mubr.f32.mxu0 0.0
    %1727 = vmatmul.mubr.f32.gmra.mrb[0].mxu0 %v1522
    %v1728 = vpop.f32.mrb[0].mxu0
    %v1729 = vadd.f32 0.0, %v1728
    %v1730 = vpop.f32.mrb[0].mxu0
    %1731 = vmatprep.mubr.f32.mxu0 0.0
    %1732 = vmatmul.mubr.f32.gmra.mrb[0].mxu0 %v1524
    %v1733 = vpop.f32.mrb[0].mxu0
    %v1734 = vadd.f32 0.0, %v1733
    %v1735 = vpop.f32.mrb[0].mxu0
    %1736 = vmatprep.mubr.f32.mxu0 0.0
    %1737 = vmatmul.mubr.f32.gmra.mrb[0].mxu0 %v1526
    %v1738 = vpop.f32.mrb[0].mxu0
    %v1739 = vadd.f32 0.0, %v1738
    %v1740 = vpop.f32.mrb[0].mxu0
    %1741 = vmatprep.mubr.f32.mxu0 0.0
    %1742 = vmatmul.mubr.f32.gmra.mrb[0].mxu0 %v1528
    %v1743 = vpop.f32.mrb[0].mxu0
    %v1744 = vadd.f32 0.0, %v1743
    %v1745 = vpop.f32.mrb[0].mxu0
    %1746 = vmatprep.mubr.f32.mxu0 0.0
    %1747 = vmatmul.mubr.f32.gmra.mrb[0].mxu0 %v1530
    %v1748 = vpop.f32.mrb[0].mxu0
    %v1749 = vadd.f32 0.0, %v1748
    %v1750 = vpop.f32.mrb[0].mxu0
    %1751 = vmatprep.mubr.f32.mxu0 0.0
    %1752 = vmatmul.mubr.f32.gmra.mrb[0].mxu0 %v1532
    %v1753 = vpop.f32.mrb[0].mxu0
    %v1754 = vadd.f32 0.0, %v1753
    %v1755 = vpop.f32.mrb[0].mxu0
    %1756 = vmatprep.mubr.f32.mxu0 0.0
    %1757 = vmatmul.mubr.f32.gmra.mrb[0].mxu0 %v1534
    %v1758 = vpop.f32.mrb[0].mxu0
    %v1759 = vadd.f32 0.0, %v1758
    %v1760 = vpop.f32.mrb[0].mxu0
    %1761 = vmatprep.mubr.f32.mxu0 0.0
    %1762 = vmatmul.mubr.f32.gmra.mrb[0].mxu0 %v1536
    %v1763 = vpop.f32.mrb[0].mxu0
    %v1764 = vadd.f32 0.0, %v1763
    %v1765 = vpop.f32.mrb[0].mxu0
    %1766 = vdwg.mxu0
    %v1767 = vmul.f32 %v1689, %v1585
    %v1768 = vmul.f32 %v1694, %v1586
    %v1769 = vmul.f32 %v1699, %v1587
    %v1770 = vmul.f32 %v1704, %v1588
    %v1771 = vmul.f32 %v1709, %v1589
    %v1772 = vmul.f32 %v1714, %v1590
    %v1773 = vmul.f32 %v1719, %v1591
    %v1774 = vmul.f32 %v1724, %v1592
    %v1775 = vmul.f32 %v1729, %v1593
    %v1776 = vmul.f32 %v1734, %v1594
    %v1777 = vmul.f32 %v1739, %v1595
    %v1778 = vmul.f32 %v1744, %v1596
    %v1779 = vmul.f32 %v1749, %v1597
    %v1780 = vmul.f32 %v1754, %v1598
    %v1781 = vmul.f32 %v1759, %v1599
    %v1782 = vmul.f32 %v1764, %v1600
    %v1783 = vadd.f32 %v1177, %v1767
    %v1784 = vadd.f32 %v1178, %v1768
    %v1785 = vadd.f32 %v1179, %v1769
    %v1786 = vadd.f32 %v1180, %v1770
    %v1787 = vadd.f32 %v1181, %v1771
    %v1788 = vadd.f32 %v1182, %v1772
    %v1789 = vadd.f32 %v1183, %v1773
    %v1790 = vadd.f32 %v1184, %v1774
    %v1791 = vadd.f32 %v1185, %v1775
    %v1792 = vadd.f32 %v1186, %v1776
    %v1793 = vadd.f32 %v1187, %v1777
    %v1794 = vadd.f32 %v1188, %v1778
    %v1795 = vadd.f32 %v1189, %v1779
    %v1796 = vadd.f32 %v1190, %v1780
    %v1797 = vadd.f32 %v1191, %v1781
    %v1798 = vadd.f32 %v1192, %v1782
    %1799 = vset.pattern.permute.xlu0 2
    %1800 = vperm.xlu0 %1799, %v407
    %v1801 = vpop.permute.xlu0 %1800
    %1803 = vset.pattern.permute.xlu0 2
    %1804 = vperm.xlu0 %1803, %v412
    %v1805 = vpop.permute.xlu0 %1804
    %1807 = vset.pattern.permute.xlu0 2
    %1808 = vperm.xlu0 %1807, %v417
    %v1809 = vpop.permute.xlu0 %1808
    %1811 = vset.pattern.permute.xlu0 2
    %1812 = vperm.xlu0 %1811, %v422
    %v1813 = vpop.permute.xlu0 %1812
    %1815 = vset.pattern.permute.xlu0 2
    %1816 = vperm.xlu0 %1815, %v427
    %v1817 = vpop.permute.xlu0 %1816
    %1819 = vset.pattern.permute.xlu0 2
    %1820 = vperm.xlu0 %1819, %v432
    %v1821 = vpop.permute.xlu0 %1820
    %1823 = vset.pattern.permute.xlu0 2
    %1824 = vperm.xlu0 %1823, %v437
    %v1825 = vpop.permute.xlu0 %1824
    %1827 = vset.pattern.permute.xlu0 2
    %1828 = vperm.xlu0 %1827, %v442
    %v1829 = vpop.permute.xlu0 %1828
    %1831 = vset.pattern.permute.xlu0 2
    %1832 = vperm.xlu0 %1831, %v447
    %v1833 = vpop.permute.xlu0 %1832
    %1835 = vset.pattern.permute.xlu0 2
    %1836 = vperm.xlu0 %1835, %v452
    %v1837 = vpop.permute.xlu0 %1836
    %1839 = vset.pattern.permute.xlu0 2
    %1840 = vperm.xlu0 %1839, %v457
    %v1841 = vpop.permute.xlu0 %1840
    %1843 = vset.pattern.permute.xlu0 2
    %1844 = vperm.xlu0 %1843, %v462
    %v1845 = vpop.permute.xlu0 %1844
    %1847 = vset.pattern.permute.xlu0 2
    %1848 = vperm.xlu0 %1847, %v467
    %v1849 = vpop.permute.xlu0 %1848
    %1851 = vset.pattern.permute.xlu0 2
    %1852 = vperm.xlu0 %1851, %v472
    %v1853 = vpop.permute.xlu0 %1852
    %1855 = vset.pattern.permute.xlu0 2
    %1856 = vperm.xlu0 %1855, %v477
    %v1857 = vpop.permute.xlu0 %1856
    %1859 = vset.pattern.permute.xlu0 2
    %1860 = vperm.xlu0 %1859, %v482
    %v1861 = vpop.permute.xlu0 %1860
    %v1863 = vlaneseq
    %v1864 = vshrl.u32 %v1863, 7
    %v1865 = vsub.s32 2, %v1864
    %v1866 = vrot.slane %v501, %v1865
    %v1867 = vadd.f32 %v1801, %v1866
    %v1868 = vadd.f32 %v1805, %v1866
    %v1869 = vadd.f32 %v1809, %v1866
    %v1870 = vadd.f32 %v1813, %v1866
    %v1871 = vadd.f32 %v1817, %v1866
    %v1872 = vadd.f32 %v1821, %v1866
    %v1873 = vadd.f32 %v1825, %v1866
    %v1874 = vadd.f32 %v1829, %v1866
    %v1875 = vadd.f32 %v1833, %v1866
    %v1876 = vadd.f32 %v1837, %v1866
    %v1877 = vadd.f32 %v1841, %v1866
    %v1878 = vadd.f32 %v1845, %v1866
    %v1879 = vadd.f32 %v1849, %v1866
    %v1880 = vadd.f32 %v1853, %v1866
    %v1881 = vadd.f32 %v1857, %v1866
    %v1882 = vadd.f32 %v1861, %v1866
    %vm1883 = vcmp.gt.f32.partialorder %v1867, 0.0
    %vm1884 = vcmp.gt.f32.partialorder %v1868, 0.0
    %vm1885 = vcmp.gt.f32.partialorder %v1869, 0.0
    %vm1886 = vcmp.gt.f32.partialorder %v1870, 0.0
    %vm1887 = vcmp.gt.f32.partialorder %v1871, 0.0
    %vm1888 = vcmp.gt.f32.partialorder %v1872, 0.0
    %vm1889 = vcmp.gt.f32.partialorder %v1873, 0.0
    %vm1890 = vcmp.gt.f32.partialorder %v1874, 0.0
    %vm1891 = vcmp.gt.f32.partialorder %v1875, 0.0
    %vm1892 = vcmp.gt.f32.partialorder %v1876, 0.0
    %vm1893 = vcmp.gt.f32.partialorder %v1877, 0.0
    %vm1894 = vcmp.gt.f32.partialorder %v1878, 0.0
    %vm1895 = vcmp.gt.f32.partialorder %v1879, 0.0
    %vm1896 = vcmp.gt.f32.partialorder %v1880, 0.0
    %vm1897 = vcmp.gt.f32.partialorder %v1881, 0.0
    %vm1898 = vcmp.gt.f32.partialorder %v1882, 0.0
    %v1899 = vmul.f32 %v1867, 0.2
    %v1900 = vmul.f32 %v1868, 0.2
    %v1901 = vmul.f32 %v1869, 0.2
    %v1902 = vmul.f32 %v1870, 0.2
    %v1903 = vmul.f32 %v1871, 0.2
    %v1904 = vmul.f32 %v1872, 0.2
    %v1905 = vmul.f32 %v1873, 0.2
    %v1906 = vmul.f32 %v1874, 0.2
    %v1907 = vmul.f32 %v1875, 0.2
    %v1908 = vmul.f32 %v1876, 0.2
    %v1909 = vmul.f32 %v1877, 0.2
    %v1910 = vmul.f32 %v1878, 0.2
    %v1911 = vmul.f32 %v1879, 0.2
    %v1912 = vmul.f32 %v1880, 0.2
    %v1913 = vmul.f32 %v1881, 0.2
    %v1914 = vmul.f32 %v1882, 0.2
    %v1915 = vsel %vm1883, %v1867, %v1899
    %v1916 = vsel %vm1884, %v1868, %v1900
    %v1917 = vsel %vm1885, %v1869, %v1901
    %v1918 = vsel %vm1886, %v1870, %v1902
    %v1919 = vsel %vm1887, %v1871, %v1903
    %v1920 = vsel %vm1888, %v1872, %v1904
    %v1921 = vsel %vm1889, %v1873, %v1905
    %v1922 = vsel %vm1890, %v1874, %v1906
    %v1923 = vsel %vm1891, %v1875, %v1907
    %v1924 = vsel %vm1892, %v1876, %v1908
    %v1925 = vsel %vm1893, %v1877, %v1909
    %v1926 = vsel %vm1894, %v1878, %v1910
    %v1927 = vsel %vm1895, %v1879, %v1911
    %v1928 = vsel %vm1896, %v1880, %v1912
    %v1929 = vsel %vm1897, %v1881, %v1913
    %v1930 = vsel %vm1898, %v1882, %v1914
    %v1931 = vlaneseq
    %v1932 = vshrl.u32 %v1931, 7
    %v1933 = vsub.s32 2, %v1932
    %v1934 = vrot.slane %v520, %v1933
    %v1935 = vadd.f32 %v407, %v1934
    %v1936 = vadd.f32 %v412, %v1934
    %v1937 = vadd.f32 %v417, %v1934
    %v1938 = vadd.f32 %v422, %v1934
    %v1939 = vadd.f32 %v427, %v1934
    %v1940 = vadd.f32 %v432, %v1934
    %v1941 = vadd.f32 %v437, %v1934
    %v1942 = vadd.f32 %v442, %v1934
    %v1943 = vadd.f32 %v447, %v1934
    %v1944 = vadd.f32 %v452, %v1934
    %v1945 = vadd.f32 %v457, %v1934
    %v1946 = vadd.f32 %v462, %v1934
    %v1947 = vadd.f32 %v467, %v1934
    %v1948 = vadd.f32 %v472, %v1934
    %v1949 = vadd.f32 %v477, %v1934
    %v1950 = vadd.f32 %v482, %v1934
    %vm1951 = vcmp.gt.f32.partialorder %v1935, 0.0
    %vm1952 = vcmp.gt.f32.partialorder %v1936, 0.0
    %vm1953 = vcmp.gt.f32.partialorder %v1937, 0.0
    %vm1954 = vcmp.gt.f32.partialorder %v1938, 0.0
    %vm1955 = vcmp.gt.f32.partialorder %v1939, 0.0
    %vm1956 = vcmp.gt.f32.partialorder %v1940, 0.0
    %vm1957 = vcmp.gt.f32.partialorder %v1941, 0.0
    %vm1958 = vcmp.gt.f32.partialorder %v1942, 0.0
    %vm1959 = vcmp.gt.f32.partialorder %v1943, 0.0
    %vm1960 = vcmp.gt.f32.partialorder %v1944, 0.0
    %vm1961 = vcmp.gt.f32.partialorder %v1945, 0.0
    %vm1962 = vcmp.gt.f32.partialorder %v1946, 0.0
    %vm1963 = vcmp.gt.f32.partialorder %v1947, 0.0
    %vm1964 = vcmp.gt.f32.partialorder %v1948, 0.0
    %vm1965 = vcmp.gt.f32.partialorder %v1949, 0.0
    %vm1966 = vcmp.gt.f32.partialorder %v1950, 0.0
    %v1967 = vmul.f32 %v1935, 0.2
    %v1968 = vmul.f32 %v1936, 0.2
    %v1969 = vmul.f32 %v1937, 0.2
    %v1970 = vmul.f32 %v1938, 0.2
    %v1971 = vmul.f32 %v1939, 0.2
    %v1972 = vmul.f32 %v1940, 0.2
    %v1973 = vmul.f32 %v1941, 0.2
    %v1974 = vmul.f32 %v1942, 0.2
    %v1975 = vmul.f32 %v1943, 0.2
    %v1976 = vmul.f32 %v1944, 0.2
    %v1977 = vmul.f32 %v1945, 0.2
    %v1978 = vmul.f32 %v1946, 0.2
    %v1979 = vmul.f32 %v1947, 0.2
    %v1980 = vmul.f32 %v1948, 0.2
    %v1981 = vmul.f32 %v1949, 0.2
    %v1982 = vmul.f32 %v1950, 0.2
    %v1983 = vsel %vm1951, %v1935, %v1967
    %v1984 = vsel %vm1952, %v1936, %v1968
    %v1985 = vsel %vm1953, %v1937, %v1969
    %v1986 = vsel %vm1954, %v1938, %v1970
    %v1987 = vsel %vm1955, %v1939, %v1971
    %v1988 = vsel %vm1956, %v1940, %v1972
    %v1989 = vsel %vm1957, %v1941, %v1973
    %v1990 = vsel %vm1958, %v1942, %v1974
    %v1991 = vsel %vm1959, %v1943, %v1975
    %v1992 = vsel %vm1960, %v1944, %v1976
    %v1993 = vsel %vm1961, %v1945, %v1977
    %v1994 = vsel %vm1962, %v1946, %v1978
    %v1995 = vsel %vm1963, %v1947, %v1979
    %v1996 = vsel %vm1964, %v1948, %v1980
    %v1997 = vsel %vm1965, %v1949, %v1981
    %v1998 = vsel %vm1966, %v1950, %v1982
    %2000 = vset.pattern.permute.xlu0 2
    %2001 = vperm.xlu0 %2000, %v1983
    %v2002 = vpop.permute.xlu0 %2001
    %2005 = vset.pattern.permute.xlu0 2
    %2006 = vperm.xlu0 %2005, %v1984
    %v2007 = vpop.permute.xlu0 %2006
    %2010 = vset.pattern.permute.xlu0 2
    %2011 = vperm.xlu0 %2010, %v1985
    %v2012 = vpop.permute.xlu0 %2011
    %2015 = vset.pattern.permute.xlu0 2
    %2016 = vperm.xlu0 %2015, %v1986
    %v2017 = vpop.permute.xlu0 %2016
    %2020 = vset.pattern.permute.xlu0 2
    %2021 = vperm.xlu0 %2020, %v1987
    %v2022 = vpop.permute.xlu0 %2021
    %2025 = vset.pattern.permute.xlu0 2
    %2026 = vperm.xlu0 %2025, %v1988
    %v2027 = vpop.permute.xlu0 %2026
    %2030 = vset.pattern.permute.xlu0 2
    %2031 = vperm.xlu0 %2030, %v1989
    %v2032 = vpop.permute.xlu0 %2031
    %2035 = vset.pattern.permute.xlu0 2
    %2036 = vperm.xlu0 %2035, %v1990
    %v2037 = vpop.permute.xlu0 %2036
    %2040 = vset.pattern.permute.xlu0 2
    %2041 = vperm.xlu0 %2040, %v1991
    %v2042 = vpop.permute.xlu0 %2041
    %2045 = vset.pattern.permute.xlu0 2
    %2046 = vperm.xlu0 %2045, %v1992
    %v2047 = vpop.permute.xlu0 %2046
    %2050 = vset.pattern.permute.xlu0 2
    %2051 = vperm.xlu0 %2050, %v1993
    %v2052 = vpop.permute.xlu0 %2051
    %2055 = vset.pattern.permute.xlu0 2
    %2056 = vperm.xlu0 %2055, %v1994
    %v2057 = vpop.permute.xlu0 %2056
    %2060 = vset.pattern.permute.xlu0 2
    %2061 = vperm.xlu0 %2060, %v1995
    %v2062 = vpop.permute.xlu0 %2061
    %2065 = vset.pattern.permute.xlu0 2
    %2066 = vperm.xlu0 %2065, %v1996
    %v2067 = vpop.permute.xlu0 %2066
    %2070 = vset.pattern.permute.xlu0 2
    %2071 = vperm.xlu0 %2070, %v1997
    %v2072 = vpop.permute.xlu0 %2071
    %2075 = vset.pattern.permute.xlu0 2
    %2076 = vperm.xlu0 %2075, %v1998
    %v2077 = vpop.permute.xlu0 %2076
    %v2079 = vsub.f32 %v1915, %v2002
    %v2080 = vsub.f32 %v1916, %v2007
    %v2081 = vsub.f32 %v1917, %v2012
    %v2082 = vsub.f32 %v1918, %v2017
    %v2083 = vsub.f32 %v1919, %v2022
    %v2084 = vsub.f32 %v1920, %v2027
    %v2085 = vsub.f32 %v1921, %v2032
    %v2086 = vsub.f32 %v1922, %v2037
    %v2087 = vsub.f32 %v1923, %v2042
    %v2088 = vsub.f32 %v1924, %v2047
    %v2089 = vsub.f32 %v1925, %v2052
    %v2090 = vsub.f32 %v1926, %v2057
    %v2091 = vsub.f32 %v1927, %v2062
    %v2092 = vsub.f32 %v1928, %v2067
    %v2093 = vsub.f32 %v1929, %v2072
    %v2094 = vsub.f32 %v1930, %v2077
    %v2095 = vsel %vm867, %v2079, -1e+30
    %v2096 = vsel %vm868, %v2080, -1e+30
    %v2097 = vsel %vm869, %v2081, -1e+30
    %v2098 = vsel %vm870, %v2082, -1e+30
    %v2099 = vsel %vm871, %v2083, -1e+30
    %v2100 = vsel %vm872, %v2084, -1e+30
    %v2101 = vsel %vm873, %v2085, -1e+30
    %v2102 = vsel %vm874, %v2086, -1e+30
    %v2103 = vsel %vm875, %v2087, -1e+30
    %v2104 = vsel %vm876, %v2088, -1e+30
    %v2105 = vsel %vm877, %v2089, -1e+30
    %v2106 = vsel %vm878, %v2090, -1e+30
    %v2107 = vsel %vm879, %v2091, -1e+30
    %v2108 = vsel %vm880, %v2092, -1e+30
    %v2109 = vsel %vm881, %v2093, -1e+30
    %v2110 = vsel %vm882, %v2094, -1e+30
    %v2111 = vmul.f32 %v2095, 1.442695
    %v2112 = vpow.pop %v2111
    %v2113 = vmul.f32 %v2096, 1.442695
    %v2114 = vpow.pop %v2113
    %v2115 = vmul.f32 %v2097, 1.442695
    %v2116 = vpow.pop %v2115
    %v2117 = vmul.f32 %v2098, 1.442695
    %v2118 = vpow.pop %v2117
    %v2119 = vmul.f32 %v2099, 1.442695
    %v2120 = vpow.pop %v2119
    %v2121 = vmul.f32 %v2100, 1.442695
    %v2122 = vpow.pop %v2121
    %v2123 = vmul.f32 %v2101, 1.442695
    %v2124 = vpow.pop %v2123
    %v2125 = vmul.f32 %v2102, 1.442695
    %v2126 = vpow.pop %v2125
    %v2127 = vmul.f32 %v2103, 1.442695
    %v2128 = vpow.pop %v2127
    %v2129 = vmul.f32 %v2104, 1.442695
    %v2130 = vpow.pop %v2129
    %v2131 = vmul.f32 %v2105, 1.442695
    %v2132 = vpow.pop %v2131
    %v2133 = vmul.f32 %v2106, 1.442695
    %v2134 = vpow.pop %v2133
    %v2135 = vmul.f32 %v2107, 1.442695
    %v2136 = vpow.pop %v2135
    %v2137 = vmul.f32 %v2108, 1.442695
    %v2138 = vpow.pop %v2137
    %v2139 = vmul.f32 %v2109, 1.442695
    %v2140 = vpow.pop %v2139
    %v2141 = vmul.f32 %v2110, 1.442695
    %v2142 = vpow.pop %v2141
    %2143 = vadd.xlane.f32.xlu0 %v2112
    %v2144 = vpop.xlane.xlu0 %2143
    %2145 = vadd.xlane.f32.xlu0 %v2114
    %v2146 = vpop.xlane.xlu0 %2145
    %2147 = vadd.xlane.f32.xlu0 %v2116
    %v2148 = vpop.xlane.xlu0 %2147
    %2149 = vadd.xlane.f32.xlu0 %v2118
    %v2150 = vpop.xlane.xlu0 %2149
    %2151 = vadd.xlane.f32.xlu0 %v2120
    %v2152 = vpop.xlane.xlu0 %2151
    %2153 = vadd.xlane.f32.xlu0 %v2122
    %v2154 = vpop.xlane.xlu0 %2153
    %2155 = vadd.xlane.f32.xlu0 %v2124
    %v2156 = vpop.xlane.xlu0 %2155
    %2157 = vadd.xlane.f32.xlu0 %v2126
    %v2158 = vpop.xlane.xlu0 %2157
    %2159 = vadd.xlane.f32.xlu0 %v2128
    %v2160 = vpop.xlane.xlu0 %2159
    %2161 = vadd.xlane.f32.xlu0 %v2130
    %v2162 = vpop.xlane.xlu0 %2161
    %2163 = vadd.xlane.f32.xlu0 %v2132
    %v2164 = vpop.xlane.xlu0 %2163
    %2165 = vadd.xlane.f32.xlu0 %v2134
    %v2166 = vpop.xlane.xlu0 %2165
    %2167 = vadd.xlane.f32.xlu0 %v2136
    %v2168 = vpop.xlane.xlu0 %2167
    %2169 = vadd.xlane.f32.xlu0 %v2138
    %v2170 = vpop.xlane.xlu0 %2169
    %2171 = vadd.xlane.f32.xlu0 %v2140
    %v2172 = vpop.xlane.xlu0 %2171
    %2173 = vadd.xlane.f32.xlu0 %v2142
    %v2174 = vpop.xlane.xlu0 %2173
    %v2175 = vmax.f32 %v2144, 1e-30
    %v2176 = vmax.f32 %v2146, 1e-30
    %v2177 = vmax.f32 %v2148, 1e-30
    %v2178 = vmax.f32 %v2150, 1e-30
    %v2179 = vmax.f32 %v2152, 1e-30
    %v2180 = vmax.f32 %v2154, 1e-30
    %v2181 = vmax.f32 %v2156, 1e-30
    %v2182 = vmax.f32 %v2158, 1e-30
    %v2183 = vmax.f32 %v2160, 1e-30
    %v2184 = vmax.f32 %v2162, 1e-30
    %v2185 = vmax.f32 %v2164, 1e-30
    %v2186 = vmax.f32 %v2166, 1e-30
    %v2187 = vmax.f32 %v2168, 1e-30
    %v2188 = vmax.f32 %v2170, 1e-30
    %v2189 = vmax.f32 %v2172, 1e-30
    %v2190 = vmax.f32 %v2174, 1e-30
    %v2191 = vrcp.pop %v2175
    %v2192 = vrcp.pop %v2176
    %v2193 = vrcp.pop %v2177
    %v2194 = vrcp.pop %v2178
    %v2195 = vrcp.pop %v2179
    %v2196 = vrcp.pop %v2180
    %v2197 = vrcp.pop %v2181
    %v2198 = vrcp.pop %v2182
    %v2199 = vrcp.pop %v2183
    %v2200 = vrcp.pop %v2184
    %v2201 = vrcp.pop %v2185
    %v2202 = vrcp.pop %v2186
    %v2203 = vrcp.pop %v2187
    %v2204 = vrcp.pop %v2188
    %v2205 = vrcp.pop %v2189
    %v2206 = vrcp.pop %v2190
    %vm2207 = vcmp.ge.s32.totalorder %v522, 8
    %vm2208 = vcmp.lt.s32.totalorder %v522, 12
    %vm2209 = vmand %vm2207, %vm2208
    %v2210 = vsel %vm2209, 1, 0
    %vm2211 = vcmp.eq.s32.totalorder %v2210, 1
    %v2212 = vsel %vm2211, %v246, 0.0
    %v2213 = vsel %vm2211, %v252, 0.0
    %v2214 = vsel %vm2211, %v258, 0.0
    %v2215 = vsel %vm2211, %v264, 0.0
    %v2216 = vsel %vm2211, %v270, 0.0
    %v2217 = vsel %vm2211, %v276, 0.0
    %v2218 = vsel %vm2211, %v282, 0.0
    %v2219 = vsel %vm2211, %v288, 0.0
    %v2220 = vsel %vm2211, %v294, 0.0
    %v2221 = vsel %vm2211, %v300, 0.0
    %v2222 = vsel %vm2211, %v306, 0.0
    %v2223 = vsel %vm2211, %v312, 0.0
    %v2224 = vsel %vm2211, %v318, 0.0
    %v2225 = vsel %vm2211, %v324, 0.0
    %v2226 = vsel %vm2211, %v330, 0.0
    %v2227 = vsel %vm2211, %v336, 0.0
    %2228 = vmatprep.subr.mxu0 0.0
    %2229 = vmatpush1.msra.mxu0 %v2212
    %2230 = vmatprep.subr.mxu0 0.0
    %2231 = vmatpush1.msra.mxu0 %v2213
    %2232 = vmatprep.subr.mxu0 0.0
    %2233 = vmatpush1.msra.mxu0 %v2214
    %2234 = vmatprep.subr.mxu0 0.0
    %2235 = vmatpush1.msra.mxu0 %v2215
    %2236 = vmatprep.subr.mxu0 0.0
    %2237 = vmatpush1.msra.mxu0 %v2216
    %2238 = vmatprep.subr.mxu0 0.0
    %2239 = vmatpush1.msra.mxu0 %v2217
    %2240 = vmatprep.subr.mxu0 0.0
    %2241 = vmatpush1.msra.mxu0 %v2218
    %2242 = vmatprep.subr.mxu0 0.0
    %2243 = vmatpush1.msra.mxu0 %v2219
    %2244 = vmatprep.subr.mxu0 0.0
    %2245 = vmatpush1.msra.mxu0 %v2220
    %2246 = vmatprep.subr.mxu0 0.0
    %2247 = vmatpush1.msra.mxu0 %v2221
    %2248 = vmatprep.subr.mxu0 0.0
    %2249 = vmatpush1.msra.mxu0 %v2222
    %2250 = vmatprep.subr.mxu0 0.0
    %2251 = vmatpush1.msra.mxu0 %v2223
    %2252 = vmatprep.subr.mxu0 0.0
    %2253 = vmatpush1.msra.mxu0 %v2224
    %2254 = vmatprep.subr.mxu0 0.0
    %2255 = vmatpush1.msra.mxu0 %v2225
    %2256 = vmatprep.subr.mxu0 0.0
    %2257 = vmatpush1.msra.mxu0 %v2226
    %2258 = vmatprep.subr.mxu0 0.0
    %2259 = vmatpush1.msra.mxu0 %v2227
    %2260 = vmatprep.subr.mxu0 0.0
    %2261 = vmatpush1.msra.mxu0 0.0
    %2262 = vmatprep.subr.mxu0 0.0
    %2263 = vmatpush1.msra.mxu0 0.0
    %2264 = vmatprep.subr.mxu0 0.0
    %2265 = vmatpush1.msra.mxu0 0.0
    %2266 = vmatprep.subr.mxu0 0.0
    %2267 = vmatpush1.msra.mxu0 0.0
    %2268 = vmatprep.subr.mxu0 0.0
    %2269 = vmatpush1.msra.mxu0 0.0
    %2270 = vmatprep.subr.mxu0 0.0
    %2271 = vmatpush1.msra.mxu0 0.0
    %2272 = vmatprep.subr.mxu0 0.0
    %2273 = vmatpush1.msra.mxu0 0.0
    %2274 = vmatprep.subr.mxu0 0.0
    %2275 = vmatpush1.msra.mxu0 0.0
    %2276 = vmatprep.subr.mxu0 0.0
    %2277 = vmatpush1.msra.mxu0 0.0
    %2278 = vmatprep.subr.mxu0 0.0
    %2279 = vmatpush1.msra.mxu0 0.0
    %2280 = vmatprep.subr.mxu0 0.0
    %2281 = vmatpush1.msra.mxu0 0.0
    %2282 = vmatprep.subr.mxu0 0.0
    %2283 = vmatpush1.msra.mxu0 0.0
    %2284 = vmatprep.subr.mxu0 0.0
    %2285 = vmatpush1.msra.mxu0 0.0
    %2286 = vmatprep.subr.mxu0 0.0
    %2287 = vmatpush1.msra.mxu0 0.0
    %2288 = vmatprep.subr.mxu0 0.0
    %2289 = vmatpush1.msra.mxu0 0.0
    %2290 = vmatprep.subr.mxu0 0.0
    %2291 = vmatpush1.msra.mxu0 0.0
    %2292 = vmatprep.mubr.f32.mxu0 0.0
    %2293 = vmatmul.mubr.f32.gmra.mrb[0].mxu0 %v2112
    %v2294 = vpop.f32.mrb[0].mxu0
    %v2295 = vadd.f32 0.0, %v2294
    %v2296 = vpop.f32.mrb[0].mxu0
    %2297 = vmatprep.mubr.f32.mxu0 0.0
    %2298 = vmatmul.mubr.f32.gmra.mrb[0].mxu0 %v2114
    %v2299 = vpop.f32.mrb[0].mxu0
    %v2300 = vadd.f32 0.0, %v2299
    %v2301 = vpop.f32.mrb[0].mxu0
    %2302 = vmatprep.mubr.f32.mxu0 0.0
    %2303 = vmatmul.mubr.f32.gmra.mrb[0].mxu0 %v2116
    %v2304 = vpop.f32.mrb[0].mxu0
    %v2305 = vadd.f32 0.0, %v2304
    %v2306 = vpop.f32.mrb[0].mxu0
    %2307 = vmatprep.mubr.f32.mxu0 0.0
    %2308 = vmatmul.mubr.f32.gmra.mrb[0].mxu0 %v2118
    %v2309 = vpop.f32.mrb[0].mxu0
    %v2310 = vadd.f32 0.0, %v2309
    %v2311 = vpop.f32.mrb[0].mxu0
    %2312 = vmatprep.mubr.f32.mxu0 0.0
    %2313 = vmatmul.mubr.f32.gmra.mrb[0].mxu0 %v2120
    %v2314 = vpop.f32.mrb[0].mxu0
    %v2315 = vadd.f32 0.0, %v2314
    %v2316 = vpop.f32.mrb[0].mxu0
    %2317 = vmatprep.mubr.f32.mxu0 0.0
    %2318 = vmatmul.mubr.f32.gmra.mrb[0].mxu0 %v2122
    %v2319 = vpop.f32.mrb[0].mxu0
    %v2320 = vadd.f32 0.0, %v2319
    %v2321 = vpop.f32.mrb[0].mxu0
    %2322 = vmatprep.mubr.f32.mxu0 0.0
    %2323 = vmatmul.mubr.f32.gmra.mrb[0].mxu0 %v2124
    %v2324 = vpop.f32.mrb[0].mxu0
    %v2325 = vadd.f32 0.0, %v2324
    %v2326 = vpop.f32.mrb[0].mxu0
    %2327 = vmatprep.mubr.f32.mxu0 0.0
    %2328 = vmatmul.mubr.f32.gmra.mrb[0].mxu0 %v2126
    %v2329 = vpop.f32.mrb[0].mxu0
    %v2330 = vadd.f32 0.0, %v2329
    %v2331 = vpop.f32.mrb[0].mxu0
    %2332 = vmatprep.mubr.f32.mxu0 0.0
    %2333 = vmatmul.mubr.f32.gmra.mrb[0].mxu0 %v2128
    %v2334 = vpop.f32.mrb[0].mxu0
    %v2335 = vadd.f32 0.0, %v2334
    %v2336 = vpop.f32.mrb[0].mxu0
    %2337 = vmatprep.mubr.f32.mxu0 0.0
    %2338 = vmatmul.mubr.f32.gmra.mrb[0].mxu0 %v2130
    %v2339 = vpop.f32.mrb[0].mxu0
    %v2340 = vadd.f32 0.0, %v2339
    %v2341 = vpop.f32.mrb[0].mxu0
    %2342 = vmatprep.mubr.f32.mxu0 0.0
    %2343 = vmatmul.mubr.f32.gmra.mrb[0].mxu0 %v2132
    %v2344 = vpop.f32.mrb[0].mxu0
    %v2345 = vadd.f32 0.0, %v2344
    %v2346 = vpop.f32.mrb[0].mxu0
    %2347 = vmatprep.mubr.f32.mxu0 0.0
    %2348 = vmatmul.mubr.f32.gmra.mrb[0].mxu0 %v2134
    %v2349 = vpop.f32.mrb[0].mxu0
    %v2350 = vadd.f32 0.0, %v2349
    %v2351 = vpop.f32.mrb[0].mxu0
    %2352 = vmatprep.mubr.f32.mxu0 0.0
    %2353 = vmatmul.mubr.f32.gmra.mrb[0].mxu0 %v2136
    %v2354 = vpop.f32.mrb[0].mxu0
    %v2355 = vadd.f32 0.0, %v2354
    %v2356 = vpop.f32.mrb[0].mxu0
    %2357 = vmatprep.mubr.f32.mxu0 0.0
    %2358 = vmatmul.mubr.f32.gmra.mrb[0].mxu0 %v2138
    %v2359 = vpop.f32.mrb[0].mxu0
    %v2360 = vadd.f32 0.0, %v2359
    %v2361 = vpop.f32.mrb[0].mxu0
    %2362 = vmatprep.mubr.f32.mxu0 0.0
    %2363 = vmatmul.mubr.f32.gmra.mrb[0].mxu0 %v2140
    %v2364 = vpop.f32.mrb[0].mxu0
    %v2365 = vadd.f32 0.0, %v2364
    %v2366 = vpop.f32.mrb[0].mxu0
    %2367 = vmatprep.mubr.f32.mxu0 0.0
    %2368 = vmatmul.mubr.f32.gmra.mrb[0].mxu0 %v2142
    %v2369 = vpop.f32.mrb[0].mxu0
    %v2370 = vadd.f32 0.0, %v2369
    %v2371 = vpop.f32.mrb[0].mxu0
    %2372 = vdwg.mxu0
    %v2373 = vmul.f32 %v2295, %v2191
    %v2374 = vmul.f32 %v2300, %v2192
    %v2375 = vmul.f32 %v2305, %v2193
    %v2376 = vmul.f32 %v2310, %v2194
    %v2377 = vmul.f32 %v2315, %v2195
    %v2378 = vmul.f32 %v2320, %v2196
    %v2379 = vmul.f32 %v2325, %v2197
    %v2380 = vmul.f32 %v2330, %v2198
    %v2381 = vmul.f32 %v2335, %v2199
    %v2382 = vmul.f32 %v2340, %v2200
    %v2383 = vmul.f32 %v2345, %v2201
    %v2384 = vmul.f32 %v2350, %v2202
    %v2385 = vmul.f32 %v2355, %v2203
    %v2386 = vmul.f32 %v2360, %v2204
    %v2387 = vmul.f32 %v2365, %v2205
    %v2388 = vmul.f32 %v2370, %v2206
    %v2389 = vadd.f32 %v1783, %v2373
    %v2390 = vadd.f32 %v1784, %v2374
    %v2391 = vadd.f32 %v1785, %v2375
    %v2392 = vadd.f32 %v1786, %v2376
    %v2393 = vadd.f32 %v1787, %v2377
    %v2394 = vadd.f32 %v1788, %v2378
    %v2395 = vadd.f32 %v1789, %v2379
    %v2396 = vadd.f32 %v1790, %v2380
    %v2397 = vadd.f32 %v1791, %v2381
    %v2398 = vadd.f32 %v1792, %v2382
    %v2399 = vadd.f32 %v1793, %v2383
    %v2400 = vadd.f32 %v1794, %v2384
    %v2401 = vadd.f32 %v1795, %v2385
    %v2402 = vadd.f32 %v1796, %v2386
    %v2403 = vadd.f32 %v1797, %v2387
    %v2404 = vadd.f32 %v1798, %v2388
    %2405 = vset.pattern.permute.xlu0 3
    %2406 = vperm.xlu0 %2405, %v407
    %v2407 = vpop.permute.xlu0 %2406
    %2409 = vset.pattern.permute.xlu0 3
    %2410 = vperm.xlu0 %2409, %v412
    %v2411 = vpop.permute.xlu0 %2410
    %2413 = vset.pattern.permute.xlu0 3
    %2414 = vperm.xlu0 %2413, %v417
    %v2415 = vpop.permute.xlu0 %2414
    %2417 = vset.pattern.permute.xlu0 3
    %2418 = vperm.xlu0 %2417, %v422
    %v2419 = vpop.permute.xlu0 %2418
    %2421 = vset.pattern.permute.xlu0 3
    %2422 = vperm.xlu0 %2421, %v427
    %v2423 = vpop.permute.xlu0 %2422
    %2425 = vset.pattern.permute.xlu0 3
    %2426 = vperm.xlu0 %2425, %v432
    %v2427 = vpop.permute.xlu0 %2426
    %2429 = vset.pattern.permute.xlu0 3
    %2430 = vperm.xlu0 %2429, %v437
    %v2431 = vpop.permute.xlu0 %2430
    %2433 = vset.pattern.permute.xlu0 3
    %2434 = vperm.xlu0 %2433, %v442
    %v2435 = vpop.permute.xlu0 %2434
    %2437 = vset.pattern.permute.xlu0 3
    %2438 = vperm.xlu0 %2437, %v447
    %v2439 = vpop.permute.xlu0 %2438
    %2441 = vset.pattern.permute.xlu0 3
    %2442 = vperm.xlu0 %2441, %v452
    %v2443 = vpop.permute.xlu0 %2442
    %2445 = vset.pattern.permute.xlu0 3
    %2446 = vperm.xlu0 %2445, %v457
    %v2447 = vpop.permute.xlu0 %2446
    %2449 = vset.pattern.permute.xlu0 3
    %2450 = vperm.xlu0 %2449, %v462
    %v2451 = vpop.permute.xlu0 %2450
    %2453 = vset.pattern.permute.xlu0 3
    %2454 = vperm.xlu0 %2453, %v467
    %v2455 = vpop.permute.xlu0 %2454
    %2457 = vset.pattern.permute.xlu0 3
    %2458 = vperm.xlu0 %2457, %v472
    %v2459 = vpop.permute.xlu0 %2458
    %2461 = vset.pattern.permute.xlu0 3
    %2462 = vperm.xlu0 %2461, %v477
    %v2463 = vpop.permute.xlu0 %2462
    %2465 = vset.pattern.permute.xlu0 3
    %2466 = vperm.xlu0 %2465, %v482
    %v2467 = vpop.permute.xlu0 %2466
    %v2469 = vlaneseq
    %v2470 = vshrl.u32 %v2469, 7
    %v2471 = vsub.s32 3, %v2470
    %v2472 = vrot.slane %v501, %v2471
    %v2473 = vadd.f32 %v2407, %v2472
    %v2474 = vadd.f32 %v2411, %v2472
    %v2475 = vadd.f32 %v2415, %v2472
    %v2476 = vadd.f32 %v2419, %v2472
    %v2477 = vadd.f32 %v2423, %v2472
    %v2478 = vadd.f32 %v2427, %v2472
    %v2479 = vadd.f32 %v2431, %v2472
    %v2480 = vadd.f32 %v2435, %v2472
    %v2481 = vadd.f32 %v2439, %v2472
    %v2482 = vadd.f32 %v2443, %v2472
    %v2483 = vadd.f32 %v2447, %v2472
    %v2484 = vadd.f32 %v2451, %v2472
    %v2485 = vadd.f32 %v2455, %v2472
    %v2486 = vadd.f32 %v2459, %v2472
    %v2487 = vadd.f32 %v2463, %v2472
    %v2488 = vadd.f32 %v2467, %v2472
    %vm2489 = vcmp.gt.f32.partialorder %v2473, 0.0
    %vm2490 = vcmp.gt.f32.partialorder %v2474, 0.0
    %vm2491 = vcmp.gt.f32.partialorder %v2475, 0.0
    %vm2492 = vcmp.gt.f32.partialorder %v2476, 0.0
    %vm2493 = vcmp.gt.f32.partialorder %v2477, 0.0
    %vm2494 = vcmp.gt.f32.partialorder %v2478, 0.0
    %vm2495 = vcmp.gt.f32.partialorder %v2479, 0.0
    %vm2496 = vcmp.gt.f32.partialorder %v2480, 0.0
    %vm2497 = vcmp.gt.f32.partialorder %v2481, 0.0
    %vm2498 = vcmp.gt.f32.partialorder %v2482, 0.0
    %vm2499 = vcmp.gt.f32.partialorder %v2483, 0.0
    %vm2500 = vcmp.gt.f32.partialorder %v2484, 0.0
    %vm2501 = vcmp.gt.f32.partialorder %v2485, 0.0
    %vm2502 = vcmp.gt.f32.partialorder %v2486, 0.0
    %vm2503 = vcmp.gt.f32.partialorder %v2487, 0.0
    %vm2504 = vcmp.gt.f32.partialorder %v2488, 0.0
    %v2505 = vmul.f32 %v2473, 0.2
    %v2506 = vmul.f32 %v2474, 0.2
    %v2507 = vmul.f32 %v2475, 0.2
    %v2508 = vmul.f32 %v2476, 0.2
    %v2509 = vmul.f32 %v2477, 0.2
    %v2510 = vmul.f32 %v2478, 0.2
    %v2511 = vmul.f32 %v2479, 0.2
    %v2512 = vmul.f32 %v2480, 0.2
    %v2513 = vmul.f32 %v2481, 0.2
    %v2514 = vmul.f32 %v2482, 0.2
    %v2515 = vmul.f32 %v2483, 0.2
    %v2516 = vmul.f32 %v2484, 0.2
    %v2517 = vmul.f32 %v2485, 0.2
    %v2518 = vmul.f32 %v2486, 0.2
    %v2519 = vmul.f32 %v2487, 0.2
    %v2520 = vmul.f32 %v2488, 0.2
    %v2521 = vsel %vm2489, %v2473, %v2505
    %v2522 = vsel %vm2490, %v2474, %v2506
    %v2523 = vsel %vm2491, %v2475, %v2507
    %v2524 = vsel %vm2492, %v2476, %v2508
    %v2525 = vsel %vm2493, %v2477, %v2509
    %v2526 = vsel %vm2494, %v2478, %v2510
    %v2527 = vsel %vm2495, %v2479, %v2511
    %v2528 = vsel %vm2496, %v2480, %v2512
    %v2529 = vsel %vm2497, %v2481, %v2513
    %v2530 = vsel %vm2498, %v2482, %v2514
    %v2531 = vsel %vm2499, %v2483, %v2515
    %v2532 = vsel %vm2500, %v2484, %v2516
    %v2533 = vsel %vm2501, %v2485, %v2517
    %v2534 = vsel %vm2502, %v2486, %v2518
    %v2535 = vsel %vm2503, %v2487, %v2519
    %v2536 = vsel %vm2504, %v2488, %v2520
    %v2537 = vlaneseq
    %v2538 = vshrl.u32 %v2537, 7
    %v2539 = vsub.s32 3, %v2538
    %v2540 = vrot.slane %v520, %v2539
    %v2541 = vadd.f32 %v407, %v2540
    %v2542 = vadd.f32 %v412, %v2540
    %v2543 = vadd.f32 %v417, %v2540
    %v2544 = vadd.f32 %v422, %v2540
    %v2545 = vadd.f32 %v427, %v2540
    %v2546 = vadd.f32 %v432, %v2540
    %v2547 = vadd.f32 %v437, %v2540
    %v2548 = vadd.f32 %v442, %v2540
    %v2549 = vadd.f32 %v447, %v2540
    %v2550 = vadd.f32 %v452, %v2540
    %v2551 = vadd.f32 %v457, %v2540
    %v2552 = vadd.f32 %v462, %v2540
    %v2553 = vadd.f32 %v467, %v2540
    %v2554 = vadd.f32 %v472, %v2540
    %v2555 = vadd.f32 %v477, %v2540
    %v2556 = vadd.f32 %v482, %v2540
    %vm2557 = vcmp.gt.f32.partialorder %v2541, 0.0
    %vm2558 = vcmp.gt.f32.partialorder %v2542, 0.0
    %vm2559 = vcmp.gt.f32.partialorder %v2543, 0.0
    %vm2560 = vcmp.gt.f32.partialorder %v2544, 0.0
    %vm2561 = vcmp.gt.f32.partialorder %v2545, 0.0
    %vm2562 = vcmp.gt.f32.partialorder %v2546, 0.0
    %vm2563 = vcmp.gt.f32.partialorder %v2547, 0.0
    %vm2564 = vcmp.gt.f32.partialorder %v2548, 0.0
    %vm2565 = vcmp.gt.f32.partialorder %v2549, 0.0
    %vm2566 = vcmp.gt.f32.partialorder %v2550, 0.0
    %vm2567 = vcmp.gt.f32.partialorder %v2551, 0.0
    %vm2568 = vcmp.gt.f32.partialorder %v2552, 0.0
    %vm2569 = vcmp.gt.f32.partialorder %v2553, 0.0
    %vm2570 = vcmp.gt.f32.partialorder %v2554, 0.0
    %vm2571 = vcmp.gt.f32.partialorder %v2555, 0.0
    %vm2572 = vcmp.gt.f32.partialorder %v2556, 0.0
    %v2573 = vmul.f32 %v2541, 0.2
    %v2574 = vmul.f32 %v2542, 0.2
    %v2575 = vmul.f32 %v2543, 0.2
    %v2576 = vmul.f32 %v2544, 0.2
    %v2577 = vmul.f32 %v2545, 0.2
    %v2578 = vmul.f32 %v2546, 0.2
    %v2579 = vmul.f32 %v2547, 0.2
    %v2580 = vmul.f32 %v2548, 0.2
    %v2581 = vmul.f32 %v2549, 0.2
    %v2582 = vmul.f32 %v2550, 0.2
    %v2583 = vmul.f32 %v2551, 0.2
    %v2584 = vmul.f32 %v2552, 0.2
    %v2585 = vmul.f32 %v2553, 0.2
    %v2586 = vmul.f32 %v2554, 0.2
    %v2587 = vmul.f32 %v2555, 0.2
    %v2588 = vmul.f32 %v2556, 0.2
    %v2589 = vsel %vm2557, %v2541, %v2573
    %v2590 = vsel %vm2558, %v2542, %v2574
    %v2591 = vsel %vm2559, %v2543, %v2575
    %v2592 = vsel %vm2560, %v2544, %v2576
    %v2593 = vsel %vm2561, %v2545, %v2577
    %v2594 = vsel %vm2562, %v2546, %v2578
    %v2595 = vsel %vm2563, %v2547, %v2579
    %v2596 = vsel %vm2564, %v2548, %v2580
    %v2597 = vsel %vm2565, %v2549, %v2581
    %v2598 = vsel %vm2566, %v2550, %v2582
    %v2599 = vsel %vm2567, %v2551, %v2583
    %v2600 = vsel %vm2568, %v2552, %v2584
    %v2601 = vsel %vm2569, %v2553, %v2585
    %v2602 = vsel %vm2570, %v2554, %v2586
    %v2603 = vsel %vm2571, %v2555, %v2587
    %v2604 = vsel %vm2572, %v2556, %v2588
    %2606 = vset.pattern.permute.xlu0 3
    %2607 = vperm.xlu0 %2606, %v2589
    %v2608 = vpop.permute.xlu0 %2607
    %2611 = vset.pattern.permute.xlu0 3
    %2612 = vperm.xlu0 %2611, %v2590
    %v2613 = vpop.permute.xlu0 %2612
    %2616 = vset.pattern.permute.xlu0 3
    %2617 = vperm.xlu0 %2616, %v2591
    %v2618 = vpop.permute.xlu0 %2617
    %2621 = vset.pattern.permute.xlu0 3
    %2622 = vperm.xlu0 %2621, %v2592
    %v2623 = vpop.permute.xlu0 %2622
    %2626 = vset.pattern.permute.xlu0 3
    %2627 = vperm.xlu0 %2626, %v2593
    %v2628 = vpop.permute.xlu0 %2627
    %2631 = vset.pattern.permute.xlu0 3
    %2632 = vperm.xlu0 %2631, %v2594
    %v2633 = vpop.permute.xlu0 %2632
    %2636 = vset.pattern.permute.xlu0 3
    %2637 = vperm.xlu0 %2636, %v2595
    %v2638 = vpop.permute.xlu0 %2637
    %2641 = vset.pattern.permute.xlu0 3
    %2642 = vperm.xlu0 %2641, %v2596
    %v2643 = vpop.permute.xlu0 %2642
    %2646 = vset.pattern.permute.xlu0 3
    %2647 = vperm.xlu0 %2646, %v2597
    %v2648 = vpop.permute.xlu0 %2647
    %2651 = vset.pattern.permute.xlu0 3
    %2652 = vperm.xlu0 %2651, %v2598
    %v2653 = vpop.permute.xlu0 %2652
    %2656 = vset.pattern.permute.xlu0 3
    %2657 = vperm.xlu0 %2656, %v2599
    %v2658 = vpop.permute.xlu0 %2657
    %2661 = vset.pattern.permute.xlu0 3
    %2662 = vperm.xlu0 %2661, %v2600
    %v2663 = vpop.permute.xlu0 %2662
    %2666 = vset.pattern.permute.xlu0 3
    %2667 = vperm.xlu0 %2666, %v2601
    %v2668 = vpop.permute.xlu0 %2667
    %2671 = vset.pattern.permute.xlu0 3
    %2672 = vperm.xlu0 %2671, %v2602
    %v2673 = vpop.permute.xlu0 %2672
    %2676 = vset.pattern.permute.xlu0 3
    %2677 = vperm.xlu0 %2676, %v2603
    %v2678 = vpop.permute.xlu0 %2677
    %2681 = vset.pattern.permute.xlu0 3
    %2682 = vperm.xlu0 %2681, %v2604
    %v2683 = vpop.permute.xlu0 %2682
    %v2685 = vsub.f32 %v2521, %v2608
    %v2686 = vsub.f32 %v2522, %v2613
    %v2687 = vsub.f32 %v2523, %v2618
    %v2688 = vsub.f32 %v2524, %v2623
    %v2689 = vsub.f32 %v2525, %v2628
    %v2690 = vsub.f32 %v2526, %v2633
    %v2691 = vsub.f32 %v2527, %v2638
    %v2692 = vsub.f32 %v2528, %v2643
    %v2693 = vsub.f32 %v2529, %v2648
    %v2694 = vsub.f32 %v2530, %v2653
    %v2695 = vsub.f32 %v2531, %v2658
    %v2696 = vsub.f32 %v2532, %v2663
    %v2697 = vsub.f32 %v2533, %v2668
    %v2698 = vsub.f32 %v2534, %v2673
    %v2699 = vsub.f32 %v2535, %v2678
    %v2700 = vsub.f32 %v2536, %v2683
    %v2701 = vsel %vm867, %v2685, -1e+30
    %v2702 = vsel %vm868, %v2686, -1e+30
    %v2703 = vsel %vm869, %v2687, -1e+30
    %v2704 = vsel %vm870, %v2688, -1e+30
    %v2705 = vsel %vm871, %v2689, -1e+30
    %v2706 = vsel %vm872, %v2690, -1e+30
    %v2707 = vsel %vm873, %v2691, -1e+30
    %v2708 = vsel %vm874, %v2692, -1e+30
    %v2709 = vsel %vm875, %v2693, -1e+30
    %v2710 = vsel %vm876, %v2694, -1e+30
    %v2711 = vsel %vm877, %v2695, -1e+30
    %v2712 = vsel %vm878, %v2696, -1e+30
    %v2713 = vsel %vm879, %v2697, -1e+30
    %v2714 = vsel %vm880, %v2698, -1e+30
    %v2715 = vsel %vm881, %v2699, -1e+30
    %v2716 = vsel %vm882, %v2700, -1e+30
    %v2717 = vmul.f32 %v2701, 1.442695
    %v2718 = vpow.pop %v2717
    %v2719 = vmul.f32 %v2702, 1.442695
    %v2720 = vpow.pop %v2719
    %v2721 = vmul.f32 %v2703, 1.442695
    %v2722 = vpow.pop %v2721
    %v2723 = vmul.f32 %v2704, 1.442695
    %v2724 = vpow.pop %v2723
    %v2725 = vmul.f32 %v2705, 1.442695
    %v2726 = vpow.pop %v2725
    %v2727 = vmul.f32 %v2706, 1.442695
    %v2728 = vpow.pop %v2727
    %v2729 = vmul.f32 %v2707, 1.442695
    %v2730 = vpow.pop %v2729
    %v2731 = vmul.f32 %v2708, 1.442695
    %v2732 = vpow.pop %v2731
    %v2733 = vmul.f32 %v2709, 1.442695
    %v2734 = vpow.pop %v2733
    %v2735 = vmul.f32 %v2710, 1.442695
    %v2736 = vpow.pop %v2735
    %v2737 = vmul.f32 %v2711, 1.442695
    %v2738 = vpow.pop %v2737
    %v2739 = vmul.f32 %v2712, 1.442695
    %v2740 = vpow.pop %v2739
    %v2741 = vmul.f32 %v2713, 1.442695
    %v2742 = vpow.pop %v2741
    %v2743 = vmul.f32 %v2714, 1.442695
    %v2744 = vpow.pop %v2743
    %v2745 = vmul.f32 %v2715, 1.442695
    %v2746 = vpow.pop %v2745
    %v2747 = vmul.f32 %v2716, 1.442695
    %v2748 = vpow.pop %v2747
    %2749 = vadd.xlane.f32.xlu0 %v2718
    %v2750 = vpop.xlane.xlu0 %2749
    %2751 = vadd.xlane.f32.xlu0 %v2720
    %v2752 = vpop.xlane.xlu0 %2751
    %2753 = vadd.xlane.f32.xlu0 %v2722
    %v2754 = vpop.xlane.xlu0 %2753
    %2755 = vadd.xlane.f32.xlu0 %v2724
    %v2756 = vpop.xlane.xlu0 %2755
    %2757 = vadd.xlane.f32.xlu0 %v2726
    %v2758 = vpop.xlane.xlu0 %2757
    %2759 = vadd.xlane.f32.xlu0 %v2728
    %v2760 = vpop.xlane.xlu0 %2759
    %2761 = vadd.xlane.f32.xlu0 %v2730
    %v2762 = vpop.xlane.xlu0 %2761
    %2763 = vadd.xlane.f32.xlu0 %v2732
    %v2764 = vpop.xlane.xlu0 %2763
    %2765 = vadd.xlane.f32.xlu0 %v2734
    %v2766 = vpop.xlane.xlu0 %2765
    %2767 = vadd.xlane.f32.xlu0 %v2736
    %v2768 = vpop.xlane.xlu0 %2767
    %2769 = vadd.xlane.f32.xlu0 %v2738
    %v2770 = vpop.xlane.xlu0 %2769
    %2771 = vadd.xlane.f32.xlu0 %v2740
    %v2772 = vpop.xlane.xlu0 %2771
    %2773 = vadd.xlane.f32.xlu0 %v2742
    %v2774 = vpop.xlane.xlu0 %2773
    %2775 = vadd.xlane.f32.xlu0 %v2744
    %v2776 = vpop.xlane.xlu0 %2775
    %2777 = vadd.xlane.f32.xlu0 %v2746
    %v2778 = vpop.xlane.xlu0 %2777
    %2779 = vadd.xlane.f32.xlu0 %v2748
    %v2780 = vpop.xlane.xlu0 %2779
    %v2781 = vmax.f32 %v2750, 1e-30
    %v2782 = vmax.f32 %v2752, 1e-30
    %v2783 = vmax.f32 %v2754, 1e-30
    %v2784 = vmax.f32 %v2756, 1e-30
    %v2785 = vmax.f32 %v2758, 1e-30
    %v2786 = vmax.f32 %v2760, 1e-30
    %v2787 = vmax.f32 %v2762, 1e-30
    %v2788 = vmax.f32 %v2764, 1e-30
    %v2789 = vmax.f32 %v2766, 1e-30
    %v2790 = vmax.f32 %v2768, 1e-30
    %v2791 = vmax.f32 %v2770, 1e-30
    %v2792 = vmax.f32 %v2772, 1e-30
    %v2793 = vmax.f32 %v2774, 1e-30
    %v2794 = vmax.f32 %v2776, 1e-30
    %v2795 = vmax.f32 %v2778, 1e-30
    %v2796 = vmax.f32 %v2780, 1e-30
    %v2797 = vrcp.pop %v2781
    %v2798 = vrcp.pop %v2782
    %v2799 = vrcp.pop %v2783
    %v2800 = vrcp.pop %v2784
    %v2801 = vrcp.pop %v2785
    %v2802 = vrcp.pop %v2786
    %v2803 = vrcp.pop %v2787
    %v2804 = vrcp.pop %v2788
    %v2805 = vrcp.pop %v2789
    %v2806 = vrcp.pop %v2790
    %v2807 = vrcp.pop %v2791
    %v2808 = vrcp.pop %v2792
    %v2809 = vrcp.pop %v2793
    %v2810 = vrcp.pop %v2794
    %v2811 = vrcp.pop %v2795
    %v2812 = vrcp.pop %v2796
    %vm2813 = vcmp.ge.s32.totalorder %v522, 12
    %vm2814 = vcmp.lt.s32.totalorder %v522, 16
    %vm2815 = vmand %vm2813, %vm2814
    %v2816 = vsel %vm2815, 1, 0
    %vm2817 = vcmp.eq.s32.totalorder %v2816, 1
    %v2818 = vsel %vm2817, %v246, 0.0
    %v2819 = vsel %vm2817, %v252, 0.0
    %v2820 = vsel %vm2817, %v258, 0.0
    %v2821 = vsel %vm2817, %v264, 0.0
    %v2822 = vsel %vm2817, %v270, 0.0
    %v2823 = vsel %vm2817, %v276, 0.0
    %v2824 = vsel %vm2817, %v282, 0.0
    %v2825 = vsel %vm2817, %v288, 0.0
    %v2826 = vsel %vm2817, %v294, 0.0
    %v2827 = vsel %vm2817, %v300, 0.0
    %v2828 = vsel %vm2817, %v306, 0.0
    %v2829 = vsel %vm2817, %v312, 0.0
    %v2830 = vsel %vm2817, %v318, 0.0
    %v2831 = vsel %vm2817, %v324, 0.0
    %v2832 = vsel %vm2817, %v330, 0.0
    %v2833 = vsel %vm2817, %v336, 0.0
    %2834 = vmatprep.subr.mxu0 0.0
    %2835 = vmatpush1.msra.mxu0 %v2818
    %2836 = vmatprep.subr.mxu0 0.0
    %2837 = vmatpush1.msra.mxu0 %v2819
    %2838 = vmatprep.subr.mxu0 0.0
    %2839 = vmatpush1.msra.mxu0 %v2820
    %2840 = vmatprep.subr.mxu0 0.0
    %2841 = vmatpush1.msra.mxu0 %v2821
    %2842 = vmatprep.subr.mxu0 0.0
    %2843 = vmatpush1.msra.mxu0 %v2822
    %2844 = vmatprep.subr.mxu0 0.0
    %2845 = vmatpush1.msra.mxu0 %v2823
    %2846 = vmatprep.subr.mxu0 0.0
    %2847 = vmatpush1.msra.mxu0 %v2824
    %2848 = vmatprep.subr.mxu0 0.0
    %2849 = vmatpush1.msra.mxu0 %v2825
    %2850 = vmatprep.subr.mxu0 0.0
    %2851 = vmatpush1.msra.mxu0 %v2826
    %2852 = vmatprep.subr.mxu0 0.0
    %2853 = vmatpush1.msra.mxu0 %v2827
    %2854 = vmatprep.subr.mxu0 0.0
    %2855 = vmatpush1.msra.mxu0 %v2828
    %2856 = vmatprep.subr.mxu0 0.0
    %2857 = vmatpush1.msra.mxu0 %v2829
    %2858 = vmatprep.subr.mxu0 0.0
    %2859 = vmatpush1.msra.mxu0 %v2830
    %2860 = vmatprep.subr.mxu0 0.0
    %2861 = vmatpush1.msra.mxu0 %v2831
    %2862 = vmatprep.subr.mxu0 0.0
    %2863 = vmatpush1.msra.mxu0 %v2832
    %2864 = vmatprep.subr.mxu0 0.0
    %2865 = vmatpush1.msra.mxu0 %v2833
    %2866 = vmatprep.subr.mxu0 0.0
    %2867 = vmatpush1.msra.mxu0 0.0
    %2868 = vmatprep.subr.mxu0 0.0
    %2869 = vmatpush1.msra.mxu0 0.0
    %2870 = vmatprep.subr.mxu0 0.0
    %2871 = vmatpush1.msra.mxu0 0.0
    %2872 = vmatprep.subr.mxu0 0.0
    %2873 = vmatpush1.msra.mxu0 0.0
    %2874 = vmatprep.subr.mxu0 0.0
    %2875 = vmatpush1.msra.mxu0 0.0
    %2876 = vmatprep.subr.mxu0 0.0
    %2877 = vmatpush1.msra.mxu0 0.0
    %2878 = vmatprep.subr.mxu0 0.0
    %2879 = vmatpush1.msra.mxu0 0.0
    %2880 = vmatprep.subr.mxu0 0.0
    %2881 = vmatpush1.msra.mxu0 0.0
    %2882 = vmatprep.subr.mxu0 0.0
    %2883 = vmatpush1.msra.mxu0 0.0
    %2884 = vmatprep.subr.mxu0 0.0
    %2885 = vmatpush1.msra.mxu0 0.0
    %2886 = vmatprep.subr.mxu0 0.0
    %2887 = vmatpush1.msra.mxu0 0.0
    %2888 = vmatprep.subr.mxu0 0.0
    %2889 = vmatpush1.msra.mxu0 0.0
    %2890 = vmatprep.subr.mxu0 0.0
    %2891 = vmatpush1.msra.mxu0 0.0
    %2892 = vmatprep.subr.mxu0 0.0
    %2893 = vmatpush1.msra.mxu0 0.0
    %2894 = vmatprep.subr.mxu0 0.0
    %2895 = vmatpush1.msra.mxu0 0.0
    %2896 = vmatprep.subr.mxu0 0.0
    %2897 = vmatpush1.msra.mxu0 0.0
    %2898 = vmatprep.mubr.f32.mxu0 0.0
    %2899 = vmatmul.mubr.f32.gmra.mrb[0].mxu0 %v2718
    %v2900 = vpop.f32.mrb[0].mxu0
    %v2901 = vadd.f32 0.0, %v2900
    %v2902 = vpop.f32.mrb[0].mxu0
    %2903 = vmatprep.mubr.f32.mxu0 0.0
    %2904 = vmatmul.mubr.f32.gmra.mrb[0].mxu0 %v2720
    %v2905 = vpop.f32.mrb[0].mxu0
    %v2906 = vadd.f32 0.0, %v2905
    %v2907 = vpop.f32.mrb[0].mxu0
    %2908 = vmatprep.mubr.f32.mxu0 0.0
    %2909 = vmatmul.mubr.f32.gmra.mrb[0].mxu0 %v2722
    %v2910 = vpop.f32.mrb[0].mxu0
    %v2911 = vadd.f32 0.0, %v2910
    %v2912 = vpop.f32.mrb[0].mxu0
    %2913 = vmatprep.mubr.f32.mxu0 0.0
    %2914 = vmatmul.mubr.f32.gmra.mrb[0].mxu0 %v2724
    %v2915 = vpop.f32.mrb[0].mxu0
    %v2916 = vadd.f32 0.0, %v2915
    %v2917 = vpop.f32.mrb[0].mxu0
    %2918 = vmatprep.mubr.f32.mxu0 0.0
    %2919 = vmatmul.mubr.f32.gmra.mrb[0].mxu0 %v2726
    %v2920 = vpop.f32.mrb[0].mxu0
    %v2921 = vadd.f32 0.0, %v2920
    %v2922 = vpop.f32.mrb[0].mxu0
    %2923 = vmatprep.mubr.f32.mxu0 0.0
    %2924 = vmatmul.mubr.f32.gmra.mrb[0].mxu0 %v2728
    %v2925 = vpop.f32.mrb[0].mxu0
    %v2926 = vadd.f32 0.0, %v2925
    %v2927 = vpop.f32.mrb[0].mxu0
    %2928 = vmatprep.mubr.f32.mxu0 0.0
    %2929 = vmatmul.mubr.f32.gmra.mrb[0].mxu0 %v2730
    %v2930 = vpop.f32.mrb[0].mxu0
    %v2931 = vadd.f32 0.0, %v2930
    %v2932 = vpop.f32.mrb[0].mxu0
    %2933 = vmatprep.mubr.f32.mxu0 0.0
    %2934 = vmatmul.mubr.f32.gmra.mrb[0].mxu0 %v2732
    %v2935 = vpop.f32.mrb[0].mxu0
    %v2936 = vadd.f32 0.0, %v2935
    %v2937 = vpop.f32.mrb[0].mxu0
    %2938 = vmatprep.mubr.f32.mxu0 0.0
    %2939 = vmatmul.mubr.f32.gmra.mrb[0].mxu0 %v2734
    %v2940 = vpop.f32.mrb[0].mxu0
    %v2941 = vadd.f32 0.0, %v2940
    %v2942 = vpop.f32.mrb[0].mxu0
    %2943 = vmatprep.mubr.f32.mxu0 0.0
    %2944 = vmatmul.mubr.f32.gmra.mrb[0].mxu0 %v2736
    %v2945 = vpop.f32.mrb[0].mxu0
    %v2946 = vadd.f32 0.0, %v2945
    %v2947 = vpop.f32.mrb[0].mxu0
    %2948 = vmatprep.mubr.f32.mxu0 0.0
    %2949 = vmatmul.mubr.f32.gmra.mrb[0].mxu0 %v2738
    %v2950 = vpop.f32.mrb[0].mxu0
    %v2951 = vadd.f32 0.0, %v2950
    %v2952 = vpop.f32.mrb[0].mxu0
    %2953 = vmatprep.mubr.f32.mxu0 0.0
    %2954 = vmatmul.mubr.f32.gmra.mrb[0].mxu0 %v2740
    %v2955 = vpop.f32.mrb[0].mxu0
    %v2956 = vadd.f32 0.0, %v2955
    %v2957 = vpop.f32.mrb[0].mxu0
    %2958 = vmatprep.mubr.f32.mxu0 0.0
    %2959 = vmatmul.mubr.f32.gmra.mrb[0].mxu0 %v2742
    %v2960 = vpop.f32.mrb[0].mxu0
    %v2961 = vadd.f32 0.0, %v2960
    %v2962 = vpop.f32.mrb[0].mxu0
    %2963 = vmatprep.mubr.f32.mxu0 0.0
    %2964 = vmatmul.mubr.f32.gmra.mrb[0].mxu0 %v2744
    %v2965 = vpop.f32.mrb[0].mxu0
    %v2966 = vadd.f32 0.0, %v2965
    %v2967 = vpop.f32.mrb[0].mxu0
    %2968 = vmatprep.mubr.f32.mxu0 0.0
    %2969 = vmatmul.mubr.f32.gmra.mrb[0].mxu0 %v2746
    %v2970 = vpop.f32.mrb[0].mxu0
    %v2971 = vadd.f32 0.0, %v2970
    %v2972 = vpop.f32.mrb[0].mxu0
    %2973 = vmatprep.mubr.f32.mxu0 0.0
    %2974 = vmatmul.mubr.f32.gmra.mrb[0].mxu0 %v2748
    %v2975 = vpop.f32.mrb[0].mxu0
    %v2976 = vadd.f32 0.0, %v2975
    %v2977 = vpop.f32.mrb[0].mxu0
    %2978 = vdwg.mxu0
    %v2979 = vmul.f32 %v2901, %v2797
    %v2980 = vmul.f32 %v2906, %v2798
    %v2981 = vmul.f32 %v2911, %v2799
    %v2982 = vmul.f32 %v2916, %v2800
    %v2983 = vmul.f32 %v2921, %v2801
    %v2984 = vmul.f32 %v2926, %v2802
    %v2985 = vmul.f32 %v2931, %v2803
    %v2986 = vmul.f32 %v2936, %v2804
    %v2987 = vmul.f32 %v2941, %v2805
    %v2988 = vmul.f32 %v2946, %v2806
    %v2989 = vmul.f32 %v2951, %v2807
    %v2990 = vmul.f32 %v2956, %v2808
    %v2991 = vmul.f32 %v2961, %v2809
    %v2992 = vmul.f32 %v2966, %v2810
    %v2993 = vmul.f32 %v2971, %v2811
    %v2994 = vmul.f32 %v2976, %v2812
    %v2995 = vadd.f32 %v2389, %v2979
    %v2996 = vadd.f32 %v2390, %v2980
    %v2997 = vadd.f32 %v2391, %v2981
    %v2998 = vadd.f32 %v2392, %v2982
    %v2999 = vadd.f32 %v2393, %v2983
    %v3000 = vadd.f32 %v2394, %v2984
    %v3001 = vadd.f32 %v2395, %v2985
    %v3002 = vadd.f32 %v2396, %v2986
    %v3003 = vadd.f32 %v2397, %v2987
    %v3004 = vadd.f32 %v2398, %v2988
    %v3005 = vadd.f32 %v2399, %v2989
    %v3006 = vadd.f32 %v2400, %v2990
    %v3007 = vadd.f32 %v2401, %v2991
    %v3008 = vadd.f32 %v2402, %v2992
    %v3009 = vadd.f32 %v2403, %v2993
    %v3010 = vadd.f32 %v2404, %v2994
    %v3012 = vlaneseq
    %v3013 = vshrl.u32 %v3012, 7
    %v3014 = vsub.s32 0, %v3013
    %v3015 = vrot.slane %v178, %v3014
    %v3017 = vadd.f32 %v2995, %v3015
    %v3018 = vadd.f32 %v2996, %v3015
    %v3019 = vadd.f32 %v2997, %v3015
    %v3020 = vadd.f32 %v2998, %v3015
    %v3021 = vadd.f32 %v2999, %v3015
    %v3022 = vadd.f32 %v3000, %v3015
    %v3023 = vadd.f32 %v3001, %v3015
    %v3024 = vadd.f32 %v3002, %v3015
    %v3025 = vadd.f32 %v3003, %v3015
    %v3026 = vadd.f32 %v3004, %v3015
    %v3027 = vadd.f32 %v3005, %v3015
    %v3028 = vadd.f32 %v3006, %v3015
    %v3029 = vadd.f32 %v3007, %v3015
    %v3030 = vadd.f32 %v3008, %v3015
    %v3031 = vadd.f32 %v3009, %v3015
    %v3032 = vadd.f32 %v3010, %v3015
    %v3033 = vmax.f32 %v3017, 0.0
    %v3034 = vmax.f32 %v3018, 0.0
    %v3035 = vmax.f32 %v3019, 0.0
    %v3036 = vmax.f32 %v3020, 0.0
    %v3037 = vmax.f32 %v3021, 0.0
    %v3038 = vmax.f32 %v3022, 0.0
    %v3039 = vmax.f32 %v3023, 0.0
    %v3040 = vmax.f32 %v3024, 0.0
    %v3041 = vmax.f32 %v3025, 0.0
    %v3042 = vmax.f32 %v3026, 0.0
    %v3043 = vmax.f32 %v3027, 0.0
    %v3044 = vmax.f32 %v3028, 0.0
    %v3045 = vmax.f32 %v3029, 0.0
    %v3046 = vmax.f32 %v3030, 0.0
    %v3047 = vmax.f32 %v3031, 0.0
    %v3048 = vmax.f32 %v3032, 0.0
    %v3049 = vld [vmem:[#allocation8] sm:$0xff]
    %v3050 = vld [vmem:[#allocation8 + $0x8] sm:$0xff]
    %v3051 = vld [vmem:[#allocation8 + $0x10] sm:$0xff]
    %v3052 = vld [vmem:[#allocation8 + $0x18] sm:$0xff]
    %v3053 = vld [vmem:[#allocation8 + $0x20] sm:$0xff]
    %v3054 = vld [vmem:[#allocation8 + $0x28] sm:$0xff]
    %v3055 = vld [vmem:[#allocation8 + $0x30] sm:$0xff]
    %v3056 = vld [vmem:[#allocation8 + $0x38] sm:$0xff]
    %v3057 = vld [vmem:[#allocation8 + $0x40] sm:$0xff]
    %v3058 = vld [vmem:[#allocation8 + $0x48] sm:$0xff]
    %v3059 = vld [vmem:[#allocation8 + $0x50] sm:$0xff]
    %v3060 = vld [vmem:[#allocation8 + $0x58] sm:$0xff]
    %v3061 = vld [vmem:[#allocation8 + $0x60] sm:$0xff]
    %v3062 = vld [vmem:[#allocation8 + $0x68] sm:$0xff]
    %v3063 = vld [vmem:[#allocation8 + $0x70] sm:$0xff]
    %v3064 = vld [vmem:[#allocation8 + $0x78] sm:$0xff]
    %v3065 = vld [vmem:[#allocation8 + $0x80] sm:$0xff]
    %v3066 = vld [vmem:[#allocation8 + $0x88] sm:$0xff]
    %v3067 = vld [vmem:[#allocation8 + $0x90] sm:$0xff]
    %v3068 = vld [vmem:[#allocation8 + $0x98] sm:$0xff]
    %v3069 = vld [vmem:[#allocation8 + $0xa0] sm:$0xff]
    %v3070 = vld [vmem:[#allocation8 + $0xa8] sm:$0xff]
    %v3071 = vld [vmem:[#allocation8 + $0xb0] sm:$0xff]
    %v3072 = vld [vmem:[#allocation8 + $0xb8] sm:$0xff]
    %v3073 = vld [vmem:[#allocation8 + $0xc0] sm:$0xff]
    %v3074 = vld [vmem:[#allocation8 + $0xc8] sm:$0xff]
    %v3075 = vld [vmem:[#allocation8 + $0xd0] sm:$0xff]
    %v3076 = vld [vmem:[#allocation8 + $0xd8] sm:$0xff]
    %v3077 = vld [vmem:[#allocation8 + $0xe0] sm:$0xff]
    %v3078 = vld [vmem:[#allocation8 + $0xe8] sm:$0xff]
    %v3079 = vld [vmem:[#allocation8 + $0xf0] sm:$0xff]
    %v3080 = vld [vmem:[#allocation8 + $0xf8] sm:$0xff]
    %v3081 = vld [vmem:[#allocation8 + $0x100] sm:$0xff]
    %v3082 = vld [vmem:[#allocation8 + $0x108] sm:$0xff]
    %v3083 = vld [vmem:[#allocation8 + $0x110] sm:$0xff]
    %v3084 = vld [vmem:[#allocation8 + $0x118] sm:$0xff]
    %v3085 = vld [vmem:[#allocation8 + $0x120] sm:$0xff]
    %v3086 = vld [vmem:[#allocation8 + $0x128] sm:$0xff]
    %v3087 = vld [vmem:[#allocation8 + $0x130] sm:$0xff]
    %v3088 = vld [vmem:[#allocation8 + $0x138] sm:$0xff]
    %v3089 = vld [vmem:[#allocation8 + $0x140] sm:$0xff]
    %v3090 = vld [vmem:[#allocation8 + $0x148] sm:$0xff]
    %v3091 = vld [vmem:[#allocation8 + $0x150] sm:$0xff]
    %v3092 = vld [vmem:[#allocation8 + $0x158] sm:$0xff]
    %v3093 = vld [vmem:[#allocation8 + $0x160] sm:$0xff]
    %v3094 = vld [vmem:[#allocation8 + $0x168] sm:$0xff]
    %v3095 = vld [vmem:[#allocation8 + $0x170] sm:$0xff]
    %v3096 = vld [vmem:[#allocation8 + $0x178] sm:$0xff]
    %v3097 = vld [vmem:[%s5] sm:$0x1]
    %3098 = vmatprep.subr.mxu0 %v3050
    %3099 = vmatpush1.msra.mxu0 %v3049
    %3100 = vmatprep.subr.mxu0 %v3053
    %3101 = vmatpush1.msra.mxu0 %v3052
    %3102 = vmatprep.subr.mxu0 %v3056
    %3103 = vmatpush1.msra.mxu0 %v3055
    %3104 = vmatprep.subr.mxu0 %v3059
    %3105 = vmatpush1.msra.mxu0 %v3058
    %3106 = vmatprep.subr.mxu0 %v3062
    %3107 = vmatpush1.msra.mxu0 %v3061
    %3108 = vmatprep.subr.mxu0 %v3065
    %3109 = vmatpush1.msra.mxu0 %v3064
    %3110 = vmatprep.subr.mxu0 %v3068
    %3111 = vmatpush1.msra.mxu0 %v3067
    %3112 = vmatprep.subr.mxu0 %v3071
    %3113 = vmatpush1.msra.mxu0 %v3070
    %3114 = vmatprep.subr.mxu0 %v3074
    %3115 = vmatpush1.msra.mxu0 %v3073
    %3116 = vmatprep.subr.mxu0 %v3077
    %3117 = vmatpush1.msra.mxu0 %v3076
    %3118 = vmatprep.subr.mxu0 %v3080
    %3119 = vmatpush1.msra.mxu0 %v3079
    %3120 = vmatprep.subr.mxu0 %v3083
    %3121 = vmatpush1.msra.mxu0 %v3082
    %3122 = vmatprep.subr.mxu0 %v3086
    %3123 = vmatpush1.msra.mxu0 %v3085
    %3124 = vmatprep.subr.mxu0 %v3089
    %3125 = vmatpush1.msra.mxu0 %v3088
    %3126 = vmatprep.subr.mxu0 %v3092
    %3127 = vmatpush1.msra.mxu0 %v3091
    %3128 = vmatprep.subr.mxu0 %v3095
    %3129 = vmatpush1.msra.mxu0 %v3094
    %3130 = vmatprep.subr.mxu0 0.0
    %3131 = vmatpush1.msra.mxu0 0.0
    %3132 = vmatprep.subr.mxu0 0.0
    %3133 = vmatpush1.msra.mxu0 0.0
    %3134 = vmatprep.subr.mxu0 0.0
    %3135 = vmatpush1.msra.mxu0 0.0
    %3136 = vmatprep.subr.mxu0 0.0
    %3137 = vmatpush1.msra.mxu0 0.0
    %3138 = vmatprep.subr.mxu0 0.0
    %3139 = vmatpush1.msra.mxu0 0.0
    %3140 = vmatprep.subr.mxu0 0.0
    %3141 = vmatpush1.msra.mxu0 0.0
    %3142 = vmatprep.subr.mxu0 0.0
    %3143 = vmatpush1.msra.mxu0 0.0
    %3144 = vmatprep.subr.mxu0 0.0
    %3145 = vmatpush1.msra.mxu0 0.0
    %3146 = vmatprep.subr.mxu0 0.0
    %3147 = vmatpush1.msra.mxu0 0.0
    %3148 = vmatprep.subr.mxu0 0.0
    %3149 = vmatpush1.msra.mxu0 0.0
    %3150 = vmatprep.subr.mxu0 0.0
    %3151 = vmatpush1.msra.mxu0 0.0
    %3152 = vmatprep.subr.mxu0 0.0
    %3153 = vmatpush1.msra.mxu0 0.0
    %3154 = vmatprep.subr.mxu0 0.0
    %3155 = vmatpush1.msra.mxu0 0.0
    %3156 = vmatprep.subr.mxu0 0.0
    %3157 = vmatpush1.msra.mxu0 0.0
    %3158 = vmatprep.subr.mxu0 0.0
    %3159 = vmatpush1.msra.mxu0 0.0
    %3160 = vmatprep.subr.mxu0 0.0
    %3161 = vmatpush1.msra.mxu0 0.0
    %3162 = vmatprep.mubr.f32.mxu0 0.0
    %3163 = vmatmul.mubr.f32.gmra.mrb[0].mxu0 %v3033
    %v3164 = vpop.f32.mrb[0].mxu0
    %v3165 = vadd.f32 0.0, %v3164
    %v3166 = vpop.f32.mrb[0].mxu0
    %v3167 = vadd.f32 0.0, %v3166
    %3168 = vmatprep.mubr.f32.mxu0 0.0
    %3169 = vmatmul.mubr.f32.gmra.mrb[0].mxu0 %v3034
    %v3170 = vpop.f32.mrb[0].mxu0
    %v3171 = vadd.f32 0.0, %v3170
    %v3172 = vpop.f32.mrb[0].mxu0
    %v3173 = vadd.f32 0.0, %v3172
    %3174 = vmatprep.mubr.f32.mxu0 0.0
    %3175 = vmatmul.mubr.f32.gmra.mrb[0].mxu0 %v3035
    %v3176 = vpop.f32.mrb[0].mxu0
    %v3177 = vadd.f32 0.0, %v3176
    %v3178 = vpop.f32.mrb[0].mxu0
    %v3179 = vadd.f32 0.0, %v3178
    %3180 = vmatprep.mubr.f32.mxu0 0.0
    %3181 = vmatmul.mubr.f32.gmra.mrb[0].mxu0 %v3036
    %v3182 = vpop.f32.mrb[0].mxu0
    %v3183 = vadd.f32 0.0, %v3182
    %v3184 = vpop.f32.mrb[0].mxu0
    %v3185 = vadd.f32 0.0, %v3184
    %3186 = vmatprep.mubr.f32.mxu0 0.0
    %3187 = vmatmul.mubr.f32.gmra.mrb[0].mxu0 %v3037
    %v3188 = vpop.f32.mrb[0].mxu0
    %v3189 = vadd.f32 0.0, %v3188
    %v3190 = vpop.f32.mrb[0].mxu0
    %v3191 = vadd.f32 0.0, %v3190
    %3192 = vmatprep.mubr.f32.mxu0 0.0
    %3193 = vmatmul.mubr.f32.gmra.mrb[0].mxu0 %v3038
    %v3194 = vpop.f32.mrb[0].mxu0
    %v3195 = vadd.f32 0.0, %v3194
    %v3196 = vpop.f32.mrb[0].mxu0
    %v3197 = vadd.f32 0.0, %v3196
    %3198 = vmatprep.mubr.f32.mxu0 0.0
    %3199 = vmatmul.mubr.f32.gmra.mrb[0].mxu0 %v3039
    %v3200 = vpop.f32.mrb[0].mxu0
    %v3201 = vadd.f32 0.0, %v3200
    %v3202 = vpop.f32.mrb[0].mxu0
    %v3203 = vadd.f32 0.0, %v3202
    %3204 = vmatprep.mubr.f32.mxu0 0.0
    %3205 = vmatmul.mubr.f32.gmra.mrb[0].mxu0 %v3040
    %v3206 = vpop.f32.mrb[0].mxu0
    %v3207 = vadd.f32 0.0, %v3206
    %v3208 = vpop.f32.mrb[0].mxu0
    %v3209 = vadd.f32 0.0, %v3208
    %3210 = vmatprep.mubr.f32.mxu0 0.0
    %3211 = vmatmul.mubr.f32.gmra.mrb[0].mxu0 %v3041
    %v3212 = vpop.f32.mrb[0].mxu0
    %v3213 = vadd.f32 0.0, %v3212
    %v3214 = vpop.f32.mrb[0].mxu0
    %v3215 = vadd.f32 0.0, %v3214
    %3216 = vmatprep.mubr.f32.mxu0 0.0
    %3217 = vmatmul.mubr.f32.gmra.mrb[0].mxu0 %v3042
    %v3218 = vpop.f32.mrb[0].mxu0
    %v3219 = vadd.f32 0.0, %v3218
    %v3220 = vpop.f32.mrb[0].mxu0
    %v3221 = vadd.f32 0.0, %v3220
    %3222 = vmatprep.mubr.f32.mxu0 0.0
    %3223 = vmatmul.mubr.f32.gmra.mrb[0].mxu0 %v3043
    %v3224 = vpop.f32.mrb[0].mxu0
    %v3225 = vadd.f32 0.0, %v3224
    %v3226 = vpop.f32.mrb[0].mxu0
    %v3227 = vadd.f32 0.0, %v3226
    %3228 = vmatprep.mubr.f32.mxu0 0.0
    %3229 = vmatmul.mubr.f32.gmra.mrb[0].mxu0 %v3044
    %v3230 = vpop.f32.mrb[0].mxu0
    %v3231 = vadd.f32 0.0, %v3230
    %v3232 = vpop.f32.mrb[0].mxu0
    %v3233 = vadd.f32 0.0, %v3232
    %3234 = vmatprep.mubr.f32.mxu0 0.0
    %3235 = vmatmul.mubr.f32.gmra.mrb[0].mxu0 %v3045
    %v3236 = vpop.f32.mrb[0].mxu0
    %v3237 = vadd.f32 0.0, %v3236
    %v3238 = vpop.f32.mrb[0].mxu0
    %v3239 = vadd.f32 0.0, %v3238
    %3240 = vmatprep.mubr.f32.mxu0 0.0
    %3241 = vmatmul.mubr.f32.gmra.mrb[0].mxu0 %v3046
    %v3242 = vpop.f32.mrb[0].mxu0
    %v3243 = vadd.f32 0.0, %v3242
    %v3244 = vpop.f32.mrb[0].mxu0
    %v3245 = vadd.f32 0.0, %v3244
    %3246 = vmatprep.mubr.f32.mxu0 0.0
    %3247 = vmatmul.mubr.f32.gmra.mrb[0].mxu0 %v3047
    %v3248 = vpop.f32.mrb[0].mxu0
    %v3249 = vadd.f32 0.0, %v3248
    %v3250 = vpop.f32.mrb[0].mxu0
    %v3251 = vadd.f32 0.0, %v3250
    %3252 = vmatprep.mubr.f32.mxu0 0.0
    %3253 = vmatmul.mubr.f32.gmra.mrb[0].mxu0 %v3048
    %v3254 = vpop.f32.mrb[0].mxu0
    %v3255 = vadd.f32 0.0, %v3254
    %v3256 = vpop.f32.mrb[0].mxu0
    %v3257 = vadd.f32 0.0, %v3256
    %3258 = vdwg.mxu0
    %3259 = vmatprep.subr.mxu0 0.0
    %3260 = vmatpush1.msra.mxu0 %v3051
    %3261 = vmatprep.subr.mxu0 0.0
    %3262 = vmatpush1.msra.mxu0 %v3054
    %3263 = vmatprep.subr.mxu0 0.0
    %3264 = vmatpush1.msra.mxu0 %v3057
    %3265 = vmatprep.subr.mxu0 0.0
    %3266 = vmatpush1.msra.mxu0 %v3060
    %3267 = vmatprep.subr.mxu0 0.0
    %3268 = vmatpush1.msra.mxu0 %v3063
    %3269 = vmatprep.subr.mxu0 0.0
    %3270 = vmatpush1.msra.mxu0 %v3066
    %3271 = vmatprep.subr.mxu0 0.0
    %3272 = vmatpush1.msra.mxu0 %v3069
    %3273 = vmatprep.subr.mxu0 0.0
    %3274 = vmatpush1.msra.mxu0 %v3072
    %3275 = vmatprep.subr.mxu0 0.0
    %3276 = vmatpush1.msra.mxu0 %v3075
    %3277 = vmatprep.subr.mxu0 0.0
    %3278 = vmatpush1.msra.mxu0 %v3078
    %3279 = vmatprep.subr.mxu0 0.0
    %3280 = vmatpush1.msra.mxu0 %v3081
    %3281 = vmatprep.subr.mxu0 0.0
    %3282 = vmatpush1.msra.mxu0 %v3084
    %3283 = vmatprep.subr.mxu0 0.0
    %3284 = vmatpush1.msra.mxu0 %v3087
    %3285 = vmatprep.subr.mxu0 0.0
    %3286 = vmatpush1.msra.mxu0 %v3090
    %3287 = vmatprep.subr.mxu0 0.0
    %3288 = vmatpush1.msra.mxu0 %v3093
    %3289 = vmatprep.subr.mxu0 0.0
    %3290 = vmatpush1.msra.mxu0 %v3096
    %3291 = vmatprep.subr.mxu0 0.0
    %3292 = vmatpush1.msra.mxu0 0.0
    %3293 = vmatprep.subr.mxu0 0.0
    %3294 = vmatpush1.msra.mxu0 0.0
    %3295 = vmatprep.subr.mxu0 0.0
    %3296 = vmatpush1.msra.mxu0 0.0
    %3297 = vmatprep.subr.mxu0 0.0
    %3298 = vmatpush1.msra.mxu0 0.0
    %3299 = vmatprep.subr.mxu0 0.0
    %3300 = vmatpush1.msra.mxu0 0.0
    %3301 = vmatprep.subr.mxu0 0.0
    %3302 = vmatpush1.msra.mxu0 0.0
    %3303 = vmatprep.subr.mxu0 0.0
    %3304 = vmatpush1.msra.mxu0 0.0
    %3305 = vmatprep.subr.mxu0 0.0
    %3306 = vmatpush1.msra.mxu0 0.0
    %3307 = vmatprep.subr.mxu0 0.0
    %3308 = vmatpush1.msra.mxu0 0.0
    %3309 = vmatprep.subr.mxu0 0.0
    %3310 = vmatpush1.msra.mxu0 0.0
    %3311 = vmatprep.subr.mxu0 0.0
    %3312 = vmatpush1.msra.mxu0 0.0
    %3313 = vmatprep.subr.mxu0 0.0
    %3314 = vmatpush1.msra.mxu0 0.0
    %3315 = vmatprep.subr.mxu0 0.0
    %3316 = vmatpush1.msra.mxu0 0.0
    %3317 = vmatprep.subr.mxu0 0.0
    %3318 = vmatpush1.msra.mxu0 0.0
    %3319 = vmatprep.subr.mxu0 0.0
    %3320 = vmatpush1.msra.mxu0 0.0
    %3321 = vmatprep.subr.mxu0 0.0
    %3322 = vmatpush1.msra.mxu0 0.0
    %3323 = vmatprep.mubr.f32.mxu0 0.0
    %3324 = vmatmul.mubr.f32.gmra.mrb[0].mxu0 %v3033
    %v3325 = vpop.f32.mrb[0].mxu0
    %v3326 = vadd.f32 0.0, %v3325
    %v3327 = vpop.f32.mrb[0].mxu0
    %3328 = vmatprep.mubr.f32.mxu0 0.0
    %3329 = vmatmul.mubr.f32.gmra.mrb[0].mxu0 %v3034
    %v3330 = vpop.f32.mrb[0].mxu0
    %v3331 = vadd.f32 0.0, %v3330
    %v3332 = vpop.f32.mrb[0].mxu0
    %3333 = vmatprep.mubr.f32.mxu0 0.0
    %3334 = vmatmul.mubr.f32.gmra.mrb[0].mxu0 %v3035
    %v3335 = vpop.f32.mrb[0].mxu0
    %v3336 = vadd.f32 0.0, %v3335
    %v3337 = vpop.f32.mrb[0].mxu0
    %3338 = vmatprep.mubr.f32.mxu0 0.0
    %3339 = vmatmul.mubr.f32.gmra.mrb[0].mxu0 %v3036
    %v3340 = vpop.f32.mrb[0].mxu0
    %v3341 = vadd.f32 0.0, %v3340
    %v3342 = vpop.f32.mrb[0].mxu0
    %3343 = vmatprep.mubr.f32.mxu0 0.0
    %3344 = vmatmul.mubr.f32.gmra.mrb[0].mxu0 %v3037
    %v3345 = vpop.f32.mrb[0].mxu0
    %v3346 = vadd.f32 0.0, %v3345
    %v3347 = vpop.f32.mrb[0].mxu0
    %3348 = vmatprep.mubr.f32.mxu0 0.0
    %3349 = vmatmul.mubr.f32.gmra.mrb[0].mxu0 %v3038
    %v3350 = vpop.f32.mrb[0].mxu0
    %v3351 = vadd.f32 0.0, %v3350
    %v3352 = vpop.f32.mrb[0].mxu0
    %3353 = vmatprep.mubr.f32.mxu0 0.0
    %3354 = vmatmul.mubr.f32.gmra.mrb[0].mxu0 %v3039
    %v3355 = vpop.f32.mrb[0].mxu0
    %v3356 = vadd.f32 0.0, %v3355
    %v3357 = vpop.f32.mrb[0].mxu0
    %3358 = vmatprep.mubr.f32.mxu0 0.0
    %3359 = vmatmul.mubr.f32.gmra.mrb[0].mxu0 %v3040
    %v3360 = vpop.f32.mrb[0].mxu0
    %v3361 = vadd.f32 0.0, %v3360
    %v3362 = vpop.f32.mrb[0].mxu0
    %3363 = vmatprep.mubr.f32.mxu0 0.0
    %3364 = vmatmul.mubr.f32.gmra.mrb[0].mxu0 %v3041
    %v3365 = vpop.f32.mrb[0].mxu0
    %v3366 = vadd.f32 0.0, %v3365
    %v3367 = vpop.f32.mrb[0].mxu0
    %3368 = vmatprep.mubr.f32.mxu0 0.0
    %3369 = vmatmul.mubr.f32.gmra.mrb[0].mxu0 %v3042
    %v3370 = vpop.f32.mrb[0].mxu0
    %v3371 = vadd.f32 0.0, %v3370
    %v3372 = vpop.f32.mrb[0].mxu0
    %3373 = vmatprep.mubr.f32.mxu0 0.0
    %3374 = vmatmul.mubr.f32.gmra.mrb[0].mxu0 %v3043
    %v3375 = vpop.f32.mrb[0].mxu0
    %v3376 = vadd.f32 0.0, %v3375
    %v3377 = vpop.f32.mrb[0].mxu0
    %3378 = vmatprep.mubr.f32.mxu0 0.0
    %3379 = vmatmul.mubr.f32.gmra.mrb[0].mxu0 %v3044
    %v3380 = vpop.f32.mrb[0].mxu0
    %v3381 = vadd.f32 0.0, %v3380
    %v3382 = vpop.f32.mrb[0].mxu0
    %3383 = vmatprep.mubr.f32.mxu0 0.0
    %3384 = vmatmul.mubr.f32.gmra.mrb[0].mxu0 %v3045
    %v3385 = vpop.f32.mrb[0].mxu0
    %v3386 = vadd.f32 0.0, %v3385
    %v3387 = vpop.f32.mrb[0].mxu0
    %3388 = vmatprep.mubr.f32.mxu0 0.0
    %3389 = vmatmul.mubr.f32.gmra.mrb[0].mxu0 %v3046
    %v3390 = vpop.f32.mrb[0].mxu0
    %v3391 = vadd.f32 0.0, %v3390
    %v3392 = vpop.f32.mrb[0].mxu0
    %3393 = vmatprep.mubr.f32.mxu0 0.0
    %3394 = vmatmul.mubr.f32.gmra.mrb[0].mxu0 %v3047
    %v3395 = vpop.f32.mrb[0].mxu0
    %v3396 = vadd.f32 0.0, %v3395
    %v3397 = vpop.f32.mrb[0].mxu0
    %3398 = vmatprep.mubr.f32.mxu0 0.0
    %3399 = vmatmul.mubr.f32.gmra.mrb[0].mxu0 %v3048
    %v3400 = vpop.f32.mrb[0].mxu0
    %v3401 = vadd.f32 0.0, %v3400
    %v3402 = vpop.f32.mrb[0].mxu0
    %3403 = vdwg.mxu0
    %3404 = vxpose.xlu0.b32.start [1/16] %v3167, 128
    %3405 = vxpose.xlu0.b32.cont [2/16] %v3173, 128
    %3406 = vxpose.xlu0.b32.cont [3/16] %v3179, 128
    %3407 = vxpose.xlu0.b32.cont [4/16] %v3185, 128
    %3408 = vxpose.xlu0.b32.cont [5/16] %v3191, 128
    %3409 = vxpose.xlu0.b32.cont [6/16] %v3197, 128
    %3410 = vxpose.xlu0.b32.cont [7/16] %v3203, 128
    %3411 = vxpose.xlu0.b32.cont [8/16] %v3209, 128
    %3412 = vxpose.xlu0.b32.cont [9/16] %v3215, 128
    %3413 = vxpose.xlu0.b32.cont [10/16] %v3221, 128
    %3414 = vxpose.xlu0.b32.cont [11/16] %v3227, 128
    %3415 = vxpose.xlu0.b32.cont [12/16] %v3233, 128
    %3416 = vxpose.xlu0.b32.cont [13/16] %v3239, 128
    %3417 = vxpose.xlu0.b32.cont [14/16] %v3245, 128
    %3418 = vxpose.xlu0.b32.cont [15/16] %v3251, 128
    %3419 = vxpose.xlu0.b32.end [16/16] %v3257, 128
    %v3420 = vpop.trf.xlu0
    %v3421 = vpop.trf.xlu0
    %v3422 = vpop.trf.xlu0
    %v3423 = vpop.trf.xlu0
    %v3424 = vpop.trf.xlu0
    %v3425 = vpop.trf.xlu0
    %v3426 = vpop.trf.xlu0
    %v3427 = vpop.trf.xlu0
    %v3428 = vpop.trf.xlu0
    %v3429 = vpop.trf.xlu0
    %v3430 = vpop.trf.xlu0
    %v3431 = vpop.trf.xlu0
    %v3432 = vpop.trf.xlu0
    %v3433 = vpop.trf.xlu0
    %v3434 = vpop.trf.xlu0
    %v3435 = vpop.trf.xlu0
    %vm3436 = vcmask 1040384
    %v3437 = vsel %vm3436, %v3420, -inf
    %3438 = vmax.xlane.f32.xlu0 %v3437
    %v3439 = vpop.xlane.xlu0 %3438
    %3441 = vset.pattern.permute.xlu0 0
    %3442 = vperm.xlu0 %3441, %v3326
    %v3443 = vpop.permute.xlu0 %3442
    %3446 = vset.pattern.permute.xlu0 0
    %3447 = vperm.xlu0 %3446, %v3331
    %v3448 = vpop.permute.xlu0 %3447
    %3451 = vset.pattern.permute.xlu0 0
    %3452 = vperm.xlu0 %3451, %v3336
    %v3453 = vpop.permute.xlu0 %3452
    %3456 = vset.pattern.permute.xlu0 0
    %3457 = vperm.xlu0 %3456, %v3341
    %v3458 = vpop.permute.xlu0 %3457
    %3461 = vset.pattern.permute.xlu0 0
    %3462 = vperm.xlu0 %3461, %v3346
    %v3463 = vpop.permute.xlu0 %3462
    %3466 = vset.pattern.permute.xlu0 0
    %3467 = vperm.xlu0 %3466, %v3351
    %v3468 = vpop.permute.xlu0 %3467
    %3471 = vset.pattern.permute.xlu0 0
    %3472 = vperm.xlu0 %3471, %v3356
    %v3473 = vpop.permute.xlu0 %3472
    %3476 = vset.pattern.permute.xlu0 0
    %3477 = vperm.xlu0 %3476, %v3361
    %v3478 = vpop.permute.xlu0 %3477
    %3481 = vset.pattern.permute.xlu0 0
    %3482 = vperm.xlu0 %3481, %v3366
    %v3483 = vpop.permute.xlu0 %3482
    %3486 = vset.pattern.permute.xlu0 0
    %3487 = vperm.xlu0 %3486, %v3371
    %v3488 = vpop.permute.xlu0 %3487
    %3491 = vset.pattern.permute.xlu0 0
    %3492 = vperm.xlu0 %3491, %v3376
    %v3493 = vpop.permute.xlu0 %3492
    %3496 = vset.pattern.permute.xlu0 0
    %3497 = vperm.xlu0 %3496, %v3381
    %v3498 = vpop.permute.xlu0 %3497
    %3501 = vset.pattern.permute.xlu0 0
    %3502 = vperm.xlu0 %3501, %v3386
    %v3503 = vpop.permute.xlu0 %3502
    %3506 = vset.pattern.permute.xlu0 0
    %3507 = vperm.xlu0 %3506, %v3391
    %v3508 = vpop.permute.xlu0 %3507
    %3511 = vset.pattern.permute.xlu0 0
    %3512 = vperm.xlu0 %3511, %v3396
    %v3513 = vpop.permute.xlu0 %3512
    %3516 = vset.pattern.permute.xlu0 0
    %3517 = vperm.xlu0 %3516, %v3401
    %v3518 = vpop.permute.xlu0 %3517
    %v3520 = vlaneseq
    %v3521 = vshrl.u32 %v3520, 7
    %v3522 = vsub.s32 0, %v3521
    %v3523 = vrot.slane %v3420, %v3522
    %v3524 = vadd.f32 %v3443, %v3523
    %v3525 = vadd.f32 %v3448, %v3523
    %v3526 = vadd.f32 %v3453, %v3523
    %v3527 = vadd.f32 %v3458, %v3523
    %v3528 = vadd.f32 %v3463, %v3523
    %v3529 = vadd.f32 %v3468, %v3523
    %v3530 = vadd.f32 %v3473, %v3523
    %v3531 = vadd.f32 %v3478, %v3523
    %v3532 = vadd.f32 %v3483, %v3523
    %v3533 = vadd.f32 %v3488, %v3523
    %v3534 = vadd.f32 %v3493, %v3523
    %v3535 = vadd.f32 %v3498, %v3523
    %v3536 = vadd.f32 %v3503, %v3523
    %v3537 = vadd.f32 %v3508, %v3523
    %v3538 = vadd.f32 %v3513, %v3523
    %v3539 = vadd.f32 %v3518, %v3523
    %vm3540 = vcmp.gt.f32.partialorder %v3524, 0.0
    %vm3541 = vcmp.gt.f32.partialorder %v3525, 0.0
    %vm3542 = vcmp.gt.f32.partialorder %v3526, 0.0
    %vm3543 = vcmp.gt.f32.partialorder %v3527, 0.0
    %vm3544 = vcmp.gt.f32.partialorder %v3528, 0.0
    %vm3545 = vcmp.gt.f32.partialorder %v3529, 0.0
    %vm3546 = vcmp.gt.f32.partialorder %v3530, 0.0
    %vm3547 = vcmp.gt.f32.partialorder %v3531, 0.0
    %vm3548 = vcmp.gt.f32.partialorder %v3532, 0.0
    %vm3549 = vcmp.gt.f32.partialorder %v3533, 0.0
    %vm3550 = vcmp.gt.f32.partialorder %v3534, 0.0
    %vm3551 = vcmp.gt.f32.partialorder %v3535, 0.0
    %vm3552 = vcmp.gt.f32.partialorder %v3536, 0.0
    %vm3553 = vcmp.gt.f32.partialorder %v3537, 0.0
    %vm3554 = vcmp.gt.f32.partialorder %v3538, 0.0
    %vm3555 = vcmp.gt.f32.partialorder %v3539, 0.0
    %v3556 = vmul.f32 %v3524, 0.2
    %v3557 = vmul.f32 %v3525, 0.2
    %v3558 = vmul.f32 %v3526, 0.2
    %v3559 = vmul.f32 %v3527, 0.2
    %v3560 = vmul.f32 %v3528, 0.2
    %v3561 = vmul.f32 %v3529, 0.2
    %v3562 = vmul.f32 %v3530, 0.2
    %v3563 = vmul.f32 %v3531, 0.2
    %v3564 = vmul.f32 %v3532, 0.2
    %v3565 = vmul.f32 %v3533, 0.2
    %v3566 = vmul.f32 %v3534, 0.2
    %v3567 = vmul.f32 %v3535, 0.2
    %v3568 = vmul.f32 %v3536, 0.2
    %v3569 = vmul.f32 %v3537, 0.2
    %v3570 = vmul.f32 %v3538, 0.2
    %v3571 = vmul.f32 %v3539, 0.2
    %v3572 = vsel %vm3540, %v3524, %v3556
    %v3573 = vsel %vm3541, %v3525, %v3557
    %v3574 = vsel %vm3542, %v3526, %v3558
    %v3575 = vsel %vm3543, %v3527, %v3559
    %v3576 = vsel %vm3544, %v3528, %v3560
    %v3577 = vsel %vm3545, %v3529, %v3561
    %v3578 = vsel %vm3546, %v3530, %v3562
    %v3579 = vsel %vm3547, %v3531, %v3563
    %v3580 = vsel %vm3548, %v3532, %v3564
    %v3581 = vsel %vm3549, %v3533, %v3565
    %v3582 = vsel %vm3550, %v3534, %v3566
    %v3583 = vsel %vm3551, %v3535, %v3567
    %v3584 = vsel %vm3552, %v3536, %v3568
    %v3585 = vsel %vm3553, %v3537, %v3569
    %v3586 = vsel %vm3554, %v3538, %v3570
    %v3587 = vsel %vm3555, %v3539, %v3571
    %v3588 = vlaneseq
    %v3589 = vshrl.u32 %v3588, 7
    %v3590 = vsub.s32 0, %v3589
    %v3591 = vrot.slane %v3439, %v3590
    %v3592 = vadd.f32 %v3326, %v3591
    %v3593 = vadd.f32 %v3331, %v3591
    %v3594 = vadd.f32 %v3336, %v3591
    %v3595 = vadd.f32 %v3341, %v3591
    %v3596 = vadd.f32 %v3346, %v3591
    %v3597 = vadd.f32 %v3351, %v3591
    %v3598 = vadd.f32 %v3356, %v3591
    %v3599 = vadd.f32 %v3361, %v3591
    %v3600 = vadd.f32 %v3366, %v3591
    %v3601 = vadd.f32 %v3371, %v3591
    %v3602 = vadd.f32 %v3376, %v3591
    %v3603 = vadd.f32 %v3381, %v3591
    %v3604 = vadd.f32 %v3386, %v3591
    %v3605 = vadd.f32 %v3391, %v3591
    %v3606 = vadd.f32 %v3396, %v3591
    %v3607 = vadd.f32 %v3401, %v3591
    %vm3608 = vcmp.gt.f32.partialorder %v3592, 0.0
    %vm3609 = vcmp.gt.f32.partialorder %v3593, 0.0
    %vm3610 = vcmp.gt.f32.partialorder %v3594, 0.0
    %vm3611 = vcmp.gt.f32.partialorder %v3595, 0.0
    %vm3612 = vcmp.gt.f32.partialorder %v3596, 0.0
    %vm3613 = vcmp.gt.f32.partialorder %v3597, 0.0
    %vm3614 = vcmp.gt.f32.partialorder %v3598, 0.0
    %vm3615 = vcmp.gt.f32.partialorder %v3599, 0.0
    %vm3616 = vcmp.gt.f32.partialorder %v3600, 0.0
    %vm3617 = vcmp.gt.f32.partialorder %v3601, 0.0
    %vm3618 = vcmp.gt.f32.partialorder %v3602, 0.0
    %vm3619 = vcmp.gt.f32.partialorder %v3603, 0.0
    %vm3620 = vcmp.gt.f32.partialorder %v3604, 0.0
    %vm3621 = vcmp.gt.f32.partialorder %v3605, 0.0
    %vm3622 = vcmp.gt.f32.partialorder %v3606, 0.0
    %vm3623 = vcmp.gt.f32.partialorder %v3607, 0.0
    %v3624 = vmul.f32 %v3592, 0.2
    %v3625 = vmul.f32 %v3593, 0.2
    %v3626 = vmul.f32 %v3594, 0.2
    %v3627 = vmul.f32 %v3595, 0.2
    %v3628 = vmul.f32 %v3596, 0.2
    %v3629 = vmul.f32 %v3597, 0.2
    %v3630 = vmul.f32 %v3598, 0.2
    %v3631 = vmul.f32 %v3599, 0.2
    %v3632 = vmul.f32 %v3600, 0.2
    %v3633 = vmul.f32 %v3601, 0.2
    %v3634 = vmul.f32 %v3602, 0.2
    %v3635 = vmul.f32 %v3603, 0.2
    %v3636 = vmul.f32 %v3604, 0.2
    %v3637 = vmul.f32 %v3605, 0.2
    %v3638 = vmul.f32 %v3606, 0.2
    %v3639 = vmul.f32 %v3607, 0.2
    %v3640 = vsel %vm3608, %v3592, %v3624
    %v3641 = vsel %vm3609, %v3593, %v3625
    %v3642 = vsel %vm3610, %v3594, %v3626
    %v3643 = vsel %vm3611, %v3595, %v3627
    %v3644 = vsel %vm3612, %v3596, %v3628
    %v3645 = vsel %vm3613, %v3597, %v3629
    %v3646 = vsel %vm3614, %v3598, %v3630
    %v3647 = vsel %vm3615, %v3599, %v3631
    %v3648 = vsel %vm3616, %v3600, %v3632
    %v3649 = vsel %vm3617, %v3601, %v3633
    %v3650 = vsel %vm3618, %v3602, %v3634
    %v3651 = vsel %vm3619, %v3603, %v3635
    %v3652 = vsel %vm3620, %v3604, %v3636
    %v3653 = vsel %vm3621, %v3605, %v3637
    %v3654 = vsel %vm3622, %v3606, %v3638
    %v3655 = vsel %vm3623, %v3607, %v3639
    %3657 = vset.pattern.permute.xlu0 0
    %3658 = vperm.xlu0 %3657, %v3640
    %v3659 = vpop.permute.xlu0 %3658
    %3662 = vset.pattern.permute.xlu0 0
    %3663 = vperm.xlu0 %3662, %v3641
    %v3664 = vpop.permute.xlu0 %3663
    %3667 = vset.pattern.permute.xlu0 0
    %3668 = vperm.xlu0 %3667, %v3642
    %v3669 = vpop.permute.xlu0 %3668
    %3672 = vset.pattern.permute.xlu0 0
    %3673 = vperm.xlu0 %3672, %v3643
    %v3674 = vpop.permute.xlu0 %3673
    %3677 = vset.pattern.permute.xlu0 0
    %3678 = vperm.xlu0 %3677, %v3644
    %v3679 = vpop.permute.xlu0 %3678
    %3682 = vset.pattern.permute.xlu0 0
    %3683 = vperm.xlu0 %3682, %v3645
    %v3684 = vpop.permute.xlu0 %3683
    %3687 = vset.pattern.permute.xlu0 0
    %3688 = vperm.xlu0 %3687, %v3646
    %v3689 = vpop.permute.xlu0 %3688
    %3692 = vset.pattern.permute.xlu0 0
    %3693 = vperm.xlu0 %3692, %v3647
    %v3694 = vpop.permute.xlu0 %3693
    %3697 = vset.pattern.permute.xlu0 0
    %3698 = vperm.xlu0 %3697, %v3648
    %v3699 = vpop.permute.xlu0 %3698
    %3702 = vset.pattern.permute.xlu0 0
    %3703 = vperm.xlu0 %3702, %v3649
    %v3704 = vpop.permute.xlu0 %3703
    %3707 = vset.pattern.permute.xlu0 0
    %3708 = vperm.xlu0 %3707, %v3650
    %v3709 = vpop.permute.xlu0 %3708
    %3712 = vset.pattern.permute.xlu0 0
    %3713 = vperm.xlu0 %3712, %v3651
    %v3714 = vpop.permute.xlu0 %3713
    %3717 = vset.pattern.permute.xlu0 0
    %3718 = vperm.xlu0 %3717, %v3652
    %v3719 = vpop.permute.xlu0 %3718
    %3722 = vset.pattern.permute.xlu0 0
    %3723 = vperm.xlu0 %3722, %v3653
    %v3724 = vpop.permute.xlu0 %3723
    %3727 = vset.pattern.permute.xlu0 0
    %3728 = vperm.xlu0 %3727, %v3654
    %v3729 = vpop.permute.xlu0 %3728
    %3732 = vset.pattern.permute.xlu0 0
    %3733 = vperm.xlu0 %3732, %v3655
    %v3734 = vpop.permute.xlu0 %3733
    %v3736 = vsub.f32 %v3572, %v3659
    %v3737 = vsub.f32 %v3573, %v3664
    %v3738 = vsub.f32 %v3574, %v3669
    %v3739 = vsub.f32 %v3575, %v3674
    %v3740 = vsub.f32 %v3576, %v3679
    %v3741 = vsub.f32 %v3577, %v3684
    %v3742 = vsub.f32 %v3578, %v3689
    %v3743 = vsub.f32 %v3579, %v3694
    %v3744 = vsub.f32 %v3580, %v3699
    %v3745 = vsub.f32 %v3581, %v3704
    %v3746 = vsub.f32 %v3582, %v3709
    %v3747 = vsub.f32 %v3583, %v3714
    %v3748 = vsub.f32 %v3584, %v3719
    %v3749 = vsub.f32 %v3585, %v3724
    %v3750 = vsub.f32 %v3586, %v3729
    %v3751 = vsub.f32 %v3587, %v3734
    %v3752 = vsel %vm867, %v3736, -1e+30
    %v3753 = vsel %vm868, %v3737, -1e+30
    %v3754 = vsel %vm869, %v3738, -1e+30
    %v3755 = vsel %vm870, %v3739, -1e+30
    %v3756 = vsel %vm871, %v3740, -1e+30
    %v3757 = vsel %vm872, %v3741, -1e+30
    %v3758 = vsel %vm873, %v3742, -1e+30
    %v3759 = vsel %vm874, %v3743, -1e+30
    %v3760 = vsel %vm875, %v3744, -1e+30
    %v3761 = vsel %vm876, %v3745, -1e+30
    %v3762 = vsel %vm877, %v3746, -1e+30
    %v3763 = vsel %vm878, %v3747, -1e+30
    %v3764 = vsel %vm879, %v3748, -1e+30
    %v3765 = vsel %vm880, %v3749, -1e+30
    %v3766 = vsel %vm881, %v3750, -1e+30
    %v3767 = vsel %vm882, %v3751, -1e+30
    %v3768 = vmul.f32 %v3752, 1.442695
    %v3769 = vpow.pop %v3768
    %v3770 = vmul.f32 %v3753, 1.442695
    %v3771 = vpow.pop %v3770
    %v3772 = vmul.f32 %v3754, 1.442695
    %v3773 = vpow.pop %v3772
    %v3774 = vmul.f32 %v3755, 1.442695
    %v3775 = vpow.pop %v3774
    %v3776 = vmul.f32 %v3756, 1.442695
    %v3777 = vpow.pop %v3776
    %v3778 = vmul.f32 %v3757, 1.442695
    %v3779 = vpow.pop %v3778
    %v3780 = vmul.f32 %v3758, 1.442695
    %v3781 = vpow.pop %v3780
    %v3782 = vmul.f32 %v3759, 1.442695
    %v3783 = vpow.pop %v3782
    %v3784 = vmul.f32 %v3760, 1.442695
    %v3785 = vpow.pop %v3784
    %v3786 = vmul.f32 %v3761, 1.442695
    %v3787 = vpow.pop %v3786
    %v3788 = vmul.f32 %v3762, 1.442695
    %v3789 = vpow.pop %v3788
    %v3790 = vmul.f32 %v3763, 1.442695
    %v3791 = vpow.pop %v3790
    %v3792 = vmul.f32 %v3764, 1.442695
    %v3793 = vpow.pop %v3792
    %v3794 = vmul.f32 %v3765, 1.442695
    %v3795 = vpow.pop %v3794
    %v3796 = vmul.f32 %v3766, 1.442695
    %v3797 = vpow.pop %v3796
    %v3798 = vmul.f32 %v3767, 1.442695
    %v3799 = vpow.pop %v3798
    %3800 = vadd.xlane.f32.xlu0 %v3769
    %v3801 = vpop.xlane.xlu0 %3800
    %3802 = vadd.xlane.f32.xlu0 %v3771
    %v3803 = vpop.xlane.xlu0 %3802
    %3804 = vadd.xlane.f32.xlu0 %v3773
    %v3805 = vpop.xlane.xlu0 %3804
    %3806 = vadd.xlane.f32.xlu0 %v3775
    %v3807 = vpop.xlane.xlu0 %3806
    %3808 = vadd.xlane.f32.xlu0 %v3777
    %v3809 = vpop.xlane.xlu0 %3808
    %3810 = vadd.xlane.f32.xlu0 %v3779
    %v3811 = vpop.xlane.xlu0 %3810
    %3812 = vadd.xlane.f32.xlu0 %v3781
    %v3813 = vpop.xlane.xlu0 %3812
    %3814 = vadd.xlane.f32.xlu0 %v3783
    %v3815 = vpop.xlane.xlu0 %3814
    %3816 = vadd.xlane.f32.xlu0 %v3785
    %v3817 = vpop.xlane.xlu0 %3816
    %3818 = vadd.xlane.f32.xlu0 %v3787
    %v3819 = vpop.xlane.xlu0 %3818
    %3820 = vadd.xlane.f32.xlu0 %v3789
    %v3821 = vpop.xlane.xlu0 %3820
    %3822 = vadd.xlane.f32.xlu0 %v3791
    %v3823 = vpop.xlane.xlu0 %3822
    %3824 = vadd.xlane.f32.xlu0 %v3793
    %v3825 = vpop.xlane.xlu0 %3824
    %3826 = vadd.xlane.f32.xlu0 %v3795
    %v3827 = vpop.xlane.xlu0 %3826
    %3828 = vadd.xlane.f32.xlu0 %v3797
    %v3829 = vpop.xlane.xlu0 %3828
    %3830 = vadd.xlane.f32.xlu0 %v3799
    %v3831 = vpop.xlane.xlu0 %3830
    %v3832 = vmax.f32 %v3801, 1e-30
    %v3833 = vmax.f32 %v3803, 1e-30
    %v3834 = vmax.f32 %v3805, 1e-30
    %v3835 = vmax.f32 %v3807, 1e-30
    %v3836 = vmax.f32 %v3809, 1e-30
    %v3837 = vmax.f32 %v3811, 1e-30
    %v3838 = vmax.f32 %v3813, 1e-30
    %v3839 = vmax.f32 %v3815, 1e-30
    %v3840 = vmax.f32 %v3817, 1e-30
    %v3841 = vmax.f32 %v3819, 1e-30
    %v3842 = vmax.f32 %v3821, 1e-30
    %v3843 = vmax.f32 %v3823, 1e-30
    %v3844 = vmax.f32 %v3825, 1e-30
    %v3845 = vmax.f32 %v3827, 1e-30
    %v3846 = vmax.f32 %v3829, 1e-30
    %v3847 = vmax.f32 %v3831, 1e-30
    %v3848 = vrcp.pop %v3832
    %v3849 = vrcp.pop %v3833
    %v3850 = vrcp.pop %v3834
    %v3851 = vrcp.pop %v3835
    %v3852 = vrcp.pop %v3836
    %v3853 = vrcp.pop %v3837
    %v3854 = vrcp.pop %v3838
    %v3855 = vrcp.pop %v3839
    %v3856 = vrcp.pop %v3840
    %v3857 = vrcp.pop %v3841
    %v3858 = vrcp.pop %v3842
    %v3859 = vrcp.pop %v3843
    %v3860 = vrcp.pop %v3844
    %v3861 = vrcp.pop %v3845
    %v3862 = vrcp.pop %v3846
    %v3863 = vrcp.pop %v3847
    %3864 = vmatprep.subr.mxu0 0.0
    %3865 = vmatpush1.msra.mxu0 %v3165
    %3866 = vmatprep.subr.mxu0 0.0
    %3867 = vmatpush1.msra.mxu0 %v3171
    %3868 = vmatprep.subr.mxu0 0.0
    %3869 = vmatpush1.msra.mxu0 %v3177
    %3870 = vmatprep.subr.mxu0 0.0
    %3871 = vmatpush1.msra.mxu0 %v3183
    %3872 = vmatprep.subr.mxu0 0.0
    %3873 = vmatpush1.msra.mxu0 %v3189
    %3874 = vmatprep.subr.mxu0 0.0
    %3875 = vmatpush1.msra.mxu0 %v3195
    %3876 = vmatprep.subr.mxu0 0.0
    %3877 = vmatpush1.msra.mxu0 %v3201
    %3878 = vmatprep.subr.mxu0 0.0
    %3879 = vmatpush1.msra.mxu0 %v3207
    %3880 = vmatprep.subr.mxu0 0.0
    %3881 = vmatpush1.msra.mxu0 %v3213
    %3882 = vmatprep.subr.mxu0 0.0
    %3883 = vmatpush1.msra.mxu0 %v3219
    %3884 = vmatprep.subr.mxu0 0.0
    %3885 = vmatpush1.msra.mxu0 %v3225
    %3886 = vmatprep.subr.mxu0 0.0
    %3887 = vmatpush1.msra.mxu0 %v3231
    %3888 = vmatprep.subr.mxu0 0.0
    %3889 = vmatpush1.msra.mxu0 %v3237
    %3890 = vmatprep.subr.mxu0 0.0
    %3891 = vmatpush1.msra.mxu0 %v3243
    %3892 = vmatprep.subr.mxu0 0.0
    %3893 = vmatpush1.msra.mxu0 %v3249
    %3894 = vmatprep.subr.mxu0 0.0
    %3895 = vmatpush1.msra.mxu0 %v3255
    %3896 = vmatprep.subr.mxu0 0.0
    %3897 = vmatpush1.msra.mxu0 0.0
    %3898 = vmatprep.subr.mxu0 0.0
    %3899 = vmatpush1.msra.mxu0 0.0
    %3900 = vmatprep.subr.mxu0 0.0
    %3901 = vmatpush1.msra.mxu0 0.0
    %3902 = vmatprep.subr.mxu0 0.0
    %3903 = vmatpush1.msra.mxu0 0.0
    %3904 = vmatprep.subr.mxu0 0.0
    %3905 = vmatpush1.msra.mxu0 0.0
    %3906 = vmatprep.subr.mxu0 0.0
    %3907 = vmatpush1.msra.mxu0 0.0
    %3908 = vmatprep.subr.mxu0 0.0
    %3909 = vmatpush1.msra.mxu0 0.0
    %3910 = vmatprep.subr.mxu0 0.0
    %3911 = vmatpush1.msra.mxu0 0.0
    %3912 = vmatprep.subr.mxu0 0.0
    %3913 = vmatpush1.msra.mxu0 0.0
    %3914 = vmatprep.subr.mxu0 0.0
    %3915 = vmatpush1.msra.mxu0 0.0
    %3916 = vmatprep.subr.mxu0 0.0
    %3917 = vmatpush1.msra.mxu0 0.0
    %3918 = vmatprep.subr.mxu0 0.0
    %3919 = vmatpush1.msra.mxu0 0.0
    %3920 = vmatprep.subr.mxu0 0.0
    %3921 = vmatpush1.msra.mxu0 0.0
    %3922 = vmatprep.subr.mxu0 0.0
    %3923 = vmatpush1.msra.mxu0 0.0
    %3924 = vmatprep.subr.mxu0 0.0
    %3925 = vmatpush1.msra.mxu0 0.0
    %3926 = vmatprep.subr.mxu0 0.0
    %3927 = vmatpush1.msra.mxu0 0.0
    %3928 = vmatprep.mubr.f32.mxu0 0.0
    %3929 = vmatmul.mubr.f32.gmra.mrb[0].mxu0 %v3769
    %v3930 = vpop.f32.mrb[0].mxu0
    %v3931 = vadd.f32 0.0, %v3930
    %v3932 = vpop.f32.mrb[0].mxu0
    %3933 = vmatprep.mubr.f32.mxu0 0.0
    %3934 = vmatmul.mubr.f32.gmra.mrb[0].mxu0 %v3771
    %v3935 = vpop.f32.mrb[0].mxu0
    %v3936 = vadd.f32 0.0, %v3935
    %v3937 = vpop.f32.mrb[0].mxu0
    %3938 = vmatprep.mubr.f32.mxu0 0.0
    %3939 = vmatmul.mubr.f32.gmra.mrb[0].mxu0 %v3773
    %v3940 = vpop.f32.mrb[0].mxu0
    %v3941 = vadd.f32 0.0, %v3940
    %v3942 = vpop.f32.mrb[0].mxu0
    %3943 = vmatprep.mubr.f32.mxu0 0.0
    %3944 = vmatmul.mubr.f32.gmra.mrb[0].mxu0 %v3775
    %v3945 = vpop.f32.mrb[0].mxu0
    %v3946 = vadd.f32 0.0, %v3945
    %v3947 = vpop.f32.mrb[0].mxu0
    %3948 = vmatprep.mubr.f32.mxu0 0.0
    %3949 = vmatmul.mubr.f32.gmra.mrb[0].mxu0 %v3777
    %v3950 = vpop.f32.mrb[0].mxu0
    %v3951 = vadd.f32 0.0, %v3950
    %v3952 = vpop.f32.mrb[0].mxu0
    %3953 = vmatprep.mubr.f32.mxu0 0.0
    %3954 = vmatmul.mubr.f32.gmra.mrb[0].mxu0 %v3779
    %v3955 = vpop.f32.mrb[0].mxu0
    %v3956 = vadd.f32 0.0, %v3955
    %v3957 = vpop.f32.mrb[0].mxu0
    %3958 = vmatprep.mubr.f32.mxu0 0.0
    %3959 = vmatmul.mubr.f32.gmra.mrb[0].mxu0 %v3781
    %v3960 = vpop.f32.mrb[0].mxu0
    %v3961 = vadd.f32 0.0, %v3960
    %v3962 = vpop.f32.mrb[0].mxu0
    %3963 = vmatprep.mubr.f32.mxu0 0.0
    %3964 = vmatmul.mubr.f32.gmra.mrb[0].mxu0 %v3783
    %v3965 = vpop.f32.mrb[0].mxu0
    %v3966 = vadd.f32 0.0, %v3965
    %v3967 = vpop.f32.mrb[0].mxu0
    %3968 = vmatprep.mubr.f32.mxu0 0.0
    %3969 = vmatmul.mubr.f32.gmra.mrb[0].mxu0 %v3785
    %v3970 = vpop.f32.mrb[0].mxu0
    %v3971 = vadd.f32 0.0, %v3970
    %v3972 = vpop.f32.mrb[0].mxu0
    %3973 = vmatprep.mubr.f32.mxu0 0.0
    %3974 = vmatmul.mubr.f32.gmra.mrb[0].mxu0 %v3787
    %v3975 = vpop.f32.mrb[0].mxu0
    %v3976 = vadd.f32 0.0, %v3975
    %v3977 = vpop.f32.mrb[0].mxu0
    %3978 = vmatprep.mubr.f32.mxu0 0.0
    %3979 = vmatmul.mubr.f32.gmra.mrb[0].mxu0 %v3789
    %v3980 = vpop.f32.mrb[0].mxu0
    %v3981 = vadd.f32 0.0, %v3980
    %v3982 = vpop.f32.mrb[0].mxu0
    %3983 = vmatprep.mubr.f32.mxu0 0.0
    %3984 = vmatmul.mubr.f32.gmra.mrb[0].mxu0 %v3791
    %v3985 = vpop.f32.mrb[0].mxu0
    %v3986 = vadd.f32 0.0, %v3985
    %v3987 = vpop.f32.mrb[0].mxu0
    %3988 = vmatprep.mubr.f32.mxu0 0.0
    %3989 = vmatmul.mubr.f32.gmra.mrb[0].mxu0 %v3793
    %v3990 = vpop.f32.mrb[0].mxu0
    %v3991 = vadd.f32 0.0, %v3990
    %v3992 = vpop.f32.mrb[0].mxu0
    %3993 = vmatprep.mubr.f32.mxu0 0.0
    %3994 = vmatmul.mubr.f32.gmra.mrb[0].mxu0 %v3795
    %v3995 = vpop.f32.mrb[0].mxu0
    %v3996 = vadd.f32 0.0, %v3995
    %v3997 = vpop.f32.mrb[0].mxu0
    %3998 = vmatprep.mubr.f32.mxu0 0.0
    %3999 = vmatmul.mubr.f32.gmra.mrb[0].mxu0 %v3797
    %v4000 = vpop.f32.mrb[0].mxu0
    %v4001 = vadd.f32 0.0, %v4000
    %v4002 = vpop.f32.mrb[0].mxu0
    %4003 = vmatprep.mubr.f32.mxu0 0.0
    %4004 = vmatmul.mubr.f32.gmra.mrb[0].mxu0 %v3799
    %v4005 = vpop.f32.mrb[0].mxu0
    %v4006 = vadd.f32 0.0, %v4005
    %v4007 = vpop.f32.mrb[0].mxu0
    %4008 = vdwg.mxu0
    %v4009 = vmul.f32 %v3931, %v3848
    %v4010 = vmul.f32 %v3936, %v3849
    %v4011 = vmul.f32 %v3941, %v3850
    %v4012 = vmul.f32 %v3946, %v3851
    %v4013 = vmul.f32 %v3951, %v3852
    %v4014 = vmul.f32 %v3956, %v3853
    %v4015 = vmul.f32 %v3961, %v3854
    %v4016 = vmul.f32 %v3966, %v3855
    %v4017 = vmul.f32 %v3971, %v3856
    %v4018 = vmul.f32 %v3976, %v3857
    %v4019 = vmul.f32 %v3981, %v3858
    %v4020 = vmul.f32 %v3986, %v3859
    %v4021 = vmul.f32 %v3991, %v3860
    %v4022 = vmul.f32 %v3996, %v3861
    %v4023 = vmul.f32 %v4001, %v3862
    %v4024 = vmul.f32 %v4006, %v3863
    %v4025 = vadd.f32 %v4009, 0.0
    %v4026 = vadd.f32 %v4010, 0.0
    %v4027 = vadd.f32 %v4011, 0.0
    %v4028 = vadd.f32 %v4012, 0.0
    %v4029 = vadd.f32 %v4013, 0.0
    %v4030 = vadd.f32 %v4014, 0.0
    %v4031 = vadd.f32 %v4015, 0.0
    %v4032 = vadd.f32 %v4016, 0.0
    %v4033 = vadd.f32 %v4017, 0.0
    %v4034 = vadd.f32 %v4018, 0.0
    %v4035 = vadd.f32 %v4019, 0.0
    %v4036 = vadd.f32 %v4020, 0.0
    %v4037 = vadd.f32 %v4021, 0.0
    %v4038 = vadd.f32 %v4022, 0.0
    %v4039 = vadd.f32 %v4023, 0.0
    %v4040 = vadd.f32 %v4024, 0.0
    %v4042 = vlaneseq
    %v4043 = vshrl.u32 %v4042, 7
    %v4044 = vsub.s32 0, %v4043
    %v4045 = vrot.slane %v3097, %v4044
    %v4047 = vadd.f32 %v4025, %v4045
    %v4048 = vadd.f32 %v4026, %v4045
    %v4049 = vadd.f32 %v4027, %v4045
    %v4050 = vadd.f32 %v4028, %v4045
    %v4051 = vadd.f32 %v4029, %v4045
    %v4052 = vadd.f32 %v4030, %v4045
    %v4053 = vadd.f32 %v4031, %v4045
    %v4054 = vadd.f32 %v4032, %v4045
    %v4055 = vadd.f32 %v4033, %v4045
    %v4056 = vadd.f32 %v4034, %v4045
    %v4057 = vadd.f32 %v4035, %v4045
    %v4058 = vadd.f32 %v4036, %v4045
    %v4059 = vadd.f32 %v4037, %v4045
    %v4060 = vadd.f32 %v4038, %v4045
    %v4061 = vadd.f32 %v4039, %v4045
    %v4062 = vadd.f32 %v4040, %v4045
    %4063 = vst [vmem:[#allocation10] sm:$0xff] %v4047
    %4064 = vst [vmem:[#allocation10 + $0x8] sm:$0xff] %v4048
    %4065 = vst [vmem:[#allocation10 + $0x10] sm:$0xff] %v4049
    %4066 = vst [vmem:[#allocation10 + $0x18] sm:$0xff] %v4050
    %4067 = vst [vmem:[#allocation10 + $0x20] sm:$0xff] %v4051
    %4068 = vst [vmem:[#allocation10 + $0x28] sm:$0xff] %v4052
    %4069 = vst [vmem:[#allocation10 + $0x30] sm:$0xff] %v4053
    %4070 = vst [vmem:[#allocation10 + $0x38] sm:$0xff] %v4054
    %4071 = vst [vmem:[#allocation10 + $0x40] sm:$0xff] %v4055
    %4072 = vst [vmem:[#allocation10 + $0x48] sm:$0xff] %v4056
    %4073 = vst [vmem:[#allocation10 + $0x50] sm:$0xff] %v4057
    %4074 = vst [vmem:[#allocation10 + $0x58] sm:$0xff] %v4058
    %4075 = vst [vmem:[#allocation10 + $0x60] sm:$0xff] %v4059
    %4076 = vst [vmem:[#allocation10 + $0x68] sm:$0xff] %v4060
    %4077 = vst [vmem:[#allocation10 + $0x70] sm:$0xff] %v4061
    %4078 = vst [vmem:[#allocation10 + $0x78] sm:$0xff] %v4062
    // Predicated region
    $region42: #{tpu_custom_call.1} parent=1 // pred_check
      _
    $region43: #{tpu_custom_call.1} parent=1 // pred_check_branch
      %4080 = sbr.rel (0) target = $region45
    $region44: #{tpu_custom_call.1} parent=1 // pred_region
      %s4082 = ssub.s32 2048, 2048
      %4083 = vsyncadd [#allocation4], %s4082
      %s4084 = sshll.u32 [#allocation10], 4
      %s4085 = int_to_ptr.vmem [resolvable:$true] %s4084
      %4090 = dma.vmem_to_hbm [thread:$0]  %s4085, 2048, %s6, [#allocation4], 128, 128, 8
    $region45: #{tpu_custom_call.1} parent=1 // pred_fallthru
      _
    // Predicated region
    $region46: #{tpu_custom_call.1} parent=1 // pred_check
      _
    $region47: #{tpu_custom_call.1} parent=1 // pred_check_branch
      %4092 = sbr.rel (0) target = $region49
    $region48: #{tpu_custom_call.1} parent=1 // pred_region
      %4093 = dma.done [#allocation4], 2048
    $region49: #{tpu_custom_call.1} parent=1 // pred_fallthru
      _
    %4094 = vsyncpa [#allocation3], 1
    %4095 = vsyncpa [#allocation6], 1
    %4096 = vsyncpa [#allocation9], 1
    %4097 = vsyncpa [#allocation4], 1

</llo_original>
